<compile_context>
chip_gen: v6e
topology: v6e:2x2x1
jax: 0.10.0
libtpu: 0.0.40
codegen_flags: <defaults>
</compile_context>

<pallas_src>
import functools

import jax
import jax.numpy as jnp
from jax import lax
from jax.experimental import pallas as pl
from jax.experimental.pallas import tpu as pltpu


def _eres_kernel(x_ref, w1_ref, b1_ref, w2_ref, b2_ref, w3_ref, b3_ref, o_ref,
                 *, compute_dtype):
    """One (batch, row-tile) step of the fused block.

    x_ref : (H+4, W+4, Cin)  zero-padded full image for this batch element
    w1_ref: (9*Cin, Cout)    conv1 weights, (ky, kx, cin) flattened
    w2_ref: (9*Cout, Cout)   conv2 weights
    w3_ref: (Cout, Cout)     conv3 (1x1) weights
    b*_ref: (1, Cout)        biases
    o_ref : (TH, W, Cout)    output row tile
    """
    Hp, _, Cin = x_ref.shape
    TH, W, Cout = o_ref.shape
    H = Hp - 4

    r0 = pl.multiple_of(pl.program_id(1) * TH, TH)   # first output row of tile

    # ---- conv1: 3x3 pad 1, evaluated on the (TH+2, W+2) halo window --------
    # im2col: a single (N, 9*Cin) x (9*Cin, Cout) matmul instead of 9 tiny-K
    # dots with a large value accumulator.
    p1 = jnp.concatenate(
        [x_ref[pl.ds(r0 + ky, TH + 2), kx:kx + W + 2, :]
         for ky in range(3) for kx in range(3)],
        axis=-1)                                          # (TH+2, W+2, 9*Cin)
    h1 = jnp.dot(p1.reshape((TH + 2) * (W + 2), 9 * Cin).astype(compute_dtype),
                 w1_ref[...], preferred_element_type=jnp.float32)
    h1 = jnp.maximum(h1 + b1_ref[...], 0.0).reshape(TH + 2, W + 2, Cout)

    # Zero positions outside the image: conv2 must see a zero-padded conv1
    # output, not conv1 evaluated on padded input (bias/ReLU make it nonzero).
    row = r0 - 1 + lax.broadcasted_iota(jnp.int32, (TH + 2, W + 2, 1), 0)
    col = -1 + lax.broadcasted_iota(jnp.int32, (TH + 2, W + 2, 1), 1)
    inside = (row >= 0) & (row < H) & (col >= 0) & (col < W)
    h1 = jnp.where(inside, h1, 0.0)

    # ---- conv2: 3x3 pad 1 -> (TH, W) ----------------------------------------
    p2 = jnp.concatenate(
        [h1[ky:ky + TH, kx:kx + W, :] for ky in range(3) for kx in range(3)],
        axis=-1)                                          # (TH, W, 9*Cout)
    h2 = jnp.dot(p2.reshape(TH * W, 9 * Cout).astype(compute_dtype),
                 w2_ref[...], preferred_element_type=jnp.float32)
    h2 = jnp.maximum(h2 + b2_ref[...], 0.0)               # (TH*W, Cout)

    # ---- conv3: 1x1 + residual + ReLU ---------------------------------------
    h3 = jnp.dot(h2.astype(compute_dtype), w3_ref[...],
                 preferred_element_type=jnp.float32) + b3_ref[...]
    res = x_ref[pl.ds(r0 + 2, TH), 2:W + 2, :]            # original x, this tile
    out = jnp.maximum(h3 + res.reshape(TH * W, Cin).astype(jnp.float32), 0.0)
    o_ref[...] = out.reshape(TH, W, Cout).astype(o_ref.dtype)


def _choose_row_tile(H, W, C, budget_bytes=4 * 1024 * 1024):
    """Largest divisor TH of H whose f32 im2col patch fits the budget;
    prefer >= 2 row tiles so the grid has parallel work (v7x has 2 TCs)."""
    divisors = [d for d in range(1, H + 1) if H % d == 0]
    fits = [d for d in divisors
            if (d + 2) * (W + 2) * 9 * C * 4 <= budget_bytes] or [divisors[0]]
    multi = [d for d in fits if d < H]
    return max(multi) if multi else max(fits)


def eresidual_block(x_nchw, params, *, compute_dtype=jnp.float32):
    """Fused EResidualBlock forward. x_nchw: (B, C, H, W), like PyTorch."""
    w1, b1, w2, b2, w3, b3 = params
    x = jnp.transpose(x_nchw, (0, 2, 3, 1))               # NHWC
    B, H, W, Cin = x.shape
    Cout = w1.shape[-1]
    assert Cin == Cout, "residual add requires in_channels == out_channels"

    TH = _choose_row_tile(H, W, max(Cin, Cout))
    n_tiles = H // TH

    # Pad by 2 rows/cols of zeros so every halo window read is in-bounds and
    # the conv zero-padding comes for free (no in-kernel padded scratch).
    xp = jnp.pad(x, ((0, 0), (2, 2), (2, 2), (0, 0)))

    # Flatten 3x3 weights to (9*C, Cout), matching the im2col (ky, kx, c) order.
    w1f = w1.reshape(9 * Cin, Cout).astype(compute_dtype)
    w2f = w2.reshape(9 * Cout, Cout).astype(compute_dtype)
    w3c = w3.astype(compute_dtype)

    flops = 2 * B * H * W * (9 * Cin * Cout + 9 * Cout * Cout + Cout * Cout)
    bytes_accessed = 4 * (B * H * W * (Cin + Cout)
                          + 9 * Cin * Cout + 9 * Cout * Cout
                          + Cout * Cout + 3 * Cout)

    # Rough VMEM need (f32): padded input + output tile (double-buffered),
    # weights, plus headroom for the im2col temporaries of one step.
    est = 4 * (2 * (H + 4) * (W + 4) * Cin
               + 2 * TH * W * Cout
               + 9 * Cin * Cout + 9 * Cout * Cout + Cout * Cout + 3 * Cout
               + 6 * (TH + 2) * (W + 2) * 9 * max(Cin, Cout))
    vmem_limit = int(min(max(2 * est, 16 * 1024 * 1024), 32 * 1024 * 1024))

    kernel = functools.partial(_eres_kernel, compute_dtype=compute_dtype)

    out = pl.pallas_call(
        kernel,
        out_shape=jax.ShapeDtypeStruct((B, H, W, Cout), x.dtype),
        grid_spec=pltpu.PrefetchScalarGridSpec(
            num_scalar_prefetch=0,
            grid=(B, n_tiles),
            in_specs=[
                pl.BlockSpec((None, H + 4, W + 4, Cin), lambda b, t: (b, 0, 0, 0)),
                pl.BlockSpec((9 * Cin, Cout), lambda b, t: (0, 0)),
                pl.BlockSpec((1, Cout), lambda b, t: (0, 0)),
                pl.BlockSpec((9 * Cout, Cout), lambda b, t: (0, 0)),
                pl.BlockSpec((1, Cout), lambda b, t: (0, 0)),
                pl.BlockSpec((Cout, Cout), lambda b, t: (0, 0)),
                pl.BlockSpec((1, Cout), lambda b, t: (0, 0)),
            ],
            out_specs=pl.BlockSpec((None, TH, W, Cout), lambda b, t: (b, t, 0, 0)),
        ),
        compiler_params=pltpu.CompilerParams(
            dimension_semantics=("parallel", "parallel"),
            vmem_limit_bytes=vmem_limit),
        cost_estimate=pl.CostEstimate(flops=flops, transcendentals=0,
                                      bytes_accessed=bytes_accessed),
    )(xp, w1f, b1, w2f, b2, w3c, b3)

    return jnp.transpose(out, (0, 3, 1, 2))               # back to NCHW


def _reference(x_nchw, params):
    """Pure-JAX reference (same math, NHWC/HWIO conv)."""
    w1, b1, w2, b2, w3, b3 = params
    x = jnp.transpose(x_nchw, (0, 2, 3, 1))
    dn = ('NHWC', 'HWIO', 'NHWC')
    h = lax.conv_general_dilated(x, w1, (1, 1), ((1, 1), (1, 1)),
                                 dimension_numbers=dn) + b1[0]
    h = jnp.maximum(h, 0.0)
    h = lax.conv_general_dilated(h, w2, (1, 1), ((1, 1), (1, 1)),
                                 dimension_numbers=dn) + b2[0]
    h = jnp.maximum(h, 0.0)
    h = jnp.einsum('bhwc,cd->bhwd', h, w3) + b3[0]
    out = jnp.maximum(h + x, 0.0)
    return jnp.transpose(out, (0, 3, 1, 2))


def init_params(key, in_channels, out_channels):
    """Deterministic synthetic init (module shapes; weights stored HWIO)."""
    k1, k2, k3, k4, k5, k6 = jax.random.split(key, 6)
    scale = 0.1
    w1 = scale * jax.random.normal(k1, (3, 3, in_channels, out_channels), jnp.float32)
    b1 = scale * jax.random.normal(k2, (1, out_channels), jnp.float32)
    w2 = scale * jax.random.normal(k3, (3, 3, out_channels, out_channels), jnp.float32)
    b2 = scale * jax.random.normal(k4, (1, out_channels), jnp.float32)
    w3 = scale * jax.random.normal(k5, (out_channels, out_channels), jnp.float32)
    b3 = scale * jax.random.normal(k6, (1, out_channels), jnp.float32)
    return (w1, b1, w2, b2, w3, b3)


if __name__ == "__main__":
    key = jax.random.PRNGKey(0)
    kx_, kp_ = jax.random.split(key)

    B, C, H, W = 2, 4, 16, 16
    x = jax.random.normal(kx_, (B, C, H, W), jnp.float32)
    params = init_params(kp_, C, C)

    out = jax.block_until_ready(eresidual_block(x, params))
    ref = jax.block_until_ready(_reference(x, params))

    assert out.shape == (B, C, H, W)
    err = jnp.max(jnp.abs(out - ref))
    assert jnp.allclose(out, ref, atol=1e-4, rtol=1e-4), f"max abs err {err}"

    print("KERNEL_OK")
</pallas_src>

<mosaic_0001>
module attributes {stable_mosaic.version = 11 : i64} {
  func.func @_eres_kernel(%arg0: i32, %arg1: i32, %arg2: memref<1x20x20x4xf32, #tpu.memory_space<vmem>>, %arg3: memref<36x4xf32, #tpu.memory_space<vmem>>, %arg4: memref<1x4xf32, #tpu.memory_space<vmem>>, %arg5: memref<36x4xf32, #tpu.memory_space<vmem>>, %arg6: memref<1x4xf32, #tpu.memory_space<vmem>>, %arg7: memref<4x4xf32, #tpu.memory_space<vmem>>, %arg8: memref<1x4xf32, #tpu.memory_space<vmem>>, %arg9: memref<1x8x16x4xf32, #tpu.memory_space<vmem>>) attributes {dimension_semantics = [#tpu.dimension_semantics<parallel>, #tpu.dimension_semantics<parallel>], iteration_bounds = array<i64: 2, 2>, scalar_prefetch = 0 : i64, scratch_operands = 0 : i64, tpu.core_type = #tpu.core_type<tc>, window_params = [{transform_indices = @transform_0, window_bounds = array<i64: 1, 20, 20, 4>}, {pipeline_mode = #tpu.pipeline_mode<synchronous>, transform_indices = @transform_1, window_bounds = array<i64: 36, 4>}, {pipeline_mode = #tpu.pipeline_mode<synchronous>, transform_indices = @transform_2, window_bounds = array<i64: 1, 4>}, {pipeline_mode = #tpu.pipeline_mode<synchronous>, transform_indices = @transform_3, window_bounds = array<i64: 36, 4>}, {pipeline_mode = #tpu.pipeline_mode<synchronous>, transform_indices = @transform_4, window_bounds = array<i64: 1, 4>}, {pipeline_mode = #tpu.pipeline_mode<synchronous>, transform_indices = @transform_5, window_bounds = array<i64: 4, 4>}, {pipeline_mode = #tpu.pipeline_mode<synchronous>, transform_indices = @transform_6, window_bounds = array<i64: 1, 4>}, {transform_indices = @transform_7, window_bounds = array<i64: 1, 8, 16, 4>}]} {
    %c8_i32 = arith.constant 8 : i32
    %0 = arith.muli %arg1, %c8_i32 : i32
    %1 = tpu.assume_multiple %0, 8 : i32
    %c0_i32 = arith.constant 0 : i32
    %2 = arith.addi %1, %c0_i32 : i32
    %c0 = arith.constant 0 : index
    %3 = arith.index_cast %2 : i32 to index
    %c0_0 = arith.constant 0 : index
    %c0_1 = arith.constant 0 : index
    %4 = vector.load %arg2[%c0, %3, %c0_0, %c0_1] : memref<1x20x20x4xf32, #tpu.memory_space<vmem>>, vector<1x10x18x4xf32>
    %5 = vector.shape_cast %4 : vector<1x10x18x4xf32> to vector<10x18x4xf32>
    %c0_i32_2 = arith.constant 0 : i32
    %6 = arith.addi %1, %c0_i32_2 : i32
    %c0_3 = arith.constant 0 : index
    %7 = arith.index_cast %6 : i32 to index
    %c1 = arith.constant 1 : index
    %c0_4 = arith.constant 0 : index
    %8 = vector.load %arg2[%c0_3, %7, %c1, %c0_4] : memref<1x20x20x4xf32, #tpu.memory_space<vmem>>, vector<1x10x18x4xf32>
    %9 = vector.shape_cast %8 : vector<1x10x18x4xf32> to vector<10x18x4xf32>
    %c0_i32_5 = arith.constant 0 : i32
    %10 = arith.addi %1, %c0_i32_5 : i32
    %c0_6 = arith.constant 0 : index
    %11 = arith.index_cast %10 : i32 to index
    %c2 = arith.constant 2 : index
    %c0_7 = arith.constant 0 : index
    %12 = vector.load %arg2[%c0_6, %11, %c2, %c0_7] : memref<1x20x20x4xf32, #tpu.memory_space<vmem>>, vector<1x10x18x4xf32>
    %13 = vector.shape_cast %12 : vector<1x10x18x4xf32> to vector<10x18x4xf32>
    %c1_i32 = arith.constant 1 : i32
    %14 = arith.addi %1, %c1_i32 : i32
    %c0_8 = arith.constant 0 : index
    %15 = arith.index_cast %14 : i32 to index
    %c0_9 = arith.constant 0 : index
    %c0_10 = arith.constant 0 : index
    %16 = vector.load %arg2[%c0_8, %15, %c0_9, %c0_10] : memref<1x20x20x4xf32, #tpu.memory_space<vmem>>, vector<1x10x18x4xf32>
    %17 = vector.shape_cast %16 : vector<1x10x18x4xf32> to vector<10x18x4xf32>
    %c1_i32_11 = arith.constant 1 : i32
    %18 = arith.addi %1, %c1_i32_11 : i32
    %c0_12 = arith.constant 0 : index
    %19 = arith.index_cast %18 : i32 to index
    %c1_13 = arith.constant 1 : index
    %c0_14 = arith.constant 0 : index
    %20 = vector.load %arg2[%c0_12, %19, %c1_13, %c0_14] : memref<1x20x20x4xf32, #tpu.memory_space<vmem>>, vector<1x10x18x4xf32>
    %21 = vector.shape_cast %20 : vector<1x10x18x4xf32> to vector<10x18x4xf32>
    %c1_i32_15 = arith.constant 1 : i32
    %22 = arith.addi %1, %c1_i32_15 : i32
    %c0_16 = arith.constant 0 : index
    %23 = arith.index_cast %22 : i32 to index
    %c2_17 = arith.constant 2 : index
    %c0_18 = arith.constant 0 : index
    %24 = vector.load %arg2[%c0_16, %23, %c2_17, %c0_18] : memref<1x20x20x4xf32, #tpu.memory_space<vmem>>, vector<1x10x18x4xf32>
    %25 = vector.shape_cast %24 : vector<1x10x18x4xf32> to vector<10x18x4xf32>
    %c2_i32 = arith.constant 2 : i32
    %26 = arith.addi %1, %c2_i32 : i32
    %c0_19 = arith.constant 0 : index
    %27 = arith.index_cast %26 : i32 to index
    %c0_20 = arith.constant 0 : index
    %c0_21 = arith.constant 0 : index
    %28 = vector.load %arg2[%c0_19, %27, %c0_20, %c0_21] : memref<1x20x20x4xf32, #tpu.memory_space<vmem>>, vector<1x10x18x4xf32>
    %29 = vector.shape_cast %28 : vector<1x10x18x4xf32> to vector<10x18x4xf32>
    %c2_i32_22 = arith.constant 2 : i32
    %30 = arith.addi %1, %c2_i32_22 : i32
    %c0_23 = arith.constant 0 : index
    %31 = arith.index_cast %30 : i32 to index
    %c1_24 = arith.constant 1 : index
    %c0_25 = arith.constant 0 : index
    %32 = vector.load %arg2[%c0_23, %31, %c1_24, %c0_25] : memref<1x20x20x4xf32, #tpu.memory_space<vmem>>, vector<1x10x18x4xf32>
    %33 = vector.shape_cast %32 : vector<1x10x18x4xf32> to vector<10x18x4xf32>
    %c2_i32_26 = arith.constant 2 : i32
    %34 = arith.addi %1, %c2_i32_26 : i32
    %c0_27 = arith.constant 0 : index
    %35 = arith.index_cast %34 : i32 to index
    %c2_28 = arith.constant 2 : index
    %c0_29 = arith.constant 0 : index
    %36 = vector.load %arg2[%c0_27, %35, %c2_28, %c0_29] : memref<1x20x20x4xf32, #tpu.memory_space<vmem>>, vector<1x10x18x4xf32>
    %37 = vector.shape_cast %36 : vector<1x10x18x4xf32> to vector<10x18x4xf32>
    %38 = tpu.concatenate %5, %9, %13, %17, %21, %25, %29, %33, %37 in 2 : vector<10x18x4xf32>, vector<10x18x4xf32>, vector<10x18x4xf32>, vector<10x18x4xf32>, vector<10x18x4xf32>, vector<10x18x4xf32>, vector<10x18x4xf32>, vector<10x18x4xf32>, vector<10x18x4xf32> -> vector<10x18x36xf32>
    %39 = vector.shape_cast %38 : vector<10x18x36xf32> to vector<180x36xf32>
    %c0_30 = arith.constant 0 : index
    %c0_31 = arith.constant 0 : index
    %40 = vector.load %arg3[%c0_30, %c0_31] : memref<36x4xf32, #tpu.memory_space<vmem>>, vector<36x4xf32>
    %cst = arith.constant dense<0.000000e+00> : vector<180x4xf32>
    %41 = tpu.matmul %39, %40, %cst {dimension_numbers = #tpu.dot_dimension_numbers<[1], [0], [0], [1], [0, 0, 1, 1], [], []>} : vector<180x36xf32>, vector<36x4xf32>, vector<180x4xf32> -> vector<180x4xf32>
    %c0_32 = arith.constant 0 : index
    %c0_33 = arith.constant 0 : index
    %42 = vector.load %arg4[%c0_32, %c0_33] : memref<1x4xf32, #tpu.memory_space<vmem>>, vector<1x4xf32>
    %43 = vector.broadcast %42 : vector<1x4xf32> to vector<180x4xf32>
    %44 = arith.addf %41, %43 : vector<180x4xf32>
    %cst_34 = arith.constant 0.000000e+00 : f32
    %45 = vector.broadcast %cst_34 : f32 to vector<180x4xf32>
    %46 = arith.maximumf %44, %45 : vector<180x4xf32>
    %47 = vector.shape_cast %46 : vector<180x4xf32> to vector<10x18x4xf32>
    %c1_i32_35 = arith.constant 1 : i32
    %48 = arith.subi %1, %c1_i32_35 : i32
    %49 = tpu.iota {dimensions = array<i32: 0>} : vector<10x18x1xi32>
    %50 = vector.broadcast %48 : i32 to vector<10x18x1xi32>
    %51 = arith.addi %50, %49 : vector<10x18x1xi32>
    %52 = tpu.iota {dimensions = array<i32: 1>} : vector<10x18x1xi32>
    %c-1_i32 = arith.constant -1 : i32
    %53 = vector.broadcast %c-1_i32 : i32 to vector<10x18x1xi32>
    %54 = arith.addi %53, %52 : vector<10x18x1xi32>
    %c0_i32_36 = arith.constant 0 : i32
    %55 = vector.broadcast %c0_i32_36 : i32 to vector<10x18x1xi32>
    %56 = arith.cmpi sge, %51, %55 : vector<10x18x1xi32>
    %c16_i32 = arith.constant 16 : i32
    %57 = vector.broadcast %c16_i32 : i32 to vector<10x18x1xi32>
    %58 = arith.cmpi slt, %51, %57 : vector<10x18x1xi32>
    %59 = arith.andi %56, %58 : vector<10x18x1xi1>
    %c0_i32_37 = arith.constant 0 : i32
    %60 = vector.broadcast %c0_i32_37 : i32 to vector<10x18x1xi32>
    %61 = arith.cmpi sge, %54, %60 : vector<10x18x1xi32>
    %62 = arith.andi %59, %61 : vector<10x18x1xi1>
    %c16_i32_38 = arith.constant 16 : i32
    %63 = vector.broadcast %c16_i32_38 : i32 to vector<10x18x1xi32>
    %64 = arith.cmpi slt, %54, %63 : vector<10x18x1xi32>
    %65 = arith.andi %62, %64 : vector<10x18x1xi1>
    %cst_39 = arith.constant 0.000000e+00 : f32
    %66 = vector.shape_cast %65 : vector<10x18x1xi1> to vector<10x18x1xi1>
    %67 = vector.broadcast %66 : vector<10x18x1xi1> to vector<10x18x4xi1>
    %68 = vector.broadcast %cst_39 : f32 to vector<10x18x4xf32>
    %69 = arith.select %67, %47, %68 : vector<10x18x4xi1>, vector<10x18x4xf32>
    %70 = vector.extract_strided_slice %69 {offsets = [0, 0, 0], sizes = [8, 16, 4], strides = [1, 1, 1]} : vector<10x18x4xf32> to vector<8x16x4xf32>
    %71 = vector.extract_strided_slice %69 {offsets = [0, 1, 0], sizes = [8, 16, 4], strides = [1, 1, 1]} : vector<10x18x4xf32> to vector<8x16x4xf32>
    %72 = vector.extract_strided_slice %69 {offsets = [0, 2, 0], sizes = [8, 16, 4], strides = [1, 1, 1]} : vector<10x18x4xf32> to vector<8x16x4xf32>
    %73 = vector.extract_strided_slice %69 {offsets = [1, 0, 0], sizes = [8, 16, 4], strides = [1, 1, 1]} : vector<10x18x4xf32> to vector<8x16x4xf32>
    %74 = vector.extract_strided_slice %69 {offsets = [1, 1, 0], sizes = [8, 16, 4], strides = [1, 1, 1]} : vector<10x18x4xf32> to vector<8x16x4xf32>
    %75 = vector.extract_strided_slice %69 {offsets = [1, 2, 0], sizes = [8, 16, 4], strides = [1, 1, 1]} : vector<10x18x4xf32> to vector<8x16x4xf32>
    %76 = vector.extract_strided_slice %69 {offsets = [2, 0, 0], sizes = [8, 16, 4], strides = [1, 1, 1]} : vector<10x18x4xf32> to vector<8x16x4xf32>
    %77 = vector.extract_strided_slice %69 {offsets = [2, 1, 0], sizes = [8, 16, 4], strides = [1, 1, 1]} : vector<10x18x4xf32> to vector<8x16x4xf32>
    %78 = vector.extract_strided_slice %69 {offsets = [2, 2, 0], sizes = [8, 16, 4], strides = [1, 1, 1]} : vector<10x18x4xf32> to vector<8x16x4xf32>
    %79 = tpu.concatenate %70, %71, %72, %73, %74, %75, %76, %77, %78 in 2 : vector<8x16x4xf32>, vector<8x16x4xf32>, vector<8x16x4xf32>, vector<8x16x4xf32>, vector<8x16x4xf32>, vector<8x16x4xf32>, vector<8x16x4xf32>, vector<8x16x4xf32>, vector<8x16x4xf32> -> vector<8x16x36xf32>
    %80 = vector.shape_cast %79 : vector<8x16x36xf32> to vector<128x36xf32>
    %c0_40 = arith.constant 0 : index
    %c0_41 = arith.constant 0 : index
    %81 = vector.load %arg5[%c0_40, %c0_41] : memref<36x4xf32, #tpu.memory_space<vmem>>, vector<36x4xf32>
    %cst_42 = arith.constant dense<0.000000e+00> : vector<128x4xf32>
    %82 = tpu.matmul %80, %81, %cst_42 {dimension_numbers = #tpu.dot_dimension_numbers<[1], [0], [0], [1], [0, 0, 1, 1], [], []>} : vector<128x36xf32>, vector<36x4xf32>, vector<128x4xf32> -> vector<128x4xf32>
    %c0_43 = arith.constant 0 : index
    %c0_44 = arith.constant 0 : index
    %83 = vector.load %arg6[%c0_43, %c0_44] : memref<1x4xf32, #tpu.memory_space<vmem>>, vector<1x4xf32>
    %84 = vector.broadcast %83 : vector<1x4xf32> to vector<128x4xf32>
    %85 = arith.addf %82, %84 : vector<128x4xf32>
    %cst_45 = arith.constant 0.000000e+00 : f32
    %86 = vector.broadcast %cst_45 : f32 to vector<128x4xf32>
    %87 = arith.maximumf %85, %86 : vector<128x4xf32>
    %c0_46 = arith.constant 0 : index
    %c0_47 = arith.constant 0 : index
    %88 = vector.load %arg7[%c0_46, %c0_47] : memref<4x4xf32, #tpu.memory_space<vmem>>, vector<4x4xf32>
    %cst_48 = arith.constant dense<0.000000e+00> : vector<128x4xf32>
    %89 = tpu.matmul %87, %88, %cst_48 {dimension_numbers = #tpu.dot_dimension_numbers<[1], [0], [0], [1], [0, 0, 1, 1], [], []>} : vector<128x4xf32>, vector<4x4xf32>, vector<128x4xf32> -> vector<128x4xf32>
    %c0_49 = arith.constant 0 : index
    %c0_50 = arith.constant 0 : index
    %90 = vector.load %arg8[%c0_49, %c0_50] : memref<1x4xf32, #tpu.memory_space<vmem>>, vector<1x4xf32>
    %91 = vector.broadcast %90 : vector<1x4xf32> to vector<128x4xf32>
    %92 = arith.addf %89, %91 : vector<128x4xf32>
    %c2_i32_51 = arith.constant 2 : i32
    %93 = arith.addi %1, %c2_i32_51 : i32
    %c0_52 = arith.constant 0 : index
    %94 = arith.index_cast %93 : i32 to index
    %c2_53 = arith.constant 2 : index
    %c0_54 = arith.constant 0 : index
    %95 = vector.load %arg2[%c0_52, %94, %c2_53, %c0_54] : memref<1x20x20x4xf32, #tpu.memory_space<vmem>>, vector<1x8x16x4xf32>
    %96 = vector.shape_cast %95 : vector<1x8x16x4xf32> to vector<8x16x4xf32>
    %97 = vector.shape_cast %96 : vector<8x16x4xf32> to vector<128x4xf32>
    %98 = arith.addf %92, %97 : vector<128x4xf32>
    %cst_55 = arith.constant 0.000000e+00 : f32
    %99 = vector.broadcast %cst_55 : f32 to vector<128x4xf32>
    %100 = arith.maximumf %98, %99 : vector<128x4xf32>
    %101 = vector.shape_cast %100 : vector<128x4xf32> to vector<8x16x4xf32>
    %c0_56 = arith.constant 0 : index
    %c0_57 = arith.constant 0 : index
    %c0_58 = arith.constant 0 : index
    %c0_59 = arith.constant 0 : index
    %102 = vector.load %arg9[%c0_56, %c0_57, %c0_58, %c0_59] : memref<1x8x16x4xf32, #tpu.memory_space<vmem>>, vector<1x8x16x4xf32>
    %103 = vector.shape_cast %102 : vector<1x8x16x4xf32> to vector<8x16x4xf32>
    %104 = vector.shape_cast %101 : vector<8x16x4xf32> to vector<1x8x16x4xf32>
    tpu.vector_store %arg9[%c0_56, %c0_57, %c0_58, %c0_59], %104 {strides = array<i32>} : memref<1x8x16x4xf32, #tpu.memory_space<vmem>>, vector<1x8x16x4xf32>,
    return
  }
  func.func @transform_0(%arg0: i32, %arg1: i32) -> (i32, i32, i32, i32) {
    %c0_i32 = arith.constant 0 : i32
    %c0_i32_0 = arith.constant 0 : i32
    %c0_i32_1 = arith.constant 0 : i32
    %c0_i32_2 = arith.constant 0 : i32
    return %arg0, %c0_i32, %c0_i32_0, %c0_i32_1 : i32, i32, i32, i32
  }
  func.func @transform_1(%arg0: i32, %arg1: i32) -> (i32, i32) {
    %c0_i32 = arith.constant 0 : i32
    %c0_i32_0 = arith.constant 0 : i32
    %c0_i32_1 = arith.constant 0 : i32
    return %c0_i32, %c0_i32_0 : i32, i32
  }
  func.func @transform_2(%arg0: i32, %arg1: i32) -> (i32, i32) {
    %c0_i32 = arith.constant 0 : i32
    %c0_i32_0 = arith.constant 0 : i32
    %c0_i32_1 = arith.constant 0 : i32
    return %c0_i32, %c0_i32_0 : i32, i32
  }
  func.func @transform_3(%arg0: i32, %arg1: i32) -> (i32, i32) {
    %c0_i32 = arith.constant 0 : i32
    %c0_i32_0 = arith.constant 0 : i32
    %c0_i32_1 = arith.constant 0 : i32
    return %c0_i32, %c0_i32_0 : i32, i32
  }
  func.func @transform_4(%arg0: i32, %arg1: i32) -> (i32, i32) {
    %c0_i32 = arith.constant 0 : i32
    %c0_i32_0 = arith.constant 0 : i32
    %c0_i32_1 = arith.constant 0 : i32
    return %c0_i32, %c0_i32_0 : i32, i32
  }
  func.func @transform_5(%arg0: i32, %arg1: i32) -> (i32, i32) {
    %c0_i32 = arith.constant 0 : i32
    %c0_i32_0 = arith.constant 0 : i32
    %c0_i32_1 = arith.constant 0 : i32
    return %c0_i32, %c0_i32_0 : i32, i32
  }
  func.func @transform_6(%arg0: i32, %arg1: i32) -> (i32, i32) {
    %c0_i32 = arith.constant 0 : i32
    %c0_i32_0 = arith.constant 0 : i32
    %c0_i32_1 = arith.constant 0 : i32
    return %c0_i32, %c0_i32_0 : i32, i32
  }
  func.func @transform_7(%arg0: i32, %arg1: i32) -> (i32, i32, i32, i32) {
    %c0_i32 = arith.constant 0 : i32
    %c0_i32_0 = arith.constant 0 : i32
    %c0_i32_1 = arith.constant 0 : i32
    return %arg0, %arg1, %c0_i32, %c0_i32_0 : i32, i32, i32, i32
  }
}

</mosaic_0001>

<llo_original>
// kernel: tpu_custom_call.1
$region0: #{tpu_custom_call.1}
  #allocation0 [shape = 'u32[]', space=smem, size = 0x4, offset = 0x4, fixed_abs, tag = 'smem constant byte address 0x4 - core index']
  #allocation1 [shape = 'u32[144,128]{1,0:T(1,128)}', space=vmem, size = 0x12000, scoped, tag = 'internal scratch']
  %s0 = inlined_call_operand.vmem [shape: f32[2,20,20,4], index: 0, kind: input, shape index: {}]
  %s1 = inlined_call_operand.vmem [shape: f32[36,4], index: 1, kind: input, shape index: {}]
  %s2 = inlined_call_operand.vmem [shape: f32[1,4], index: 2, kind: input, shape index: {}]
  %s3 = inlined_call_operand.vmem [shape: f32[36,4], index: 3, kind: input, shape index: {}]
  %s4 = inlined_call_operand.vmem [shape: f32[1,4], index: 4, kind: input, shape index: {}]
  %s5 = inlined_call_operand.vmem [shape: f32[4,4], index: 5, kind: input, shape index: {}]
  %s6 = inlined_call_operand.vmem [shape: f32[1,4], index: 6, kind: input, shape index: {}]
  %s7 = inlined_call_operand.vmem [shape: f32[2,16,16,4], index: 7, kind: output, shape index: {}]
  %s8 = sld [smem:[#allocation0]]
  $region61: #{tpu_custom_call.1} parent=0
    _
  %s10 = ssub.s32 1, %s8
  %s11 = scalar_select 0, %s10, %s8
  loop: start=0, step=1, limit=6
  $region2: #{tpu_custom_call.1} parent=0 // loop_pre_header
    _
  $region3: #{tpu_custom_call.1} parent=0 // loop_header
    %s13 = sphi 0, %s17
    %p14 = scmp.ge.s32.totalorder %s13, 6
    %s20 = sphi 0, %s32
    %s21 = sphi 0, %s28
    %s22 = sphi 0, %s20
    %s23 = sphi 0, %s21
    %s24 = sphi 0, %s22
    %s25 = sphi 0, %s23
    %s35 = sphi 0, %s37
    %s38 = sphi 0, %s35
    %s39 = sphi 0, %s38
    %s55 = sphi 0, %s39
    %s59 = sphi 0, %s59
    %s61 = sphi 0, %s59
    %s62 = sphi 0, %s61
    %s76 = sphi 0, %s62
    %s80 = sphi 0, %s80
    %s82 = sphi 0, %s80
    %s83 = sphi 0, %s82
    %s97 = sphi 0, %s83
    %s101 = sphi 0, %s101
    %s103 = sphi 0, %s101
    %s104 = sphi 0, %s103
    %s118 = sphi 0, %s104
    %s122 = sphi 0, %s122
    %s124 = sphi 0, %s122
    %s125 = sphi 0, %s124
    %s139 = sphi 0, %s125
    %s143 = sphi 0, %s143
    %s145 = sphi 0, %s143
    %s146 = sphi 0, %s145
    %s160 = sphi 0, %s146
    %s164 = sphi 0, %s164
    %s166 = sphi 0, %s164
    %s167 = sphi 0, %s166
    %s181 = sphi 0, %s167
    %s189 = sphi 0, %s191
    %s192 = sphi 0, %s189
    %s193 = sphi 0, %s192
    %s209 = sphi 0, %s193
  $region4: #{tpu_custom_call.1} parent=0 // loop_header_branch
    %16 = sbr.rel (%p14) target = $region8
  $region5: #{tpu_custom_call.1} parent=0 // loop_body
    %s18 = ssub.s32 %s13, 1
    %s19 = ssub.s32 %s13, 2
    %s26 = sadd.s32 1, %s21
    %p27 = scmp.ge.s32.totalorder %s26, 2
    %s28 = scalar_select %p27, 0, %s26
    %s29 = sadd.s32 1, %s20
    %s30 = scalar_select %p27, %s29, %s20
    %p31 = scmp.ge.s32.totalorder %s30, 2
    %s32 = scalar_select %p31, 0, %s30
    %s33 = ssub.s32 %s20, %s32
    %p34 = scmp.eq.s32.totalorder %s33, 0
    %s36 = sadd.s32 %s35, 1
    %s37 = scalar_select %p34, %s35, %s36
    %p40 = pneg %p34
    %p41 = scmp.eq.s32.totalorder %s13, 3
    %p42 = por %p40, %p41
    %p43 = scmp.ne.s32.totalorder %s35, %s38
    %p44 = scmp.eq.s32.totalorder %s13, 0
    %p45 = por %p43, %p44
    %p46 = scmp.ne.s32.totalorder %s35, %s38
    %p47 = scmp.eq.s32.totalorder %s18, 3
    %p48 = por %p46, %p47
    %p49 = scmp.ne.s32.totalorder %s38, %s39
    %p50 = scmp.eq.s32.totalorder %s18, 0
    %p51 = por %p49, %p50
    %p52 = scmp.ne.s32.totalorder %s38, %s39
    %p53 = scmp.eq.s32.totalorder %s19, 3
    %p54 = por %p52, %p53
    %p56 = scmp.ne.s32.totalorder %s39, %s55
    %p57 = scmp.eq.s32.totalorder %s19, 0
    %p58 = por %p56, %p57
    %s60 = sadd.s32 %s59, 1
    %p63 = scmp.eq.s32.totalorder %s13, 3
    %p64 = scmp.ne.s32.totalorder %s59, %s61
    %p65 = scmp.eq.s32.totalorder %s13, 0
    %p66 = por %p64, %p65
    %p67 = scmp.ne.s32.totalorder %s59, %s61
    %p68 = scmp.eq.s32.totalorder %s18, 3
    %p69 = por %p67, %p68
    %p70 = scmp.ne.s32.totalorder %s61, %s62
    %p71 = scmp.eq.s32.totalorder %s18, 0
    %p72 = por %p70, %p71
    %p73 = scmp.ne.s32.totalorder %s61, %s62
    %p74 = scmp.eq.s32.totalorder %s19, 3
    %p75 = por %p73, %p74
    %p77 = scmp.ne.s32.totalorder %s62, %s76
    %p78 = scmp.eq.s32.totalorder %s19, 0
    %p79 = por %p77, %p78
    %s81 = sadd.s32 %s80, 1
    %p84 = scmp.eq.s32.totalorder %s13, 3
    %p85 = scmp.ne.s32.totalorder %s80, %s82
    %p86 = scmp.eq.s32.totalorder %s13, 0
    %p87 = por %p85, %p86
    %p88 = scmp.ne.s32.totalorder %s80, %s82
    %p89 = scmp.eq.s32.totalorder %s18, 3
    %p90 = por %p88, %p89
    %p91 = scmp.ne.s32.totalorder %s82, %s83
    %p92 = scmp.eq.s32.totalorder %s18, 0
    %p93 = por %p91, %p92
    %p94 = scmp.ne.s32.totalorder %s82, %s83
    %p95 = scmp.eq.s32.totalorder %s19, 3
    %p96 = por %p94, %p95
    %p98 = scmp.ne.s32.totalorder %s83, %s97
    %p99 = scmp.eq.s32.totalorder %s19, 0
    %p100 = por %p98, %p99
    %s102 = sadd.s32 %s101, 1
    %p105 = scmp.eq.s32.totalorder %s13, 3
    %p106 = scmp.ne.s32.totalorder %s101, %s103
    %p107 = scmp.eq.s32.totalorder %s13, 0
    %p108 = por %p106, %p107
    %p109 = scmp.ne.s32.totalorder %s101, %s103
    %p110 = scmp.eq.s32.totalorder %s18, 3
    %p111 = por %p109, %p110
    %p112 = scmp.ne.s32.totalorder %s103, %s104
    %p113 = scmp.eq.s32.totalorder %s18, 0
    %p114 = por %p112, %p113
    %p115 = scmp.ne.s32.totalorder %s103, %s104
    %p116 = scmp.eq.s32.totalorder %s19, 3
    %p117 = por %p115, %p116
    %p119 = scmp.ne.s32.totalorder %s104, %s118
    %p120 = scmp.eq.s32.totalorder %s19, 0
    %p121 = por %p119, %p120
    %s123 = sadd.s32 %s122, 1
    %p126 = scmp.eq.s32.totalorder %s13, 3
    %p127 = scmp.ne.s32.totalorder %s122, %s124
    %p128 = scmp.eq.s32.totalorder %s13, 0
    %p129 = por %p127, %p128
    %p130 = scmp.ne.s32.totalorder %s122, %s124
    %p131 = scmp.eq.s32.totalorder %s18, 3
    %p132 = por %p130, %p131
    %p133 = scmp.ne.s32.totalorder %s124, %s125
    %p134 = scmp.eq.s32.totalorder %s18, 0
    %p135 = por %p133, %p134
    %p136 = scmp.ne.s32.totalorder %s124, %s125
    %p137 = scmp.eq.s32.totalorder %s19, 3
    %p138 = por %p136, %p137
    %p140 = scmp.ne.s32.totalorder %s125, %s139
    %p141 = scmp.eq.s32.totalorder %s19, 0
    %p142 = por %p140, %p141
    %s144 = sadd.s32 %s143, 1
    %p147 = scmp.eq.s32.totalorder %s13, 3
    %p148 = scmp.ne.s32.totalorder %s143, %s145
    %p149 = scmp.eq.s32.totalorder %s13, 0
    %p150 = por %p148, %p149
    %p151 = scmp.ne.s32.totalorder %s143, %s145
    %p152 = scmp.eq.s32.totalorder %s18, 3
    %p153 = por %p151, %p152
    %p154 = scmp.ne.s32.totalorder %s145, %s146
    %p155 = scmp.eq.s32.totalorder %s18, 0
    %p156 = por %p154, %p155
    %p157 = scmp.ne.s32.totalorder %s145, %s146
    %p158 = scmp.eq.s32.totalorder %s19, 3
    %p159 = por %p157, %p158
    %p161 = scmp.ne.s32.totalorder %s146, %s160
    %p162 = scmp.eq.s32.totalorder %s19, 0
    %p163 = por %p161, %p162
    %s165 = sadd.s32 %s164, 1
    %p168 = scmp.eq.s32.totalorder %s13, 3
    %p169 = scmp.ne.s32.totalorder %s164, %s166
    %p170 = scmp.eq.s32.totalorder %s13, 0
    %p171 = por %p169, %p170
    %p172 = scmp.ne.s32.totalorder %s164, %s166
    %p173 = scmp.eq.s32.totalorder %s18, 3
    %p174 = por %p172, %p173
    %p175 = scmp.ne.s32.totalorder %s166, %s167
    %p176 = scmp.eq.s32.totalorder %s18, 0
    %p177 = por %p175, %p176
    %p178 = scmp.ne.s32.totalorder %s166, %s167
    %p179 = scmp.eq.s32.totalorder %s19, 3
    %p180 = por %p178, %p179
    %p182 = scmp.ne.s32.totalorder %s167, %s181
    %p183 = scmp.eq.s32.totalorder %s19, 0
    %p184 = por %p182, %p183
    %s185 = ssub.s32 %s20, %s32
    %s186 = ssub.s32 %s21, %s28
    %s187 = sor.u32 %s185, %s186
    %p188 = scmp.eq.s32.totalorder %s187, 0
    %s190 = sadd.s32 %s189, 1
    %s191 = scalar_select %p188, %s189, %s190
    %p194 = pneg %p188
    %p195 = scmp.eq.s32.totalorder %s13, 3
    %p196 = por %p194, %p195
    %p197 = scmp.ne.s32.totalorder %s189, %s192
    %p198 = scmp.eq.s32.totalorder %s13, 0
    %p199 = por %p197, %p198
    %p200 = scmp.ne.s32.totalorder %s189, %s192
    %p201 = scmp.eq.s32.totalorder %s18, 3
    %p202 = por %p200, %p201
    %p203 = scmp.ne.s32.totalorder %s192, %s193
    %p204 = scmp.eq.s32.totalorder %s18, 0
    %p205 = por %p203, %p204
    %p206 = scmp.ne.s32.totalorder %s192, %s193
    %p207 = scmp.eq.s32.totalorder %s19, 3
    %p208 = por %p206, %p207
    %p210 = scmp.ne.s32.totalorder %s193, %s209
    %p211 = scmp.eq.s32.totalorder %s19, 0
    %p212 = por %p210, %p211
    %p213 = scmp.le.s32.totalorder 1, %s13
    %p214 = scmp.lt.s32.totalorder %s13, 5
    %p215 = pnand %p213, %p214
    %p216 = pneg %p215
    // Predicated region
    $region9: #{tpu_custom_call.1} parent=5 // pred_check
      _
    $region10: #{tpu_custom_call.1} parent=5 // pred_check_branch
      %218 = sbr.rel (%p215) target = $region12
    $region11: #{tpu_custom_call.1} parent=5 // pred_region
      %s219 = ssub.s32 %s13, 1
      // Predicated region
      $region13: #{tpu_custom_call.1} parent=11 // pred_check
        %p220 = pneg %p72
      $region14: #{tpu_custom_call.1} parent=11 // pred_check_branch
        %222 = sbr.rel (%p220) target = $region16
      $region15: #{tpu_custom_call.1} parent=11 // pred_region
        _
      $region16: #{tpu_custom_call.1} parent=11 // pred_fallthru
        _
      // Predicated region
      $region17: #{tpu_custom_call.1} parent=11 // pred_check
        %p223 = pneg %p93
      $region18: #{tpu_custom_call.1} parent=11 // pred_check_branch
        %225 = sbr.rel (%p223) target = $region20
      $region19: #{tpu_custom_call.1} parent=11 // pred_region
        _
      $region20: #{tpu_custom_call.1} parent=11 // pred_fallthru
        _
      // Predicated region
      $region21: #{tpu_custom_call.1} parent=11 // pred_check
        %p226 = pneg %p114
      $region22: #{tpu_custom_call.1} parent=11 // pred_check_branch
        %228 = sbr.rel (%p226) target = $region24
      $region23: #{tpu_custom_call.1} parent=11 // pred_region
        _
      $region24: #{tpu_custom_call.1} parent=11 // pred_fallthru
        _
      // Predicated region
      $region25: #{tpu_custom_call.1} parent=11 // pred_check
        %p229 = pneg %p135
      $region26: #{tpu_custom_call.1} parent=11 // pred_check_branch
        %231 = sbr.rel (%p229) target = $region28
      $region27: #{tpu_custom_call.1} parent=11 // pred_region
        _
      $region28: #{tpu_custom_call.1} parent=11 // pred_fallthru
        _
      // Predicated region
      $region29: #{tpu_custom_call.1} parent=11 // pred_check
        %p232 = pneg %p156
      $region30: #{tpu_custom_call.1} parent=11 // pred_check_branch
        %234 = sbr.rel (%p232) target = $region32
      $region31: #{tpu_custom_call.1} parent=11 // pred_region
        _
      $region32: #{tpu_custom_call.1} parent=11 // pred_fallthru
        _
      // Predicated region
      $region33: #{tpu_custom_call.1} parent=11 // pred_check
        %p235 = pneg %p177
      $region34: #{tpu_custom_call.1} parent=11 // pred_check_branch
        %237 = sbr.rel (%p235) target = $region36
      $region35: #{tpu_custom_call.1} parent=11 // pred_region
        _
      $region36: #{tpu_custom_call.1} parent=11 // pred_fallthru
        _
    $region12: #{tpu_custom_call.1} parent=5 // pred_fallthru
      _
    %p238 = scmp.lt.s32.totalorder %s13, 4
    // Predicated region
    $region37: #{tpu_custom_call.1} parent=5 // pred_check
      %p239 = pneg %p238
    $region38: #{tpu_custom_call.1} parent=5 // pred_check_branch
      %241 = sbr.rel (%p239) target = $region40
    $region39: #{tpu_custom_call.1} parent=5 // pred_region
      // Predicated region
      $region41: #{tpu_custom_call.1} parent=39 // pred_check
        %p242 = pneg %p45
      $region42: #{tpu_custom_call.1} parent=39 // pred_check_branch
        %244 = sbr.rel (%p242) target = $region44
      $region43: #{tpu_custom_call.1} parent=39 // pred_region
        %p245 = scmp.lt.s32.totalorder %s20, 1
        %s246 = scalar_select %p245, %s20, 1
        %s247 = smul.addr %s246, 60
        %s248 = smul.addr %s247, 8
        %s249 = scalar_lea.vmem %s0, %s248
      $region44: #{tpu_custom_call.1} parent=39 // pred_fallthru
        _
    $region40: #{tpu_custom_call.1} parent=5 // pred_fallthru
      _
    %p250 = scmp.le.s32.totalorder 1, %s13
    %p251 = scmp.lt.s32.totalorder %s13, 5
    %p252 = pnand %p250, %p251
    %p253 = pneg %p252
    // Predicated region
    $region45: #{tpu_custom_call.1} parent=5 // pred_check
      _
    $region46: #{tpu_custom_call.1} parent=5 // pred_check_branch
      %255 = sbr.rel (%p252) target = $region48
    $region47: #{tpu_custom_call.1} parent=5 // pred_region
      %s256 = ssub.s32 %s13, 1
      %p257 = scmp.lt.s32.totalorder %s22, 1
      %s258 = scalar_select %p257, %s22, 1
      %s259 = smul.addr %s258, 60
      %s260 = smul.addr %s259, 8
      %s261 = scalar_lea.vmem %s0, %s260
      %p262 = pneg %p51
      %p263 = pneg %p48
      %p264 = pneg %p72
      %p265 = pneg %p69
      %p266 = pneg %p93
      %p267 = pneg %p90
      %p268 = pneg %p114
      %p269 = pneg %p111
      %p270 = pneg %p135
      %p271 = pneg %p132
      %p272 = pneg %p156
      %p273 = pneg %p153
      %p274 = pneg %p177
      %p275 = pneg %p174
      %p276 = pneg %p205
      %p277 = pneg %p202
      %s278 = smul.u32 8, %s23
      %p279 = scmp.lt.s32.totalorder %s22, 1
      %s280 = scalar_select %p279, %s22, 1
      %p281 = scmp.lt.s32.totalorder %s278, 15
      %s282 = scalar_select %p281, %s278, 15
      %s283 = smul.addr %s282, 2
      %s284 = smul.addr %s280, 32
      %s285 = sadd.s32 %s283, %s284
      %s286 = smul.addr %s285, 8
      %s287 = scalar_lea.vmem %s7, %s286
      %p288 = scmp.lt.s32.totalorder %s22, 1
      %s289 = scalar_select %p288, %s22, 1
      %s290 = smul.addr %s289, 60
      %s291 = smul.addr %s290, 8
      %s292 = scalar_lea.vmem %s0, %s291
      %s293 = smul.u32 8, %s23
      %p294 = scmp.lt.s32.totalorder %s22, 1
      %s295 = scalar_select %p294, %s22, 1
      %p296 = scmp.lt.s32.totalorder %s293, 15
      %s297 = scalar_select %p296, %s293, 15
      %s298 = smul.addr %s297, 2
      %s299 = smul.addr %s295, 32
      %s300 = sadd.s32 %s298, %s299
      %s301 = smul.addr %s300, 8
      %s302 = scalar_lea.vmem %s7, %s301
      %s303 = smul.u32 8, %s23
      %s304 = smul.u32 %s23, 8
      %s305 = smul.u32 %s304, 24
      %s306 = scalar_lea.vmem %s292, %s305
      %v307 = vld [vmem:[%s306] sm:$0xff]
      %v308 = vld [vmem:[%s306 + $0x8] sm:$0xff]
      %v309 = vld [vmem:[%s306 + $0x10] sm:$0x3]
      %v310 = vld [vmem:[%s306 + $0x18] sm:$0xff]
      %v311 = vld [vmem:[%s306 + $0x20] sm:$0xff]
      %v312 = vld [vmem:[%s306 + $0x28] sm:$0x3]
      %v313 = vld [vmem:[%s306 + $0x30] sm:$0xff]
      %v314 = vld [vmem:[%s306 + $0x38] sm:$0xff]
      %v315 = vld [vmem:[%s306 + $0x40] sm:$0x3]
      %v316 = vld [vmem:[%s306 + $0x48] sm:$0xff]
      %v317 = vld [vmem:[%s306 + $0x50] sm:$0xff]
      %v318 = vld [vmem:[%s306 + $0x58] sm:$0x3]
      %v319 = vld [vmem:[%s306 + $0x60] sm:$0xff]
      %v320 = vld [vmem:[%s306 + $0x68] sm:$0xff]
      %v321 = vld [vmem:[%s306 + $0x70] sm:$0x3]
      %v322 = vld [vmem:[%s306 + $0x78] sm:$0xff]
      %v323 = vld [vmem:[%s306 + $0x80] sm:$0xff]
      %v324 = vld [vmem:[%s306 + $0x88] sm:$0x3]
      %v325 = vld [vmem:[%s306 + $0x90] sm:$0xff]
      %v326 = vld [vmem:[%s306 + $0x98] sm:$0xff]
      %v327 = vld [vmem:[%s306 + $0xa0] sm:$0x3]
      %v328 = vld [vmem:[%s306 + $0xa8] sm:$0xff]
      %v329 = vld [vmem:[%s306 + $0xb0] sm:$0xff]
      %v330 = vld [vmem:[%s306 + $0xb8] sm:$0x3]
      %v331 = vld [vmem:[%s306 + $0xc0] sm:$0xff]
      %v332 = vld [vmem:[%s306 + $0xc8] sm:$0xff]
      %v333 = vld [vmem:[%s306 + $0xd0] sm:$0x3]
      %v334 = vld [vmem:[%s306 + $0xd8] sm:$0xff]
      %v335 = vld [vmem:[%s306 + $0xe0] sm:$0xff]
      %v336 = vld [vmem:[%s306 + $0xe8] sm:$0x3]
      %v337 = vld [vmem:[%s306 + $0x1] sm:$0xff]
      %v338 = vld [vmem:[%s306 + $0x9] sm:$0xff]
      %v339 = vld [vmem:[%s306 + $0x11] sm:$0x3]
      %v340 = vld [vmem:[%s306 + $0x19] sm:$0xff]
      %v341 = vld [vmem:[%s306 + $0x21] sm:$0xff]
      %v342 = vld [vmem:[%s306 + $0x29] sm:$0x3]
      %v343 = vld [vmem:[%s306 + $0x31] sm:$0xff]
      %v344 = vld [vmem:[%s306 + $0x39] sm:$0xff]
      %v345 = vld [vmem:[%s306 + $0x41] sm:$0x3]
      %v346 = vld [vmem:[%s306 + $0x49] sm:$0xff]
      %v347 = vld [vmem:[%s306 + $0x51] sm:$0xff]
      %v348 = vld [vmem:[%s306 + $0x59] sm:$0x3]
      %v349 = vld [vmem:[%s306 + $0x61] sm:$0xff]
      %v350 = vld [vmem:[%s306 + $0x69] sm:$0xff]
      %v351 = vld [vmem:[%s306 + $0x71] sm:$0x3]
      %v352 = vld [vmem:[%s306 + $0x79] sm:$0xff]
      %v353 = vld [vmem:[%s306 + $0x81] sm:$0xff]
      %v354 = vld [vmem:[%s306 + $0x89] sm:$0x3]
      %v355 = vld [vmem:[%s306 + $0x91] sm:$0xff]
      %v356 = vld [vmem:[%s306 + $0x99] sm:$0xff]
      %v357 = vld [vmem:[%s306 + $0xa1] sm:$0x3]
      %v358 = vld [vmem:[%s306 + $0xa9] sm:$0xff]
      %v359 = vld [vmem:[%s306 + $0xb1] sm:$0xff]
      %v360 = vld [vmem:[%s306 + $0xb9] sm:$0x3]
      %v361 = vld [vmem:[%s306 + $0xc1] sm:$0xff]
      %v362 = vld [vmem:[%s306 + $0xc9] sm:$0xff]
      %v363 = vld [vmem:[%s306 + $0xd1] sm:$0x3]
      %v364 = vld [vmem:[%s306 + $0xd9] sm:$0xff]
      %v365 = vld [vmem:[%s306 + $0xe1] sm:$0xff]
      %v366 = vld [vmem:[%s306 + $0xe9] sm:$0x3]
      %v367 = vld [vmem:[%s306 + $0x2] sm:$0xff]
      %v368 = vld [vmem:[%s306 + $0xa] sm:$0xff]
      %v369 = vld [vmem:[%s306 + $0x12] sm:$0x3]
      %v370 = vld [vmem:[%s306 + $0x1a] sm:$0xff]
      %v371 = vld [vmem:[%s306 + $0x22] sm:$0xff]
      %v372 = vld [vmem:[%s306 + $0x2a] sm:$0x3]
      %v373 = vld [vmem:[%s306 + $0x32] sm:$0xff]
      %v374 = vld [vmem:[%s306 + $0x3a] sm:$0xff]
      %v375 = vld [vmem:[%s306 + $0x42] sm:$0x3]
      %v376 = vld [vmem:[%s306 + $0x4a] sm:$0xff]
      %v377 = vld [vmem:[%s306 + $0x52] sm:$0xff]
      %v378 = vld [vmem:[%s306 + $0x5a] sm:$0x3]
      %v379 = vld [vmem:[%s306 + $0x62] sm:$0xff]
      %v380 = vld [vmem:[%s306 + $0x6a] sm:$0xff]
      %v381 = vld [vmem:[%s306 + $0x72] sm:$0x3]
      %v382 = vld [vmem:[%s306 + $0x7a] sm:$0xff]
      %v383 = vld [vmem:[%s306 + $0x82] sm:$0xff]
      %v384 = vld [vmem:[%s306 + $0x8a] sm:$0x3]
      %v385 = vld [vmem:[%s306 + $0x92] sm:$0xff]
      %v386 = vld [vmem:[%s306 + $0x9a] sm:$0xff]
      %v387 = vld [vmem:[%s306 + $0xa2] sm:$0x3]
      %v388 = vld [vmem:[%s306 + $0xaa] sm:$0xff]
      %v389 = vld [vmem:[%s306 + $0xb2] sm:$0xff]
      %v390 = vld [vmem:[%s306 + $0xba] sm:$0x3]
      %v391 = vld [vmem:[%s306 + $0xc2] sm:$0xff]
      %v392 = vld [vmem:[%s306 + $0xca] sm:$0xff]
      %v393 = vld [vmem:[%s306 + $0xd2] sm:$0x3]
      %v394 = vld [vmem:[%s306 + $0xda] sm:$0xff]
      %v395 = vld [vmem:[%s306 + $0xe2] sm:$0xff]
      %v396 = vld [vmem:[%s306 + $0xea] sm:$0x3]
      %s397 = sadd.s32 %s304, 1
      %s398 = smul.u32 %s397, 24
      %s399 = scalar_lea.vmem %s292, %s398
      %v400 = vld [vmem:[%s399] sm:$0xff]
      %v401 = vld [vmem:[%s399 + $0x8] sm:$0xff]
      %v402 = vld [vmem:[%s399 + $0x10] sm:$0x3]
      %v403 = vld [vmem:[%s399 + $0x18] sm:$0xff]
      %v404 = vld [vmem:[%s399 + $0x20] sm:$0xff]
      %v405 = vld [vmem:[%s399 + $0x28] sm:$0x3]
      %v406 = vld [vmem:[%s399 + $0x30] sm:$0xff]
      %v407 = vld [vmem:[%s399 + $0x38] sm:$0xff]
      %v408 = vld [vmem:[%s399 + $0x40] sm:$0x3]
      %v409 = vld [vmem:[%s399 + $0x48] sm:$0xff]
      %v410 = vld [vmem:[%s399 + $0x50] sm:$0xff]
      %v411 = vld [vmem:[%s399 + $0x58] sm:$0x3]
      %v412 = vld [vmem:[%s399 + $0x60] sm:$0xff]
      %v413 = vld [vmem:[%s399 + $0x68] sm:$0xff]
      %v414 = vld [vmem:[%s399 + $0x70] sm:$0x3]
      %v415 = vld [vmem:[%s399 + $0x78] sm:$0xff]
      %v416 = vld [vmem:[%s399 + $0x80] sm:$0xff]
      %v417 = vld [vmem:[%s399 + $0x88] sm:$0x3]
      %v418 = vld [vmem:[%s399 + $0x90] sm:$0xff]
      %v419 = vld [vmem:[%s399 + $0x98] sm:$0xff]
      %v420 = vld [vmem:[%s399 + $0xa0] sm:$0x3]
      %v421 = vld [vmem:[%s399 + $0xa8] sm:$0xff]
      %v422 = vld [vmem:[%s399 + $0xb0] sm:$0xff]
      %v423 = vld [vmem:[%s399 + $0xb8] sm:$0x3]
      %v424 = vld [vmem:[%s399 + $0xc0] sm:$0xff]
      %v425 = vld [vmem:[%s399 + $0xc8] sm:$0xff]
      %v426 = vld [vmem:[%s399 + $0xd0] sm:$0x3]
      %v427 = vld [vmem:[%s399 + $0xd8] sm:$0xff]
      %v428 = vld [vmem:[%s399 + $0xe0] sm:$0xff]
      %v429 = vld [vmem:[%s399 + $0xe8] sm:$0x3]
      %v430 = vld [vmem:[%s399 + $0x1] sm:$0xff]
      %v431 = vld [vmem:[%s399 + $0x9] sm:$0xff]
      %v432 = vld [vmem:[%s399 + $0x11] sm:$0x3]
      %v433 = vld [vmem:[%s399 + $0x19] sm:$0xff]
      %v434 = vld [vmem:[%s399 + $0x21] sm:$0xff]
      %v435 = vld [vmem:[%s399 + $0x29] sm:$0x3]
      %v436 = vld [vmem:[%s399 + $0x31] sm:$0xff]
      %v437 = vld [vmem:[%s399 + $0x39] sm:$0xff]
      %v438 = vld [vmem:[%s399 + $0x41] sm:$0x3]
      %v439 = vld [vmem:[%s399 + $0x49] sm:$0xff]
      %v440 = vld [vmem:[%s399 + $0x51] sm:$0xff]
      %v441 = vld [vmem:[%s399 + $0x59] sm:$0x3]
      %v442 = vld [vmem:[%s399 + $0x61] sm:$0xff]
      %v443 = vld [vmem:[%s399 + $0x69] sm:$0xff]
      %v444 = vld [vmem:[%s399 + $0x71] sm:$0x3]
      %v445 = vld [vmem:[%s399 + $0x79] sm:$0xff]
      %v446 = vld [vmem:[%s399 + $0x81] sm:$0xff]
      %v447 = vld [vmem:[%s399 + $0x89] sm:$0x3]
      %v448 = vld [vmem:[%s399 + $0x91] sm:$0xff]
      %v449 = vld [vmem:[%s399 + $0x99] sm:$0xff]
      %v450 = vld [vmem:[%s399 + $0xa1] sm:$0x3]
      %v451 = vld [vmem:[%s399 + $0xa9] sm:$0xff]
      %v452 = vld [vmem:[%s399 + $0xb1] sm:$0xff]
      %v453 = vld [vmem:[%s399 + $0xb9] sm:$0x3]
      %v454 = vld [vmem:[%s399 + $0xc1] sm:$0xff]
      %v455 = vld [vmem:[%s399 + $0xc9] sm:$0xff]
      %v456 = vld [vmem:[%s399 + $0xd1] sm:$0x3]
      %v457 = vld [vmem:[%s399 + $0xd9] sm:$0xff]
      %v458 = vld [vmem:[%s399 + $0xe1] sm:$0xff]
      %v459 = vld [vmem:[%s399 + $0xe9] sm:$0x3]
      %v460 = vld [vmem:[%s399 + $0x2] sm:$0xff]
      %v461 = vld [vmem:[%s399 + $0xa] sm:$0xff]
      %v462 = vld [vmem:[%s399 + $0x12] sm:$0x3]
      %v463 = vld [vmem:[%s399 + $0x1a] sm:$0xff]
      %v464 = vld [vmem:[%s399 + $0x22] sm:$0xff]
      %v465 = vld [vmem:[%s399 + $0x2a] sm:$0x3]
      %v466 = vld [vmem:[%s399 + $0x32] sm:$0xff]
      %v467 = vld [vmem:[%s399 + $0x3a] sm:$0xff]
      %v468 = vld [vmem:[%s399 + $0x42] sm:$0x3]
      %v469 = vld [vmem:[%s399 + $0x4a] sm:$0xff]
      %v470 = vld [vmem:[%s399 + $0x52] sm:$0xff]
      %v471 = vld [vmem:[%s399 + $0x5a] sm:$0x3]
      %v472 = vld [vmem:[%s399 + $0x62] sm:$0xff]
      %v473 = vld [vmem:[%s399 + $0x6a] sm:$0xff]
      %v474 = vld [vmem:[%s399 + $0x72] sm:$0x3]
      %v475 = vld [vmem:[%s399 + $0x7a] sm:$0xff]
      %v476 = vld [vmem:[%s399 + $0x82] sm:$0xff]
      %v477 = vld [vmem:[%s399 + $0x8a] sm:$0x3]
      %v478 = vld [vmem:[%s399 + $0x92] sm:$0xff]
      %v479 = vld [vmem:[%s399 + $0x9a] sm:$0xff]
      %v480 = vld [vmem:[%s399 + $0xa2] sm:$0x3]
      %v481 = vld [vmem:[%s399 + $0xaa] sm:$0xff]
      %v482 = vld [vmem:[%s399 + $0xb2] sm:$0xff]
      %v483 = vld [vmem:[%s399 + $0xba] sm:$0x3]
      %v484 = vld [vmem:[%s399 + $0xc2] sm:$0xff]
      %v485 = vld [vmem:[%s399 + $0xca] sm:$0xff]
      %v486 = vld [vmem:[%s399 + $0xd2] sm:$0x3]
      %v487 = vld [vmem:[%s399 + $0xda] sm:$0xff]
      %v488 = vld [vmem:[%s399 + $0xe2] sm:$0xff]
      %v489 = vld [vmem:[%s399 + $0xea] sm:$0x3]
      %s490 = sadd.s32 %s304, 2
      %s491 = smul.u32 %s490, 24
      %s492 = scalar_lea.vmem %s292, %s491
      %v493 = vld [vmem:[%s492] sm:$0xff]
      %v494 = vld [vmem:[%s492 + $0x8] sm:$0xff]
      %v495 = vld [vmem:[%s492 + $0x10] sm:$0x3]
      %v496 = vld [vmem:[%s492 + $0x18] sm:$0xff]
      %v497 = vld [vmem:[%s492 + $0x20] sm:$0xff]
      %v498 = vld [vmem:[%s492 + $0x28] sm:$0x3]
      %v499 = vld [vmem:[%s492 + $0x30] sm:$0xff]
      %v500 = vld [vmem:[%s492 + $0x38] sm:$0xff]
      %v501 = vld [vmem:[%s492 + $0x40] sm:$0x3]
      %v502 = vld [vmem:[%s492 + $0x48] sm:$0xff]
      %v503 = vld [vmem:[%s492 + $0x50] sm:$0xff]
      %v504 = vld [vmem:[%s492 + $0x58] sm:$0x3]
      %v505 = vld [vmem:[%s492 + $0x60] sm:$0xff]
      %v506 = vld [vmem:[%s492 + $0x68] sm:$0xff]
      %v507 = vld [vmem:[%s492 + $0x70] sm:$0x3]
      %v508 = vld [vmem:[%s492 + $0x78] sm:$0xff]
      %v509 = vld [vmem:[%s492 + $0x80] sm:$0xff]
      %v510 = vld [vmem:[%s492 + $0x88] sm:$0x3]
      %v511 = vld [vmem:[%s492 + $0x90] sm:$0xff]
      %v512 = vld [vmem:[%s492 + $0x98] sm:$0xff]
      %v513 = vld [vmem:[%s492 + $0xa0] sm:$0x3]
      %v514 = vld [vmem:[%s492 + $0xa8] sm:$0xff]
      %v515 = vld [vmem:[%s492 + $0xb0] sm:$0xff]
      %v516 = vld [vmem:[%s492 + $0xb8] sm:$0x3]
      %v517 = vld [vmem:[%s492 + $0xc0] sm:$0xff]
      %v518 = vld [vmem:[%s492 + $0xc8] sm:$0xff]
      %v519 = vld [vmem:[%s492 + $0xd0] sm:$0x3]
      %v520 = vld [vmem:[%s492 + $0xd8] sm:$0xff]
      %v521 = vld [vmem:[%s492 + $0xe0] sm:$0xff]
      %v522 = vld [vmem:[%s492 + $0xe8] sm:$0x3]
      %v523 = vld [vmem:[%s492 + $0x1] sm:$0xff]
      %v524 = vld [vmem:[%s492 + $0x9] sm:$0xff]
      %v525 = vld [vmem:[%s492 + $0x11] sm:$0x3]
      %v526 = vld [vmem:[%s492 + $0x19] sm:$0xff]
      %v527 = vld [vmem:[%s492 + $0x21] sm:$0xff]
      %v528 = vld [vmem:[%s492 + $0x29] sm:$0x3]
      %v529 = vld [vmem:[%s492 + $0x31] sm:$0xff]
      %v530 = vld [vmem:[%s492 + $0x39] sm:$0xff]
      %v531 = vld [vmem:[%s492 + $0x41] sm:$0x3]
      %v532 = vld [vmem:[%s492 + $0x49] sm:$0xff]
      %v533 = vld [vmem:[%s492 + $0x51] sm:$0xff]
      %v534 = vld [vmem:[%s492 + $0x59] sm:$0x3]
      %v535 = vld [vmem:[%s492 + $0x61] sm:$0xff]
      %v536 = vld [vmem:[%s492 + $0x69] sm:$0xff]
      %v537 = vld [vmem:[%s492 + $0x71] sm:$0x3]
      %v538 = vld [vmem:[%s492 + $0x79] sm:$0xff]
      %v539 = vld [vmem:[%s492 + $0x81] sm:$0xff]
      %v540 = vld [vmem:[%s492 + $0x89] sm:$0x3]
      %v541 = vld [vmem:[%s492 + $0x91] sm:$0xff]
      %v542 = vld [vmem:[%s492 + $0x99] sm:$0xff]
      %v543 = vld [vmem:[%s492 + $0xa1] sm:$0x3]
      %v544 = vld [vmem:[%s492 + $0xa9] sm:$0xff]
      %v545 = vld [vmem:[%s492 + $0xb1] sm:$0xff]
      %v546 = vld [vmem:[%s492 + $0xb9] sm:$0x3]
      %v547 = vld [vmem:[%s492 + $0xc1] sm:$0xff]
      %v548 = vld [vmem:[%s492 + $0xc9] sm:$0xff]
      %v549 = vld [vmem:[%s492 + $0xd1] sm:$0x3]
      %v550 = vld [vmem:[%s492 + $0xd9] sm:$0xff]
      %v551 = vld [vmem:[%s492 + $0xe1] sm:$0xff]
      %v552 = vld [vmem:[%s492 + $0xe9] sm:$0x3]
      %v553 = vld [vmem:[%s492 + $0x2] sm:$0xff]
      %v554 = vld [vmem:[%s492 + $0xa] sm:$0xff]
      %v555 = vld [vmem:[%s492 + $0x12] sm:$0x3]
      %v556 = vld [vmem:[%s492 + $0x1a] sm:$0xff]
      %v557 = vld [vmem:[%s492 + $0x22] sm:$0xff]
      %v558 = vld [vmem:[%s492 + $0x2a] sm:$0x3]
      %v559 = vld [vmem:[%s492 + $0x32] sm:$0xff]
      %v560 = vld [vmem:[%s492 + $0x3a] sm:$0xff]
      %v561 = vld [vmem:[%s492 + $0x42] sm:$0x3]
      %v562 = vld [vmem:[%s492 + $0x4a] sm:$0xff]
      %v563 = vld [vmem:[%s492 + $0x52] sm:$0xff]
      %v564 = vld [vmem:[%s492 + $0x5a] sm:$0x3]
      %v565 = vld [vmem:[%s492 + $0x62] sm:$0xff]
      %v566 = vld [vmem:[%s492 + $0x6a] sm:$0xff]
      %v567 = vld [vmem:[%s492 + $0x72] sm:$0x3]
      %v568 = vld [vmem:[%s492 + $0x7a] sm:$0xff]
      %v569 = vld [vmem:[%s492 + $0x82] sm:$0xff]
      %v570 = vld [vmem:[%s492 + $0x8a] sm:$0x3]
      %v571 = vld [vmem:[%s492 + $0x92] sm:$0xff]
      %v572 = vld [vmem:[%s492 + $0x9a] sm:$0xff]
      %v573 = vld [vmem:[%s492 + $0xa2] sm:$0x3]
      %v574 = vld [vmem:[%s492 + $0xaa] sm:$0xff]
      %v575 = vld [vmem:[%s492 + $0xb2] sm:$0xff]
      %v576 = vld [vmem:[%s492 + $0xba] sm:$0x3]
      %v577 = vld [vmem:[%s492 + $0xc2] sm:$0xff]
      %v578 = vld [vmem:[%s492 + $0xca] sm:$0xff]
      %v579 = vld [vmem:[%s492 + $0xd2] sm:$0x3]
      %v580 = vld [vmem:[%s492 + $0xda] sm:$0xff]
      %v581 = vld [vmem:[%s492 + $0xe2] sm:$0xff]
      %v582 = vld [vmem:[%s492 + $0xea] sm:$0x3]
      %613 = vrot.lane.b32.xlu0 %v337, 4
      %v614 = vpop.permute.xlu0 %613
      %615 = vrot.lane.b32.xlu0 %v338, 4
      %v616 = vpop.permute.xlu0 %615
      %617 = vrot.lane.b32.xlu0 %v339, 4
      %v618 = vpop.permute.xlu0 %617
      %619 = vrot.lane.b32.xlu0 %v340, 4
      %v620 = vpop.permute.xlu0 %619
      %621 = vrot.lane.b32.xlu0 %v341, 4
      %v622 = vpop.permute.xlu0 %621
      %623 = vrot.lane.b32.xlu0 %v342, 4
      %v624 = vpop.permute.xlu0 %623
      %625 = vrot.lane.b32.xlu0 %v343, 4
      %v626 = vpop.permute.xlu0 %625
      %627 = vrot.lane.b32.xlu0 %v344, 4
      %v628 = vpop.permute.xlu0 %627
      %629 = vrot.lane.b32.xlu0 %v345, 4
      %v630 = vpop.permute.xlu0 %629
      %631 = vrot.lane.b32.xlu0 %v346, 4
      %v632 = vpop.permute.xlu0 %631
      %633 = vrot.lane.b32.xlu0 %v347, 4
      %v634 = vpop.permute.xlu0 %633
      %635 = vrot.lane.b32.xlu0 %v348, 4
      %v636 = vpop.permute.xlu0 %635
      %637 = vrot.lane.b32.xlu0 %v349, 4
      %v638 = vpop.permute.xlu0 %637
      %639 = vrot.lane.b32.xlu0 %v350, 4
      %v640 = vpop.permute.xlu0 %639
      %641 = vrot.lane.b32.xlu0 %v351, 4
      %v642 = vpop.permute.xlu0 %641
      %643 = vrot.lane.b32.xlu0 %v352, 4
      %v644 = vpop.permute.xlu0 %643
      %645 = vrot.lane.b32.xlu0 %v353, 4
      %v646 = vpop.permute.xlu0 %645
      %647 = vrot.lane.b32.xlu0 %v354, 4
      %v648 = vpop.permute.xlu0 %647
      %649 = vrot.lane.b32.xlu0 %v355, 4
      %v650 = vpop.permute.xlu0 %649
      %651 = vrot.lane.b32.xlu0 %v356, 4
      %v652 = vpop.permute.xlu0 %651
      %653 = vrot.lane.b32.xlu0 %v357, 4
      %v654 = vpop.permute.xlu0 %653
      %655 = vrot.lane.b32.xlu0 %v358, 4
      %v656 = vpop.permute.xlu0 %655
      %657 = vrot.lane.b32.xlu0 %v359, 4
      %v658 = vpop.permute.xlu0 %657
      %659 = vrot.lane.b32.xlu0 %v360, 4
      %v660 = vpop.permute.xlu0 %659
      %661 = vrot.lane.b32.xlu0 %v361, 4
      %v662 = vpop.permute.xlu0 %661
      %663 = vrot.lane.b32.xlu0 %v362, 4
      %v664 = vpop.permute.xlu0 %663
      %665 = vrot.lane.b32.xlu0 %v363, 4
      %v666 = vpop.permute.xlu0 %665
      %667 = vrot.lane.b32.xlu0 %v364, 4
      %v668 = vpop.permute.xlu0 %667
      %669 = vrot.lane.b32.xlu0 %v365, 4
      %v670 = vpop.permute.xlu0 %669
      %671 = vrot.lane.b32.xlu0 %v366, 4
      %v672 = vpop.permute.xlu0 %671
      %733 = vrot.lane.b32.xlu0 %v367, 8
      %v734 = vpop.permute.xlu0 %733
      %735 = vrot.lane.b32.xlu0 %v368, 8
      %v736 = vpop.permute.xlu0 %735
      %737 = vrot.lane.b32.xlu0 %v369, 8
      %v738 = vpop.permute.xlu0 %737
      %739 = vrot.lane.b32.xlu0 %v370, 8
      %v740 = vpop.permute.xlu0 %739
      %741 = vrot.lane.b32.xlu0 %v371, 8
      %v742 = vpop.permute.xlu0 %741
      %743 = vrot.lane.b32.xlu0 %v372, 8
      %v744 = vpop.permute.xlu0 %743
      %745 = vrot.lane.b32.xlu0 %v373, 8
      %v746 = vpop.permute.xlu0 %745
      %747 = vrot.lane.b32.xlu0 %v374, 8
      %v748 = vpop.permute.xlu0 %747
      %749 = vrot.lane.b32.xlu0 %v375, 8
      %v750 = vpop.permute.xlu0 %749
      %751 = vrot.lane.b32.xlu0 %v376, 8
      %v752 = vpop.permute.xlu0 %751
      %753 = vrot.lane.b32.xlu0 %v377, 8
      %v754 = vpop.permute.xlu0 %753
      %755 = vrot.lane.b32.xlu0 %v378, 8
      %v756 = vpop.permute.xlu0 %755
      %757 = vrot.lane.b32.xlu0 %v379, 8
      %v758 = vpop.permute.xlu0 %757
      %759 = vrot.lane.b32.xlu0 %v380, 8
      %v760 = vpop.permute.xlu0 %759
      %761 = vrot.lane.b32.xlu0 %v381, 8
      %v762 = vpop.permute.xlu0 %761
      %763 = vrot.lane.b32.xlu0 %v382, 8
      %v764 = vpop.permute.xlu0 %763
      %765 = vrot.lane.b32.xlu0 %v383, 8
      %v766 = vpop.permute.xlu0 %765
      %767 = vrot.lane.b32.xlu0 %v384, 8
      %v768 = vpop.permute.xlu0 %767
      %769 = vrot.lane.b32.xlu0 %v385, 8
      %v770 = vpop.permute.xlu0 %769
      %771 = vrot.lane.b32.xlu0 %v386, 8
      %v772 = vpop.permute.xlu0 %771
      %773 = vrot.lane.b32.xlu0 %v387, 8
      %v774 = vpop.permute.xlu0 %773
      %775 = vrot.lane.b32.xlu0 %v388, 8
      %v776 = vpop.permute.xlu0 %775
      %777 = vrot.lane.b32.xlu0 %v389, 8
      %v778 = vpop.permute.xlu0 %777
      %779 = vrot.lane.b32.xlu0 %v390, 8
      %v780 = vpop.permute.xlu0 %779
      %781 = vrot.lane.b32.xlu0 %v391, 8
      %v782 = vpop.permute.xlu0 %781
      %783 = vrot.lane.b32.xlu0 %v392, 8
      %v784 = vpop.permute.xlu0 %783
      %785 = vrot.lane.b32.xlu0 %v393, 8
      %v786 = vpop.permute.xlu0 %785
      %787 = vrot.lane.b32.xlu0 %v394, 8
      %v788 = vpop.permute.xlu0 %787
      %789 = vrot.lane.b32.xlu0 %v395, 8
      %v790 = vpop.permute.xlu0 %789
      %791 = vrot.lane.b32.xlu0 %v396, 8
      %v792 = vpop.permute.xlu0 %791
      %853 = vrot.lane.b32.xlu0 %v400, 12
      %v854 = vpop.permute.xlu0 %853
      %855 = vrot.lane.b32.xlu0 %v401, 12
      %v856 = vpop.permute.xlu0 %855
      %857 = vrot.lane.b32.xlu0 %v402, 12
      %v858 = vpop.permute.xlu0 %857
      %859 = vrot.lane.b32.xlu0 %v403, 12
      %v860 = vpop.permute.xlu0 %859
      %861 = vrot.lane.b32.xlu0 %v404, 12
      %v862 = vpop.permute.xlu0 %861
      %863 = vrot.lane.b32.xlu0 %v405, 12
      %v864 = vpop.permute.xlu0 %863
      %865 = vrot.lane.b32.xlu0 %v406, 12
      %v866 = vpop.permute.xlu0 %865
      %867 = vrot.lane.b32.xlu0 %v407, 12
      %v868 = vpop.permute.xlu0 %867
      %869 = vrot.lane.b32.xlu0 %v408, 12
      %v870 = vpop.permute.xlu0 %869
      %871 = vrot.lane.b32.xlu0 %v409, 12
      %v872 = vpop.permute.xlu0 %871
      %873 = vrot.lane.b32.xlu0 %v410, 12
      %v874 = vpop.permute.xlu0 %873
      %875 = vrot.lane.b32.xlu0 %v411, 12
      %v876 = vpop.permute.xlu0 %875
      %877 = vrot.lane.b32.xlu0 %v412, 12
      %v878 = vpop.permute.xlu0 %877
      %879 = vrot.lane.b32.xlu0 %v413, 12
      %v880 = vpop.permute.xlu0 %879
      %881 = vrot.lane.b32.xlu0 %v414, 12
      %v882 = vpop.permute.xlu0 %881
      %883 = vrot.lane.b32.xlu0 %v415, 12
      %v884 = vpop.permute.xlu0 %883
      %885 = vrot.lane.b32.xlu0 %v416, 12
      %v886 = vpop.permute.xlu0 %885
      %887 = vrot.lane.b32.xlu0 %v417, 12
      %v888 = vpop.permute.xlu0 %887
      %889 = vrot.lane.b32.xlu0 %v418, 12
      %v890 = vpop.permute.xlu0 %889
      %891 = vrot.lane.b32.xlu0 %v419, 12
      %v892 = vpop.permute.xlu0 %891
      %893 = vrot.lane.b32.xlu0 %v420, 12
      %v894 = vpop.permute.xlu0 %893
      %895 = vrot.lane.b32.xlu0 %v421, 12
      %v896 = vpop.permute.xlu0 %895
      %897 = vrot.lane.b32.xlu0 %v422, 12
      %v898 = vpop.permute.xlu0 %897
      %899 = vrot.lane.b32.xlu0 %v423, 12
      %v900 = vpop.permute.xlu0 %899
      %901 = vrot.lane.b32.xlu0 %v424, 12
      %v902 = vpop.permute.xlu0 %901
      %903 = vrot.lane.b32.xlu0 %v425, 12
      %v904 = vpop.permute.xlu0 %903
      %905 = vrot.lane.b32.xlu0 %v426, 12
      %v906 = vpop.permute.xlu0 %905
      %907 = vrot.lane.b32.xlu0 %v427, 12
      %v908 = vpop.permute.xlu0 %907
      %909 = vrot.lane.b32.xlu0 %v428, 12
      %v910 = vpop.permute.xlu0 %909
      %911 = vrot.lane.b32.xlu0 %v429, 12
      %v912 = vpop.permute.xlu0 %911
      %973 = vrot.lane.b32.xlu0 %v430, 16
      %v974 = vpop.permute.xlu0 %973
      %975 = vrot.lane.b32.xlu0 %v431, 16
      %v976 = vpop.permute.xlu0 %975
      %977 = vrot.lane.b32.xlu0 %v432, 16
      %v978 = vpop.permute.xlu0 %977
      %979 = vrot.lane.b32.xlu0 %v433, 16
      %v980 = vpop.permute.xlu0 %979
      %981 = vrot.lane.b32.xlu0 %v434, 16
      %v982 = vpop.permute.xlu0 %981
      %983 = vrot.lane.b32.xlu0 %v435, 16
      %v984 = vpop.permute.xlu0 %983
      %985 = vrot.lane.b32.xlu0 %v436, 16
      %v986 = vpop.permute.xlu0 %985
      %987 = vrot.lane.b32.xlu0 %v437, 16
      %v988 = vpop.permute.xlu0 %987
      %989 = vrot.lane.b32.xlu0 %v438, 16
      %v990 = vpop.permute.xlu0 %989
      %991 = vrot.lane.b32.xlu0 %v439, 16
      %v992 = vpop.permute.xlu0 %991
      %993 = vrot.lane.b32.xlu0 %v440, 16
      %v994 = vpop.permute.xlu0 %993
      %995 = vrot.lane.b32.xlu0 %v441, 16
      %v996 = vpop.permute.xlu0 %995
      %997 = vrot.lane.b32.xlu0 %v442, 16
      %v998 = vpop.permute.xlu0 %997
      %999 = vrot.lane.b32.xlu0 %v443, 16
      %v1000 = vpop.permute.xlu0 %999
      %1001 = vrot.lane.b32.xlu0 %v444, 16
      %v1002 = vpop.permute.xlu0 %1001
      %1003 = vrot.lane.b32.xlu0 %v445, 16
      %v1004 = vpop.permute.xlu0 %1003
      %1005 = vrot.lane.b32.xlu0 %v446, 16
      %v1006 = vpop.permute.xlu0 %1005
      %1007 = vrot.lane.b32.xlu0 %v447, 16
      %v1008 = vpop.permute.xlu0 %1007
      %1009 = vrot.lane.b32.xlu0 %v448, 16
      %v1010 = vpop.permute.xlu0 %1009
      %1011 = vrot.lane.b32.xlu0 %v449, 16
      %v1012 = vpop.permute.xlu0 %1011
      %1013 = vrot.lane.b32.xlu0 %v450, 16
      %v1014 = vpop.permute.xlu0 %1013
      %1015 = vrot.lane.b32.xlu0 %v451, 16
      %v1016 = vpop.permute.xlu0 %1015
      %1017 = vrot.lane.b32.xlu0 %v452, 16
      %v1018 = vpop.permute.xlu0 %1017
      %1019 = vrot.lane.b32.xlu0 %v453, 16
      %v1020 = vpop.permute.xlu0 %1019
      %1021 = vrot.lane.b32.xlu0 %v454, 16
      %v1022 = vpop.permute.xlu0 %1021
      %1023 = vrot.lane.b32.xlu0 %v455, 16
      %v1024 = vpop.permute.xlu0 %1023
      %1025 = vrot.lane.b32.xlu0 %v456, 16
      %v1026 = vpop.permute.xlu0 %1025
      %1027 = vrot.lane.b32.xlu0 %v457, 16
      %v1028 = vpop.permute.xlu0 %1027
      %1029 = vrot.lane.b32.xlu0 %v458, 16
      %v1030 = vpop.permute.xlu0 %1029
      %1031 = vrot.lane.b32.xlu0 %v459, 16
      %v1032 = vpop.permute.xlu0 %1031
      %1093 = vrot.lane.b32.xlu0 %v460, 20
      %v1094 = vpop.permute.xlu0 %1093
      %1095 = vrot.lane.b32.xlu0 %v461, 20
      %v1096 = vpop.permute.xlu0 %1095
      %1097 = vrot.lane.b32.xlu0 %v462, 20
      %v1098 = vpop.permute.xlu0 %1097
      %1099 = vrot.lane.b32.xlu0 %v463, 20
      %v1100 = vpop.permute.xlu0 %1099
      %1101 = vrot.lane.b32.xlu0 %v464, 20
      %v1102 = vpop.permute.xlu0 %1101
      %1103 = vrot.lane.b32.xlu0 %v465, 20
      %v1104 = vpop.permute.xlu0 %1103
      %1105 = vrot.lane.b32.xlu0 %v466, 20
      %v1106 = vpop.permute.xlu0 %1105
      %1107 = vrot.lane.b32.xlu0 %v467, 20
      %v1108 = vpop.permute.xlu0 %1107
      %1109 = vrot.lane.b32.xlu0 %v468, 20
      %v1110 = vpop.permute.xlu0 %1109
      %1111 = vrot.lane.b32.xlu0 %v469, 20
      %v1112 = vpop.permute.xlu0 %1111
      %1113 = vrot.lane.b32.xlu0 %v470, 20
      %v1114 = vpop.permute.xlu0 %1113
      %1115 = vrot.lane.b32.xlu0 %v471, 20
      %v1116 = vpop.permute.xlu0 %1115
      %1117 = vrot.lane.b32.xlu0 %v472, 20
      %v1118 = vpop.permute.xlu0 %1117
      %1119 = vrot.lane.b32.xlu0 %v473, 20
      %v1120 = vpop.permute.xlu0 %1119
      %1121 = vrot.lane.b32.xlu0 %v474, 20
      %v1122 = vpop.permute.xlu0 %1121
      %1123 = vrot.lane.b32.xlu0 %v475, 20
      %v1124 = vpop.permute.xlu0 %1123
      %1125 = vrot.lane.b32.xlu0 %v476, 20
      %v1126 = vpop.permute.xlu0 %1125
      %1127 = vrot.lane.b32.xlu0 %v477, 20
      %v1128 = vpop.permute.xlu0 %1127
      %1129 = vrot.lane.b32.xlu0 %v478, 20
      %v1130 = vpop.permute.xlu0 %1129
      %1131 = vrot.lane.b32.xlu0 %v479, 20
      %v1132 = vpop.permute.xlu0 %1131
      %1133 = vrot.lane.b32.xlu0 %v480, 20
      %v1134 = vpop.permute.xlu0 %1133
      %1135 = vrot.lane.b32.xlu0 %v481, 20
      %v1136 = vpop.permute.xlu0 %1135
      %1137 = vrot.lane.b32.xlu0 %v482, 20
      %v1138 = vpop.permute.xlu0 %1137
      %1139 = vrot.lane.b32.xlu0 %v483, 20
      %v1140 = vpop.permute.xlu0 %1139
      %1141 = vrot.lane.b32.xlu0 %v484, 20
      %v1142 = vpop.permute.xlu0 %1141
      %1143 = vrot.lane.b32.xlu0 %v485, 20
      %v1144 = vpop.permute.xlu0 %1143
      %1145 = vrot.lane.b32.xlu0 %v486, 20
      %v1146 = vpop.permute.xlu0 %1145
      %1147 = vrot.lane.b32.xlu0 %v487, 20
      %v1148 = vpop.permute.xlu0 %1147
      %1149 = vrot.lane.b32.xlu0 %v488, 20
      %v1150 = vpop.permute.xlu0 %1149
      %1151 = vrot.lane.b32.xlu0 %v489, 20
      %v1152 = vpop.permute.xlu0 %1151
      %1213 = vrot.lane.b32.xlu0 %v493, 24
      %v1214 = vpop.permute.xlu0 %1213
      %1215 = vrot.lane.b32.xlu0 %v494, 24
      %v1216 = vpop.permute.xlu0 %1215
      %1217 = vrot.lane.b32.xlu0 %v495, 24
      %v1218 = vpop.permute.xlu0 %1217
      %1219 = vrot.lane.b32.xlu0 %v496, 24
      %v1220 = vpop.permute.xlu0 %1219
      %1221 = vrot.lane.b32.xlu0 %v497, 24
      %v1222 = vpop.permute.xlu0 %1221
      %1223 = vrot.lane.b32.xlu0 %v498, 24
      %v1224 = vpop.permute.xlu0 %1223
      %1225 = vrot.lane.b32.xlu0 %v499, 24
      %v1226 = vpop.permute.xlu0 %1225
      %1227 = vrot.lane.b32.xlu0 %v500, 24
      %v1228 = vpop.permute.xlu0 %1227
      %1229 = vrot.lane.b32.xlu0 %v501, 24
      %v1230 = vpop.permute.xlu0 %1229
      %1231 = vrot.lane.b32.xlu0 %v502, 24
      %v1232 = vpop.permute.xlu0 %1231
      %1233 = vrot.lane.b32.xlu0 %v503, 24
      %v1234 = vpop.permute.xlu0 %1233
      %1235 = vrot.lane.b32.xlu0 %v504, 24
      %v1236 = vpop.permute.xlu0 %1235
      %1237 = vrot.lane.b32.xlu0 %v505, 24
      %v1238 = vpop.permute.xlu0 %1237
      %1239 = vrot.lane.b32.xlu0 %v506, 24
      %v1240 = vpop.permute.xlu0 %1239
      %1241 = vrot.lane.b32.xlu0 %v507, 24
      %v1242 = vpop.permute.xlu0 %1241
      %1243 = vrot.lane.b32.xlu0 %v508, 24
      %v1244 = vpop.permute.xlu0 %1243
      %1245 = vrot.lane.b32.xlu0 %v509, 24
      %v1246 = vpop.permute.xlu0 %1245
      %1247 = vrot.lane.b32.xlu0 %v510, 24
      %v1248 = vpop.permute.xlu0 %1247
      %1249 = vrot.lane.b32.xlu0 %v511, 24
      %v1250 = vpop.permute.xlu0 %1249
      %1251 = vrot.lane.b32.xlu0 %v512, 24
      %v1252 = vpop.permute.xlu0 %1251
      %1253 = vrot.lane.b32.xlu0 %v513, 24
      %v1254 = vpop.permute.xlu0 %1253
      %1255 = vrot.lane.b32.xlu0 %v514, 24
      %v1256 = vpop.permute.xlu0 %1255
      %1257 = vrot.lane.b32.xlu0 %v515, 24
      %v1258 = vpop.permute.xlu0 %1257
      %1259 = vrot.lane.b32.xlu0 %v516, 24
      %v1260 = vpop.permute.xlu0 %1259
      %1261 = vrot.lane.b32.xlu0 %v517, 24
      %v1262 = vpop.permute.xlu0 %1261
      %1263 = vrot.lane.b32.xlu0 %v518, 24
      %v1264 = vpop.permute.xlu0 %1263
      %1265 = vrot.lane.b32.xlu0 %v519, 24
      %v1266 = vpop.permute.xlu0 %1265
      %1267 = vrot.lane.b32.xlu0 %v520, 24
      %v1268 = vpop.permute.xlu0 %1267
      %1269 = vrot.lane.b32.xlu0 %v521, 24
      %v1270 = vpop.permute.xlu0 %1269
      %1271 = vrot.lane.b32.xlu0 %v522, 24
      %v1272 = vpop.permute.xlu0 %1271
      %1333 = vrot.lane.b32.xlu0 %v523, 28
      %v1334 = vpop.permute.xlu0 %1333
      %1335 = vrot.lane.b32.xlu0 %v524, 28
      %v1336 = vpop.permute.xlu0 %1335
      %1337 = vrot.lane.b32.xlu0 %v525, 28
      %v1338 = vpop.permute.xlu0 %1337
      %1339 = vrot.lane.b32.xlu0 %v526, 28
      %v1340 = vpop.permute.xlu0 %1339
      %1341 = vrot.lane.b32.xlu0 %v527, 28
      %v1342 = vpop.permute.xlu0 %1341
      %1343 = vrot.lane.b32.xlu0 %v528, 28
      %v1344 = vpop.permute.xlu0 %1343
      %1345 = vrot.lane.b32.xlu0 %v529, 28
      %v1346 = vpop.permute.xlu0 %1345
      %1347 = vrot.lane.b32.xlu0 %v530, 28
      %v1348 = vpop.permute.xlu0 %1347
      %1349 = vrot.lane.b32.xlu0 %v531, 28
      %v1350 = vpop.permute.xlu0 %1349
      %1351 = vrot.lane.b32.xlu0 %v532, 28
      %v1352 = vpop.permute.xlu0 %1351
      %1353 = vrot.lane.b32.xlu0 %v533, 28
      %v1354 = vpop.permute.xlu0 %1353
      %1355 = vrot.lane.b32.xlu0 %v534, 28
      %v1356 = vpop.permute.xlu0 %1355
      %1357 = vrot.lane.b32.xlu0 %v535, 28
      %v1358 = vpop.permute.xlu0 %1357
      %1359 = vrot.lane.b32.xlu0 %v536, 28
      %v1360 = vpop.permute.xlu0 %1359
      %1361 = vrot.lane.b32.xlu0 %v537, 28
      %v1362 = vpop.permute.xlu0 %1361
      %1363 = vrot.lane.b32.xlu0 %v538, 28
      %v1364 = vpop.permute.xlu0 %1363
      %1365 = vrot.lane.b32.xlu0 %v539, 28
      %v1366 = vpop.permute.xlu0 %1365
      %1367 = vrot.lane.b32.xlu0 %v540, 28
      %v1368 = vpop.permute.xlu0 %1367
      %1369 = vrot.lane.b32.xlu0 %v541, 28
      %v1370 = vpop.permute.xlu0 %1369
      %1371 = vrot.lane.b32.xlu0 %v542, 28
      %v1372 = vpop.permute.xlu0 %1371
      %1373 = vrot.lane.b32.xlu0 %v543, 28
      %v1374 = vpop.permute.xlu0 %1373
      %1375 = vrot.lane.b32.xlu0 %v544, 28
      %v1376 = vpop.permute.xlu0 %1375
      %1377 = vrot.lane.b32.xlu0 %v545, 28
      %v1378 = vpop.permute.xlu0 %1377
      %1379 = vrot.lane.b32.xlu0 %v546, 28
      %v1380 = vpop.permute.xlu0 %1379
      %1381 = vrot.lane.b32.xlu0 %v547, 28
      %v1382 = vpop.permute.xlu0 %1381
      %1383 = vrot.lane.b32.xlu0 %v548, 28
      %v1384 = vpop.permute.xlu0 %1383
      %1385 = vrot.lane.b32.xlu0 %v549, 28
      %v1386 = vpop.permute.xlu0 %1385
      %1387 = vrot.lane.b32.xlu0 %v550, 28
      %v1388 = vpop.permute.xlu0 %1387
      %1389 = vrot.lane.b32.xlu0 %v551, 28
      %v1390 = vpop.permute.xlu0 %1389
      %1391 = vrot.lane.b32.xlu0 %v552, 28
      %v1392 = vpop.permute.xlu0 %1391
      %1453 = vrot.lane.b32.xlu0 %v553, 32
      %v1454 = vpop.permute.xlu0 %1453
      %1455 = vrot.lane.b32.xlu0 %v554, 32
      %v1456 = vpop.permute.xlu0 %1455
      %1457 = vrot.lane.b32.xlu0 %v555, 32
      %v1458 = vpop.permute.xlu0 %1457
      %1459 = vrot.lane.b32.xlu0 %v556, 32
      %v1460 = vpop.permute.xlu0 %1459
      %1461 = vrot.lane.b32.xlu0 %v557, 32
      %v1462 = vpop.permute.xlu0 %1461
      %1463 = vrot.lane.b32.xlu0 %v558, 32
      %v1464 = vpop.permute.xlu0 %1463
      %1465 = vrot.lane.b32.xlu0 %v559, 32
      %v1466 = vpop.permute.xlu0 %1465
      %1467 = vrot.lane.b32.xlu0 %v560, 32
      %v1468 = vpop.permute.xlu0 %1467
      %1469 = vrot.lane.b32.xlu0 %v561, 32
      %v1470 = vpop.permute.xlu0 %1469
      %1471 = vrot.lane.b32.xlu0 %v562, 32
      %v1472 = vpop.permute.xlu0 %1471
      %1473 = vrot.lane.b32.xlu0 %v563, 32
      %v1474 = vpop.permute.xlu0 %1473
      %1475 = vrot.lane.b32.xlu0 %v564, 32
      %v1476 = vpop.permute.xlu0 %1475
      %1477 = vrot.lane.b32.xlu0 %v565, 32
      %v1478 = vpop.permute.xlu0 %1477
      %1479 = vrot.lane.b32.xlu0 %v566, 32
      %v1480 = vpop.permute.xlu0 %1479
      %1481 = vrot.lane.b32.xlu0 %v567, 32
      %v1482 = vpop.permute.xlu0 %1481
      %1483 = vrot.lane.b32.xlu0 %v568, 32
      %v1484 = vpop.permute.xlu0 %1483
      %1485 = vrot.lane.b32.xlu0 %v569, 32
      %v1486 = vpop.permute.xlu0 %1485
      %1487 = vrot.lane.b32.xlu0 %v570, 32
      %v1488 = vpop.permute.xlu0 %1487
      %1489 = vrot.lane.b32.xlu0 %v571, 32
      %v1490 = vpop.permute.xlu0 %1489
      %1491 = vrot.lane.b32.xlu0 %v572, 32
      %v1492 = vpop.permute.xlu0 %1491
      %1493 = vrot.lane.b32.xlu0 %v573, 32
      %v1494 = vpop.permute.xlu0 %1493
      %1495 = vrot.lane.b32.xlu0 %v574, 32
      %v1496 = vpop.permute.xlu0 %1495
      %1497 = vrot.lane.b32.xlu0 %v575, 32
      %v1498 = vpop.permute.xlu0 %1497
      %1499 = vrot.lane.b32.xlu0 %v576, 32
      %v1500 = vpop.permute.xlu0 %1499
      %1501 = vrot.lane.b32.xlu0 %v577, 32
      %v1502 = vpop.permute.xlu0 %1501
      %1503 = vrot.lane.b32.xlu0 %v578, 32
      %v1504 = vpop.permute.xlu0 %1503
      %1505 = vrot.lane.b32.xlu0 %v579, 32
      %v1506 = vpop.permute.xlu0 %1505
      %1507 = vrot.lane.b32.xlu0 %v580, 32
      %v1508 = vpop.permute.xlu0 %1507
      %1509 = vrot.lane.b32.xlu0 %v581, 32
      %v1510 = vpop.permute.xlu0 %1509
      %1511 = vrot.lane.b32.xlu0 %v582, 32
      %v1512 = vpop.permute.xlu0 %1511
      %vm1543 = vcmask 31744
      %v1544 = vsel %vm1543, %v307, %v614
      %v1545 = vsel %vm1543, %v308, %v616
      %v1546 = vsel %vm1543, %v309, %v618
      %v1547 = vsel %vm1543, %v310, %v620
      %v1548 = vsel %vm1543, %v311, %v622
      %v1549 = vsel %vm1543, %v312, %v624
      %v1550 = vsel %vm1543, %v313, %v626
      %v1551 = vsel %vm1543, %v314, %v628
      %v1552 = vsel %vm1543, %v315, %v630
      %v1553 = vsel %vm1543, %v316, %v632
      %v1554 = vsel %vm1543, %v317, %v634
      %v1555 = vsel %vm1543, %v318, %v636
      %v1556 = vsel %vm1543, %v319, %v638
      %v1557 = vsel %vm1543, %v320, %v640
      %v1558 = vsel %vm1543, %v321, %v642
      %v1559 = vsel %vm1543, %v322, %v644
      %v1560 = vsel %vm1543, %v323, %v646
      %v1561 = vsel %vm1543, %v324, %v648
      %v1562 = vsel %vm1543, %v325, %v650
      %v1563 = vsel %vm1543, %v326, %v652
      %v1564 = vsel %vm1543, %v327, %v654
      %v1565 = vsel %vm1543, %v328, %v656
      %v1566 = vsel %vm1543, %v329, %v658
      %v1567 = vsel %vm1543, %v330, %v660
      %v1568 = vsel %vm1543, %v331, %v662
      %v1569 = vsel %vm1543, %v332, %v664
      %v1570 = vsel %vm1543, %v333, %v666
      %v1571 = vsel %vm1543, %v334, %v668
      %v1572 = vsel %vm1543, %v335, %v670
      %v1573 = vsel %vm1543, %v336, %v672
      %vm1574 = vcmask 64512
      %v1575 = vsel %vm1574, %v1544, %v734
      %v1576 = vsel %vm1574, %v1545, %v736
      %v1577 = vsel %vm1574, %v1546, %v738
      %v1578 = vsel %vm1574, %v1547, %v740
      %v1579 = vsel %vm1574, %v1548, %v742
      %v1580 = vsel %vm1574, %v1549, %v744
      %v1581 = vsel %vm1574, %v1550, %v746
      %v1582 = vsel %vm1574, %v1551, %v748
      %v1583 = vsel %vm1574, %v1552, %v750
      %v1584 = vsel %vm1574, %v1553, %v752
      %v1585 = vsel %vm1574, %v1554, %v754
      %v1586 = vsel %vm1574, %v1555, %v756
      %v1587 = vsel %vm1574, %v1556, %v758
      %v1588 = vsel %vm1574, %v1557, %v760
      %v1589 = vsel %vm1574, %v1558, %v762
      %v1590 = vsel %vm1574, %v1559, %v764
      %v1591 = vsel %vm1574, %v1560, %v766
      %v1592 = vsel %vm1574, %v1561, %v768
      %v1593 = vsel %vm1574, %v1562, %v770
      %v1594 = vsel %vm1574, %v1563, %v772
      %v1595 = vsel %vm1574, %v1564, %v774
      %v1596 = vsel %vm1574, %v1565, %v776
      %v1597 = vsel %vm1574, %v1566, %v778
      %v1598 = vsel %vm1574, %v1567, %v780
      %v1599 = vsel %vm1574, %v1568, %v782
      %v1600 = vsel %vm1574, %v1569, %v784
      %v1601 = vsel %vm1574, %v1570, %v786
      %v1602 = vsel %vm1574, %v1571, %v788
      %v1603 = vsel %vm1574, %v1572, %v790
      %v1604 = vsel %vm1574, %v1573, %v792
      %vm1605 = vcmask 97280
      %v1606 = vsel %vm1605, %v1575, %v854
      %v1607 = vsel %vm1605, %v1576, %v856
      %v1608 = vsel %vm1605, %v1577, %v858
      %v1609 = vsel %vm1605, %v1578, %v860
      %v1610 = vsel %vm1605, %v1579, %v862
      %v1611 = vsel %vm1605, %v1580, %v864
      %v1612 = vsel %vm1605, %v1581, %v866
      %v1613 = vsel %vm1605, %v1582, %v868
      %v1614 = vsel %vm1605, %v1583, %v870
      %v1615 = vsel %vm1605, %v1584, %v872
      %v1616 = vsel %vm1605, %v1585, %v874
      %v1617 = vsel %vm1605, %v1586, %v876
      %v1618 = vsel %vm1605, %v1587, %v878
      %v1619 = vsel %vm1605, %v1588, %v880
      %v1620 = vsel %vm1605, %v1589, %v882
      %v1621 = vsel %vm1605, %v1590, %v884
      %v1622 = vsel %vm1605, %v1591, %v886
      %v1623 = vsel %vm1605, %v1592, %v888
      %v1624 = vsel %vm1605, %v1593, %v890
      %v1625 = vsel %vm1605, %v1594, %v892
      %v1626 = vsel %vm1605, %v1595, %v894
      %v1627 = vsel %vm1605, %v1596, %v896
      %v1628 = vsel %vm1605, %v1597, %v898
      %v1629 = vsel %vm1605, %v1598, %v900
      %v1630 = vsel %vm1605, %v1599, %v902
      %v1631 = vsel %vm1605, %v1600, %v904
      %v1632 = vsel %vm1605, %v1601, %v906
      %v1633 = vsel %vm1605, %v1602, %v908
      %v1634 = vsel %vm1605, %v1603, %v910
      %v1635 = vsel %vm1605, %v1604, %v912
      %vm1636 = vcmask 130048
      %v1637 = vsel %vm1636, %v1606, %v974
      %v1638 = vsel %vm1636, %v1607, %v976
      %v1639 = vsel %vm1636, %v1608, %v978
      %v1640 = vsel %vm1636, %v1609, %v980
      %v1641 = vsel %vm1636, %v1610, %v982
      %v1642 = vsel %vm1636, %v1611, %v984
      %v1643 = vsel %vm1636, %v1612, %v986
      %v1644 = vsel %vm1636, %v1613, %v988
      %v1645 = vsel %vm1636, %v1614, %v990
      %v1646 = vsel %vm1636, %v1615, %v992
      %v1647 = vsel %vm1636, %v1616, %v994
      %v1648 = vsel %vm1636, %v1617, %v996
      %v1649 = vsel %vm1636, %v1618, %v998
      %v1650 = vsel %vm1636, %v1619, %v1000
      %v1651 = vsel %vm1636, %v1620, %v1002
      %v1652 = vsel %vm1636, %v1621, %v1004
      %v1653 = vsel %vm1636, %v1622, %v1006
      %v1654 = vsel %vm1636, %v1623, %v1008
      %v1655 = vsel %vm1636, %v1624, %v1010
      %v1656 = vsel %vm1636, %v1625, %v1012
      %v1657 = vsel %vm1636, %v1626, %v1014
      %v1658 = vsel %vm1636, %v1627, %v1016
      %v1659 = vsel %vm1636, %v1628, %v1018
      %v1660 = vsel %vm1636, %v1629, %v1020
      %v1661 = vsel %vm1636, %v1630, %v1022
      %v1662 = vsel %vm1636, %v1631, %v1024
      %v1663 = vsel %vm1636, %v1632, %v1026
      %v1664 = vsel %vm1636, %v1633, %v1028
      %v1665 = vsel %vm1636, %v1634, %v1030
      %v1666 = vsel %vm1636, %v1635, %v1032
      %vm1667 = vcmask 162816
      %v1668 = vsel %vm1667, %v1637, %v1094
      %v1669 = vsel %vm1667, %v1638, %v1096
      %v1670 = vsel %vm1667, %v1639, %v1098
      %v1671 = vsel %vm1667, %v1640, %v1100
      %v1672 = vsel %vm1667, %v1641, %v1102
      %v1673 = vsel %vm1667, %v1642, %v1104
      %v1674 = vsel %vm1667, %v1643, %v1106
      %v1675 = vsel %vm1667, %v1644, %v1108
      %v1676 = vsel %vm1667, %v1645, %v1110
      %v1677 = vsel %vm1667, %v1646, %v1112
      %v1678 = vsel %vm1667, %v1647, %v1114
      %v1679 = vsel %vm1667, %v1648, %v1116
      %v1680 = vsel %vm1667, %v1649, %v1118
      %v1681 = vsel %vm1667, %v1650, %v1120
      %v1682 = vsel %vm1667, %v1651, %v1122
      %v1683 = vsel %vm1667, %v1652, %v1124
      %v1684 = vsel %vm1667, %v1653, %v1126
      %v1685 = vsel %vm1667, %v1654, %v1128
      %v1686 = vsel %vm1667, %v1655, %v1130
      %v1687 = vsel %vm1667, %v1656, %v1132
      %v1688 = vsel %vm1667, %v1657, %v1134
      %v1689 = vsel %vm1667, %v1658, %v1136
      %v1690 = vsel %vm1667, %v1659, %v1138
      %v1691 = vsel %vm1667, %v1660, %v1140
      %v1692 = vsel %vm1667, %v1661, %v1142
      %v1693 = vsel %vm1667, %v1662, %v1144
      %v1694 = vsel %vm1667, %v1663, %v1146
      %v1695 = vsel %vm1667, %v1664, %v1148
      %v1696 = vsel %vm1667, %v1665, %v1150
      %v1697 = vsel %vm1667, %v1666, %v1152
      %vm1698 = vcmask 195584
      %v1699 = vsel %vm1698, %v1668, %v1214
      %v1700 = vsel %vm1698, %v1669, %v1216
      %v1701 = vsel %vm1698, %v1670, %v1218
      %v1702 = vsel %vm1698, %v1671, %v1220
      %v1703 = vsel %vm1698, %v1672, %v1222
      %v1704 = vsel %vm1698, %v1673, %v1224
      %v1705 = vsel %vm1698, %v1674, %v1226
      %v1706 = vsel %vm1698, %v1675, %v1228
      %v1707 = vsel %vm1698, %v1676, %v1230
      %v1708 = vsel %vm1698, %v1677, %v1232
      %v1709 = vsel %vm1698, %v1678, %v1234
      %v1710 = vsel %vm1698, %v1679, %v1236
      %v1711 = vsel %vm1698, %v1680, %v1238
      %v1712 = vsel %vm1698, %v1681, %v1240
      %v1713 = vsel %vm1698, %v1682, %v1242
      %v1714 = vsel %vm1698, %v1683, %v1244
      %v1715 = vsel %vm1698, %v1684, %v1246
      %v1716 = vsel %vm1698, %v1685, %v1248
      %v1717 = vsel %vm1698, %v1686, %v1250
      %v1718 = vsel %vm1698, %v1687, %v1252
      %v1719 = vsel %vm1698, %v1688, %v1254
      %v1720 = vsel %vm1698, %v1689, %v1256
      %v1721 = vsel %vm1698, %v1690, %v1258
      %v1722 = vsel %vm1698, %v1691, %v1260
      %v1723 = vsel %vm1698, %v1692, %v1262
      %v1724 = vsel %vm1698, %v1693, %v1264
      %v1725 = vsel %vm1698, %v1694, %v1266
      %v1726 = vsel %vm1698, %v1695, %v1268
      %v1727 = vsel %vm1698, %v1696, %v1270
      %v1728 = vsel %vm1698, %v1697, %v1272
      %vm1729 = vcmask 228352
      %v1730 = vsel %vm1729, %v1699, %v1334
      %v1731 = vsel %vm1729, %v1700, %v1336
      %v1732 = vsel %vm1729, %v1701, %v1338
      %v1733 = vsel %vm1729, %v1702, %v1340
      %v1734 = vsel %vm1729, %v1703, %v1342
      %v1735 = vsel %vm1729, %v1704, %v1344
      %v1736 = vsel %vm1729, %v1705, %v1346
      %v1737 = vsel %vm1729, %v1706, %v1348
      %v1738 = vsel %vm1729, %v1707, %v1350
      %v1739 = vsel %vm1729, %v1708, %v1352
      %v1740 = vsel %vm1729, %v1709, %v1354
      %v1741 = vsel %vm1729, %v1710, %v1356
      %v1742 = vsel %vm1729, %v1711, %v1358
      %v1743 = vsel %vm1729, %v1712, %v1360
      %v1744 = vsel %vm1729, %v1713, %v1362
      %v1745 = vsel %vm1729, %v1714, %v1364
      %v1746 = vsel %vm1729, %v1715, %v1366
      %v1747 = vsel %vm1729, %v1716, %v1368
      %v1748 = vsel %vm1729, %v1717, %v1370
      %v1749 = vsel %vm1729, %v1718, %v1372
      %v1750 = vsel %vm1729, %v1719, %v1374
      %v1751 = vsel %vm1729, %v1720, %v1376
      %v1752 = vsel %vm1729, %v1721, %v1378
      %v1753 = vsel %vm1729, %v1722, %v1380
      %v1754 = vsel %vm1729, %v1723, %v1382
      %v1755 = vsel %vm1729, %v1724, %v1384
      %v1756 = vsel %vm1729, %v1725, %v1386
      %v1757 = vsel %vm1729, %v1726, %v1388
      %v1758 = vsel %vm1729, %v1727, %v1390
      %v1759 = vsel %vm1729, %v1728, %v1392
      %vm1760 = vcmask 261120
      %v1761 = vsel %vm1760, %v1730, %v1454
      %v1762 = vsel %vm1760, %v1731, %v1456
      %v1763 = vsel %vm1760, %v1732, %v1458
      %v1764 = vsel %vm1760, %v1733, %v1460
      %v1765 = vsel %vm1760, %v1734, %v1462
      %v1766 = vsel %vm1760, %v1735, %v1464
      %v1767 = vsel %vm1760, %v1736, %v1466
      %v1768 = vsel %vm1760, %v1737, %v1468
      %v1769 = vsel %vm1760, %v1738, %v1470
      %v1770 = vsel %vm1760, %v1739, %v1472
      %v1771 = vsel %vm1760, %v1740, %v1474
      %v1772 = vsel %vm1760, %v1741, %v1476
      %v1773 = vsel %vm1760, %v1742, %v1478
      %v1774 = vsel %vm1760, %v1743, %v1480
      %v1775 = vsel %vm1760, %v1744, %v1482
      %v1776 = vsel %vm1760, %v1745, %v1484
      %v1777 = vsel %vm1760, %v1746, %v1486
      %v1778 = vsel %vm1760, %v1747, %v1488
      %v1779 = vsel %vm1760, %v1748, %v1490
      %v1780 = vsel %vm1760, %v1749, %v1492
      %v1781 = vsel %vm1760, %v1750, %v1494
      %v1782 = vsel %vm1760, %v1751, %v1496
      %v1783 = vsel %vm1760, %v1752, %v1498
      %v1784 = vsel %vm1760, %v1753, %v1500
      %v1785 = vsel %vm1760, %v1754, %v1502
      %v1786 = vsel %vm1760, %v1755, %v1504
      %v1787 = vsel %vm1760, %v1756, %v1506
      %v1788 = vsel %vm1760, %v1757, %v1508
      %v1789 = vsel %vm1760, %v1758, %v1510
      %v1790 = vsel %vm1760, %v1759, %v1512
      %v1821 = vcombine.high %v1761, %v1761
      %v1823 = vunpack.c.l.s4 1983009808
      %v1824 = vunpack.c.0.s8 %v1823
      %v1825 = vlaneseq
      %v1826 = vshrl.u32 %v1825, 7
      %v1827 = vsub.s32 %v1824, %v1826
      %v1828 = vrot.slane %v1761, %v1827
      %v1830 = vunpack.c.l.s4 1983009808
      %v1831 = vunpack.c.0.s8 %v1830
      %v1832 = vlaneseq
      %v1833 = vshrl.u32 %v1832, 7
      %v1834 = vsub.s32 %v1831, %v1833
      %v1835 = vrot.slane %v1821, %v1834
      %v1836 = vcombine.high %v1828, %v1828
      %v1837 = vcombine.high %v1835, %v1835
      %v1838 = vcombine.high %v1762, %v1762
      %v1840 = vunpack.c.l.s4 1983009808
      %v1841 = vunpack.c.0.s8 %v1840
      %v1842 = vlaneseq
      %v1843 = vshrl.u32 %v1842, 7
      %v1844 = vsub.s32 %v1841, %v1843
      %v1845 = vrot.slane %v1762, %v1844
      %v1847 = vunpack.c.l.s4 1983009808
      %v1848 = vunpack.c.0.s8 %v1847
      %v1849 = vlaneseq
      %v1850 = vshrl.u32 %v1849, 7
      %v1851 = vsub.s32 %v1848, %v1850
      %v1852 = vrot.slane %v1838, %v1851
      %v1853 = vcombine.high %v1845, %v1845
      %v1854 = vcombine.high %v1852, %v1852
      %v1856 = vunpack.c.l.s4 1983009808
      %v1857 = vunpack.c.0.s8 %v1856
      %v1858 = vlaneseq
      %v1859 = vshrl.u32 %v1858, 7
      %v1860 = vsub.s32 %v1857, %v1859
      %v1861 = vrot.slane %v1763, %v1860
      %v1862 = vcombine.high %v1764, %v1764
      %v1864 = vunpack.c.l.s4 1983009808
      %v1865 = vunpack.c.0.s8 %v1864
      %v1866 = vlaneseq
      %v1867 = vshrl.u32 %v1866, 7
      %v1868 = vsub.s32 %v1865, %v1867
      %v1869 = vrot.slane %v1764, %v1868
      %v1871 = vunpack.c.l.s4 1983009808
      %v1872 = vunpack.c.0.s8 %v1871
      %v1873 = vlaneseq
      %v1874 = vshrl.u32 %v1873, 7
      %v1875 = vsub.s32 %v1872, %v1874
      %v1876 = vrot.slane %v1862, %v1875
      %v1877 = vcombine.high %v1869, %v1869
      %v1878 = vcombine.high %v1876, %v1876
      %v1879 = vcombine.high %v1765, %v1765
      %v1881 = vunpack.c.l.s4 1983009808
      %v1882 = vunpack.c.0.s8 %v1881
      %v1883 = vlaneseq
      %v1884 = vshrl.u32 %v1883, 7
      %v1885 = vsub.s32 %v1882, %v1884
      %v1886 = vrot.slane %v1765, %v1885
      %v1888 = vunpack.c.l.s4 1983009808
      %v1889 = vunpack.c.0.s8 %v1888
      %v1890 = vlaneseq
      %v1891 = vshrl.u32 %v1890, 7
      %v1892 = vsub.s32 %v1889, %v1891
      %v1893 = vrot.slane %v1879, %v1892
      %v1894 = vcombine.high %v1886, %v1886
      %v1895 = vcombine.high %v1893, %v1893
      %v1897 = vunpack.c.l.s4 1983009808
      %v1898 = vunpack.c.0.s8 %v1897
      %v1899 = vlaneseq
      %v1900 = vshrl.u32 %v1899, 7
      %v1901 = vsub.s32 %v1898, %v1900
      %v1902 = vrot.slane %v1766, %v1901
      %v1903 = vcombine.high %v1767, %v1767
      %v1905 = vunpack.c.l.s4 1983009808
      %v1906 = vunpack.c.0.s8 %v1905
      %v1907 = vlaneseq
      %v1908 = vshrl.u32 %v1907, 7
      %v1909 = vsub.s32 %v1906, %v1908
      %v1910 = vrot.slane %v1767, %v1909
      %v1912 = vunpack.c.l.s4 1983009808
      %v1913 = vunpack.c.0.s8 %v1912
      %v1914 = vlaneseq
      %v1915 = vshrl.u32 %v1914, 7
      %v1916 = vsub.s32 %v1913, %v1915
      %v1917 = vrot.slane %v1903, %v1916
      %v1918 = vcombine.high %v1910, %v1910
      %v1919 = vcombine.high %v1917, %v1917
      %v1920 = vcombine.high %v1768, %v1768
      %v1922 = vunpack.c.l.s4 1983009808
      %v1923 = vunpack.c.0.s8 %v1922
      %v1924 = vlaneseq
      %v1925 = vshrl.u32 %v1924, 7
      %v1926 = vsub.s32 %v1923, %v1925
      %v1927 = vrot.slane %v1768, %v1926
      %v1929 = vunpack.c.l.s4 1983009808
      %v1930 = vunpack.c.0.s8 %v1929
      %v1931 = vlaneseq
      %v1932 = vshrl.u32 %v1931, 7
      %v1933 = vsub.s32 %v1930, %v1932
      %v1934 = vrot.slane %v1920, %v1933
      %v1935 = vcombine.high %v1927, %v1927
      %v1936 = vcombine.high %v1934, %v1934
      %v1938 = vunpack.c.l.s4 1983009808
      %v1939 = vunpack.c.0.s8 %v1938
      %v1940 = vlaneseq
      %v1941 = vshrl.u32 %v1940, 7
      %v1942 = vsub.s32 %v1939, %v1941
      %v1943 = vrot.slane %v1769, %v1942
      %v1944 = vcombine.high %v1770, %v1770
      %v1946 = vunpack.c.l.s4 1983009808
      %v1947 = vunpack.c.0.s8 %v1946
      %v1948 = vlaneseq
      %v1949 = vshrl.u32 %v1948, 7
      %v1950 = vsub.s32 %v1947, %v1949
      %v1951 = vrot.slane %v1770, %v1950
      %v1953 = vunpack.c.l.s4 1983009808
      %v1954 = vunpack.c.0.s8 %v1953
      %v1955 = vlaneseq
      %v1956 = vshrl.u32 %v1955, 7
      %v1957 = vsub.s32 %v1954, %v1956
      %v1958 = vrot.slane %v1944, %v1957
      %v1959 = vcombine.high %v1951, %v1951
      %v1960 = vcombine.high %v1958, %v1958
      %v1961 = vcombine.high %v1771, %v1771
      %v1963 = vunpack.c.l.s4 1983009808
      %v1964 = vunpack.c.0.s8 %v1963
      %v1965 = vlaneseq
      %v1966 = vshrl.u32 %v1965, 7
      %v1967 = vsub.s32 %v1964, %v1966
      %v1968 = vrot.slane %v1771, %v1967
      %v1970 = vunpack.c.l.s4 1983009808
      %v1971 = vunpack.c.0.s8 %v1970
      %v1972 = vlaneseq
      %v1973 = vshrl.u32 %v1972, 7
      %v1974 = vsub.s32 %v1971, %v1973
      %v1975 = vrot.slane %v1961, %v1974
      %v1976 = vcombine.high %v1968, %v1968
      %v1977 = vcombine.high %v1975, %v1975
      %v1979 = vunpack.c.l.s4 1983009808
      %v1980 = vunpack.c.0.s8 %v1979
      %v1981 = vlaneseq
      %v1982 = vshrl.u32 %v1981, 7
      %v1983 = vsub.s32 %v1980, %v1982
      %v1984 = vrot.slane %v1772, %v1983
      %v1985 = vcombine.high %v1773, %v1773
      %v1987 = vunpack.c.l.s4 1983009808
      %v1988 = vunpack.c.0.s8 %v1987
      %v1989 = vlaneseq
      %v1990 = vshrl.u32 %v1989, 7
      %v1991 = vsub.s32 %v1988, %v1990
      %v1992 = vrot.slane %v1773, %v1991
      %v1994 = vunpack.c.l.s4 1983009808
      %v1995 = vunpack.c.0.s8 %v1994
      %v1996 = vlaneseq
      %v1997 = vshrl.u32 %v1996, 7
      %v1998 = vsub.s32 %v1995, %v1997
      %v1999 = vrot.slane %v1985, %v1998
      %v2000 = vcombine.high %v1992, %v1992
      %v2001 = vcombine.high %v1999, %v1999
      %v2002 = vcombine.high %v1774, %v1774
      %v2004 = vunpack.c.l.s4 1983009808
      %v2005 = vunpack.c.0.s8 %v2004
      %v2006 = vlaneseq
      %v2007 = vshrl.u32 %v2006, 7
      %v2008 = vsub.s32 %v2005, %v2007
      %v2009 = vrot.slane %v1774, %v2008
      %v2011 = vunpack.c.l.s4 1983009808
      %v2012 = vunpack.c.0.s8 %v2011
      %v2013 = vlaneseq
      %v2014 = vshrl.u32 %v2013, 7
      %v2015 = vsub.s32 %v2012, %v2014
      %v2016 = vrot.slane %v2002, %v2015
      %v2017 = vcombine.high %v2009, %v2009
      %v2018 = vcombine.high %v2016, %v2016
      %v2020 = vunpack.c.l.s4 1983009808
      %v2021 = vunpack.c.0.s8 %v2020
      %v2022 = vlaneseq
      %v2023 = vshrl.u32 %v2022, 7
      %v2024 = vsub.s32 %v2021, %v2023
      %v2025 = vrot.slane %v1775, %v2024
      %v2026 = vcombine.high %v1776, %v1776
      %v2028 = vunpack.c.l.s4 1983009808
      %v2029 = vunpack.c.0.s8 %v2028
      %v2030 = vlaneseq
      %v2031 = vshrl.u32 %v2030, 7
      %v2032 = vsub.s32 %v2029, %v2031
      %v2033 = vrot.slane %v1776, %v2032
      %v2035 = vunpack.c.l.s4 1983009808
      %v2036 = vunpack.c.0.s8 %v2035
      %v2037 = vlaneseq
      %v2038 = vshrl.u32 %v2037, 7
      %v2039 = vsub.s32 %v2036, %v2038
      %v2040 = vrot.slane %v2026, %v2039
      %v2041 = vcombine.high %v2033, %v2033
      %v2042 = vcombine.high %v2040, %v2040
      %v2043 = vcombine.high %v1777, %v1777
      %v2045 = vunpack.c.l.s4 1983009808
      %v2046 = vunpack.c.0.s8 %v2045
      %v2047 = vlaneseq
      %v2048 = vshrl.u32 %v2047, 7
      %v2049 = vsub.s32 %v2046, %v2048
      %v2050 = vrot.slane %v1777, %v2049
      %v2052 = vunpack.c.l.s4 1983009808
      %v2053 = vunpack.c.0.s8 %v2052
      %v2054 = vlaneseq
      %v2055 = vshrl.u32 %v2054, 7
      %v2056 = vsub.s32 %v2053, %v2055
      %v2057 = vrot.slane %v2043, %v2056
      %v2058 = vcombine.high %v2050, %v2050
      %v2059 = vcombine.high %v2057, %v2057
      %v2061 = vunpack.c.l.s4 1983009808
      %v2062 = vunpack.c.0.s8 %v2061
      %v2063 = vlaneseq
      %v2064 = vshrl.u32 %v2063, 7
      %v2065 = vsub.s32 %v2062, %v2064
      %v2066 = vrot.slane %v1778, %v2065
      %v2067 = vcombine.high %v1779, %v1779
      %v2069 = vunpack.c.l.s4 1983009808
      %v2070 = vunpack.c.0.s8 %v2069
      %v2071 = vlaneseq
      %v2072 = vshrl.u32 %v2071, 7
      %v2073 = vsub.s32 %v2070, %v2072
      %v2074 = vrot.slane %v1779, %v2073
      %v2076 = vunpack.c.l.s4 1983009808
      %v2077 = vunpack.c.0.s8 %v2076
      %v2078 = vlaneseq
      %v2079 = vshrl.u32 %v2078, 7
      %v2080 = vsub.s32 %v2077, %v2079
      %v2081 = vrot.slane %v2067, %v2080
      %v2082 = vcombine.high %v2074, %v2074
      %v2083 = vcombine.high %v2081, %v2081
      %v2084 = vcombine.high %v1780, %v1780
      %v2086 = vunpack.c.l.s4 1983009808
      %v2087 = vunpack.c.0.s8 %v2086
      %v2088 = vlaneseq
      %v2089 = vshrl.u32 %v2088, 7
      %v2090 = vsub.s32 %v2087, %v2089
      %v2091 = vrot.slane %v1780, %v2090
      %v2093 = vunpack.c.l.s4 1983009808
      %v2094 = vunpack.c.0.s8 %v2093
      %v2095 = vlaneseq
      %v2096 = vshrl.u32 %v2095, 7
      %v2097 = vsub.s32 %v2094, %v2096
      %v2098 = vrot.slane %v2084, %v2097
      %v2099 = vcombine.high %v2091, %v2091
      %v2100 = vcombine.high %v2098, %v2098
      %v2102 = vunpack.c.l.s4 1983009808
      %v2103 = vunpack.c.0.s8 %v2102
      %v2104 = vlaneseq
      %v2105 = vshrl.u32 %v2104, 7
      %v2106 = vsub.s32 %v2103, %v2105
      %v2107 = vrot.slane %v1781, %v2106
      %v2108 = vcombine.high %v1782, %v1782
      %v2110 = vunpack.c.l.s4 1983009808
      %v2111 = vunpack.c.0.s8 %v2110
      %v2112 = vlaneseq
      %v2113 = vshrl.u32 %v2112, 7
      %v2114 = vsub.s32 %v2111, %v2113
      %v2115 = vrot.slane %v1782, %v2114
      %v2117 = vunpack.c.l.s4 1983009808
      %v2118 = vunpack.c.0.s8 %v2117
      %v2119 = vlaneseq
      %v2120 = vshrl.u32 %v2119, 7
      %v2121 = vsub.s32 %v2118, %v2120
      %v2122 = vrot.slane %v2108, %v2121
      %v2123 = vcombine.high %v2115, %v2115
      %v2124 = vcombine.high %v2122, %v2122
      %v2125 = vcombine.high %v1783, %v1783
      %v2127 = vunpack.c.l.s4 1983009808
      %v2128 = vunpack.c.0.s8 %v2127
      %v2129 = vlaneseq
      %v2130 = vshrl.u32 %v2129, 7
      %v2131 = vsub.s32 %v2128, %v2130
      %v2132 = vrot.slane %v1783, %v2131
      %v2134 = vunpack.c.l.s4 1983009808
      %v2135 = vunpack.c.0.s8 %v2134
      %v2136 = vlaneseq
      %v2137 = vshrl.u32 %v2136, 7
      %v2138 = vsub.s32 %v2135, %v2137
      %v2139 = vrot.slane %v2125, %v2138
      %v2140 = vcombine.high %v2132, %v2132
      %v2141 = vcombine.high %v2139, %v2139
      %v2143 = vunpack.c.l.s4 1983009808
      %v2144 = vunpack.c.0.s8 %v2143
      %v2145 = vlaneseq
      %v2146 = vshrl.u32 %v2145, 7
      %v2147 = vsub.s32 %v2144, %v2146
      %v2148 = vrot.slane %v1784, %v2147
      %v2149 = vcombine.high %v1785, %v1785
      %v2151 = vunpack.c.l.s4 1983009808
      %v2152 = vunpack.c.0.s8 %v2151
      %v2153 = vlaneseq
      %v2154 = vshrl.u32 %v2153, 7
      %v2155 = vsub.s32 %v2152, %v2154
      %v2156 = vrot.slane %v1785, %v2155
      %v2158 = vunpack.c.l.s4 1983009808
      %v2159 = vunpack.c.0.s8 %v2158
      %v2160 = vlaneseq
      %v2161 = vshrl.u32 %v2160, 7
      %v2162 = vsub.s32 %v2159, %v2161
      %v2163 = vrot.slane %v2149, %v2162
      %v2164 = vcombine.high %v2156, %v2156
      %v2165 = vcombine.high %v2163, %v2163
      %v2166 = vcombine.high %v1786, %v1786
      %v2168 = vunpack.c.l.s4 1983009808
      %v2169 = vunpack.c.0.s8 %v2168
      %v2170 = vlaneseq
      %v2171 = vshrl.u32 %v2170, 7
      %v2172 = vsub.s32 %v2169, %v2171
      %v2173 = vrot.slane %v1786, %v2172
      %v2175 = vunpack.c.l.s4 1983009808
      %v2176 = vunpack.c.0.s8 %v2175
      %v2177 = vlaneseq
      %v2178 = vshrl.u32 %v2177, 7
      %v2179 = vsub.s32 %v2176, %v2178
      %v2180 = vrot.slane %v2166, %v2179
      %v2181 = vcombine.high %v2173, %v2173
      %v2182 = vcombine.high %v2180, %v2180
      %v2184 = vunpack.c.l.s4 1983009808
      %v2185 = vunpack.c.0.s8 %v2184
      %v2186 = vlaneseq
      %v2187 = vshrl.u32 %v2186, 7
      %v2188 = vsub.s32 %v2185, %v2187
      %v2189 = vrot.slane %v1787, %v2188
      %v2190 = vcombine.high %v1788, %v1788
      %v2192 = vunpack.c.l.s4 1983009808
      %v2193 = vunpack.c.0.s8 %v2192
      %v2194 = vlaneseq
      %v2195 = vshrl.u32 %v2194, 7
      %v2196 = vsub.s32 %v2193, %v2195
      %v2197 = vrot.slane %v1788, %v2196
      %v2199 = vunpack.c.l.s4 1983009808
      %v2200 = vunpack.c.0.s8 %v2199
      %v2201 = vlaneseq
      %v2202 = vshrl.u32 %v2201, 7
      %v2203 = vsub.s32 %v2200, %v2202
      %v2204 = vrot.slane %v2190, %v2203
      %v2205 = vcombine.high %v2197, %v2197
      %v2206 = vcombine.high %v2204, %v2204
      %v2207 = vcombine.high %v1789, %v1789
      %v2209 = vunpack.c.l.s4 1983009808
      %v2210 = vunpack.c.0.s8 %v2209
      %v2211 = vlaneseq
      %v2212 = vshrl.u32 %v2211, 7
      %v2213 = vsub.s32 %v2210, %v2212
      %v2214 = vrot.slane %v1789, %v2213
      %v2216 = vunpack.c.l.s4 1983009808
      %v2217 = vunpack.c.0.s8 %v2216
      %v2218 = vlaneseq
      %v2219 = vshrl.u32 %v2218, 7
      %v2220 = vsub.s32 %v2217, %v2219
      %v2221 = vrot.slane %v2207, %v2220
      %v2222 = vcombine.high %v2214, %v2214
      %v2223 = vcombine.high %v2221, %v2221
      %v2225 = vunpack.c.l.s4 1983009808
      %v2226 = vunpack.c.0.s8 %v2225
      %v2227 = vlaneseq
      %v2228 = vshrl.u32 %v2227, 7
      %v2229 = vsub.s32 %v2226, %v2228
      %v2230 = vrot.slane %v1790, %v2229
      %v2231 = vld [vmem:[%s1] sm:$0xff]
      %v2232 = vld [vmem:[%s1 + $0x8] sm:$0xff]
      %v2233 = vld [vmem:[%s1 + $0x10] sm:$0xff]
      %v2234 = vld [vmem:[%s1 + $0x18] sm:$0xff]
      %v2235 = vld [vmem:[%s1 + $0x20] sm:$0xf]
      %v2236 = vld [vmem:[%s2] sm:$0x1]
      %v2238 = vlaneseq
      %v2239 = vshrl.u32 %v2238, 7
      %v2240 = vsub.s32 0, %v2239
      %v2241 = vrot.slane %v2236, %v2240
      %v2243 = vcombine.low %v1828, %v1836
      %v2244 = vcombine.low %v1835, %v1837
      %v2246 = vunpack.c.l.s4 1983009808
      %v2247 = vunpack.c.0.s8 %v2246
      %v2248 = vlaneseq
      %v2249 = vshrl.u32 %v2248, 7
      %v2250 = vsub.s32 %v2247, %v2249
      %v2251 = vrot.slane %v2243, %v2250
      %v2253 = vunpack.c.l.s4 1983009808
      %v2254 = vunpack.c.0.s8 %v2253
      %v2255 = vlaneseq
      %v2256 = vshrl.u32 %v2255, 7
      %v2257 = vsub.s32 %v2254, %v2256
      %v2258 = vrot.slane %v2244, %v2257
      %v2259 = vcombine.low %v2251, %v2258
      %v2260 = vcombine.low %v1845, %v1853
      %v2261 = vcombine.low %v1852, %v1854
      %v2263 = vunpack.c.l.s4 1983009808
      %v2264 = vunpack.c.0.s8 %v2263
      %v2265 = vlaneseq
      %v2266 = vshrl.u32 %v2265, 7
      %v2267 = vsub.s32 %v2264, %v2266
      %v2268 = vrot.slane %v2260, %v2267
      %v2270 = vunpack.c.l.s4 1983009808
      %v2271 = vunpack.c.0.s8 %v2270
      %v2272 = vlaneseq
      %v2273 = vshrl.u32 %v2272, 7
      %v2274 = vsub.s32 %v2271, %v2273
      %v2275 = vrot.slane %v2261, %v2274
      %v2276 = vcombine.low %v2268, %v2275
      %v2277 = vcombine.low %v1861, %v1869
      %v2278 = vcombine.low %v1877, %v1876
      %v2280 = vunpack.c.l.s4 1983009808
      %v2281 = vunpack.c.0.s8 %v2280
      %v2282 = vlaneseq
      %v2283 = vshrl.u32 %v2282, 7
      %v2284 = vsub.s32 %v2281, %v2283
      %v2285 = vrot.slane %v2277, %v2284
      %v2287 = vunpack.c.l.s4 1983009808
      %v2288 = vunpack.c.0.s8 %v2287
      %v2289 = vlaneseq
      %v2290 = vshrl.u32 %v2289, 7
      %v2291 = vsub.s32 %v2288, %v2290
      %v2292 = vrot.slane %v2278, %v2291
      %v2293 = vcombine.low %v2285, %v2292
      %v2294 = vcombine.low %v1878, %v1886
      %v2295 = vcombine.low %v1894, %v1893
      %v2297 = vunpack.c.l.s4 1983009808
      %v2298 = vunpack.c.0.s8 %v2297
      %v2299 = vlaneseq
      %v2300 = vshrl.u32 %v2299, 7
      %v2301 = vsub.s32 %v2298, %v2300
      %v2302 = vrot.slane %v2294, %v2301
      %v2304 = vunpack.c.l.s4 1983009808
      %v2305 = vunpack.c.0.s8 %v2304
      %v2306 = vlaneseq
      %v2307 = vshrl.u32 %v2306, 7
      %v2308 = vsub.s32 %v2305, %v2307
      %v2309 = vrot.slane %v2295, %v2308
      %v2310 = vcombine.low %v2302, %v2309
      %v2311 = vcombine.low %v1895, %v1902
      %v2312 = vcombine.low %v1910, %v1918
      %v2314 = vunpack.c.l.s4 1983009808
      %v2315 = vunpack.c.0.s8 %v2314
      %v2316 = vlaneseq
      %v2317 = vshrl.u32 %v2316, 7
      %v2318 = vsub.s32 %v2315, %v2317
      %v2319 = vrot.slane %v2311, %v2318
      %v2321 = vunpack.c.l.s4 1983009808
      %v2322 = vunpack.c.0.s8 %v2321
      %v2323 = vlaneseq
      %v2324 = vshrl.u32 %v2323, 7
      %v2325 = vsub.s32 %v2322, %v2324
      %v2326 = vrot.slane %v2312, %v2325
      %v2327 = vcombine.low %v2319, %v2326
      %v2328 = vcombine.low %v1917, %v1919
      %v2329 = vcombine.low %v1927, %v1935
      %v2331 = vunpack.c.l.s4 1983009808
      %v2332 = vunpack.c.0.s8 %v2331
      %v2333 = vlaneseq
      %v2334 = vshrl.u32 %v2333, 7
      %v2335 = vsub.s32 %v2332, %v2334
      %v2336 = vrot.slane %v2328, %v2335
      %v2338 = vunpack.c.l.s4 1983009808
      %v2339 = vunpack.c.0.s8 %v2338
      %v2340 = vlaneseq
      %v2341 = vshrl.u32 %v2340, 7
      %v2342 = vsub.s32 %v2339, %v2341
      %v2343 = vrot.slane %v2329, %v2342
      %v2344 = vcombine.low %v2336, %v2343
      %v2345 = vcombine.low %v1934, %v1936
      %v2346 = vcombine.low %v1943, %v1951
      %v2348 = vunpack.c.l.s4 1983009808
      %v2349 = vunpack.c.0.s8 %v2348
      %v2350 = vlaneseq
      %v2351 = vshrl.u32 %v2350, 7
      %v2352 = vsub.s32 %v2349, %v2351
      %v2353 = vrot.slane %v2345, %v2352
      %v2355 = vunpack.c.l.s4 1983009808
      %v2356 = vunpack.c.0.s8 %v2355
      %v2357 = vlaneseq
      %v2358 = vshrl.u32 %v2357, 7
      %v2359 = vsub.s32 %v2356, %v2358
      %v2360 = vrot.slane %v2346, %v2359
      %v2361 = vcombine.low %v2353, %v2360
      %v2362 = vcombine.low %v1959, %v1958
      %v2363 = vcombine.low %v1960, %v1968
      %v2365 = vunpack.c.l.s4 1983009808
      %v2366 = vunpack.c.0.s8 %v2365
      %v2367 = vlaneseq
      %v2368 = vshrl.u32 %v2367, 7
      %v2369 = vsub.s32 %v2366, %v2368
      %v2370 = vrot.slane %v2362, %v2369
      %v2372 = vunpack.c.l.s4 1983009808
      %v2373 = vunpack.c.0.s8 %v2372
      %v2374 = vlaneseq
      %v2375 = vshrl.u32 %v2374, 7
      %v2376 = vsub.s32 %v2373, %v2375
      %v2377 = vrot.slane %v2363, %v2376
      %v2378 = vcombine.low %v2370, %v2377
      %v2379 = vcombine.low %v1976, %v1975
      %v2380 = vcombine.low %v1977, %v1984
      %v2382 = vunpack.c.l.s4 1983009808
      %v2383 = vunpack.c.0.s8 %v2382
      %v2384 = vlaneseq
      %v2385 = vshrl.u32 %v2384, 7
      %v2386 = vsub.s32 %v2383, %v2385
      %v2387 = vrot.slane %v2379, %v2386
      %v2389 = vunpack.c.l.s4 1983009808
      %v2390 = vunpack.c.0.s8 %v2389
      %v2391 = vlaneseq
      %v2392 = vshrl.u32 %v2391, 7
      %v2393 = vsub.s32 %v2390, %v2392
      %v2394 = vrot.slane %v2380, %v2393
      %v2395 = vcombine.low %v2387, %v2394
      %v2396 = vcombine.low %v1992, %v2000
      %v2397 = vcombine.low %v1999, %v2001
      %v2399 = vunpack.c.l.s4 1983009808
      %v2400 = vunpack.c.0.s8 %v2399
      %v2401 = vlaneseq
      %v2402 = vshrl.u32 %v2401, 7
      %v2403 = vsub.s32 %v2400, %v2402
      %v2404 = vrot.slane %v2396, %v2403
      %v2406 = vunpack.c.l.s4 1983009808
      %v2407 = vunpack.c.0.s8 %v2406
      %v2408 = vlaneseq
      %v2409 = vshrl.u32 %v2408, 7
      %v2410 = vsub.s32 %v2407, %v2409
      %v2411 = vrot.slane %v2397, %v2410
      %v2412 = vcombine.low %v2404, %v2411
      %v2413 = vcombine.low %v2009, %v2017
      %v2414 = vcombine.low %v2016, %v2018
      %v2416 = vunpack.c.l.s4 1983009808
      %v2417 = vunpack.c.0.s8 %v2416
      %v2418 = vlaneseq
      %v2419 = vshrl.u32 %v2418, 7
      %v2420 = vsub.s32 %v2417, %v2419
      %v2421 = vrot.slane %v2413, %v2420
      %v2423 = vunpack.c.l.s4 1983009808
      %v2424 = vunpack.c.0.s8 %v2423
      %v2425 = vlaneseq
      %v2426 = vshrl.u32 %v2425, 7
      %v2427 = vsub.s32 %v2424, %v2426
      %v2428 = vrot.slane %v2414, %v2427
      %v2429 = vcombine.low %v2421, %v2428
      %v2430 = vcombine.low %v2025, %v2033
      %v2431 = vcombine.low %v2041, %v2040
      %v2433 = vunpack.c.l.s4 1983009808
      %v2434 = vunpack.c.0.s8 %v2433
      %v2435 = vlaneseq
      %v2436 = vshrl.u32 %v2435, 7
      %v2437 = vsub.s32 %v2434, %v2436
      %v2438 = vrot.slane %v2430, %v2437
      %v2440 = vunpack.c.l.s4 1983009808
      %v2441 = vunpack.c.0.s8 %v2440
      %v2442 = vlaneseq
      %v2443 = vshrl.u32 %v2442, 7
      %v2444 = vsub.s32 %v2441, %v2443
      %v2445 = vrot.slane %v2431, %v2444
      %v2446 = vcombine.low %v2438, %v2445
      %v2447 = vcombine.low %v2042, %v2050
      %v2448 = vcombine.low %v2058, %v2057
      %v2450 = vunpack.c.l.s4 1983009808
      %v2451 = vunpack.c.0.s8 %v2450
      %v2452 = vlaneseq
      %v2453 = vshrl.u32 %v2452, 7
      %v2454 = vsub.s32 %v2451, %v2453
      %v2455 = vrot.slane %v2447, %v2454
      %v2457 = vunpack.c.l.s4 1983009808
      %v2458 = vunpack.c.0.s8 %v2457
      %v2459 = vlaneseq
      %v2460 = vshrl.u32 %v2459, 7
      %v2461 = vsub.s32 %v2458, %v2460
      %v2462 = vrot.slane %v2448, %v2461
      %v2463 = vcombine.low %v2455, %v2462
      %v2464 = vcombine.low %v2059, %v2066
      %v2465 = vcombine.low %v2074, %v2082
      %v2467 = vunpack.c.l.s4 1983009808
      %v2468 = vunpack.c.0.s8 %v2467
      %v2469 = vlaneseq
      %v2470 = vshrl.u32 %v2469, 7
      %v2471 = vsub.s32 %v2468, %v2470
      %v2472 = vrot.slane %v2464, %v2471
      %v2474 = vunpack.c.l.s4 1983009808
      %v2475 = vunpack.c.0.s8 %v2474
      %v2476 = vlaneseq
      %v2477 = vshrl.u32 %v2476, 7
      %v2478 = vsub.s32 %v2475, %v2477
      %v2479 = vrot.slane %v2465, %v2478
      %v2480 = vcombine.low %v2472, %v2479
      %v2481 = vcombine.low %v2081, %v2083
      %v2482 = vcombine.low %v2091, %v2099
      %v2484 = vunpack.c.l.s4 1983009808
      %v2485 = vunpack.c.0.s8 %v2484
      %v2486 = vlaneseq
      %v2487 = vshrl.u32 %v2486, 7
      %v2488 = vsub.s32 %v2485, %v2487
      %v2489 = vrot.slane %v2481, %v2488
      %v2491 = vunpack.c.l.s4 1983009808
      %v2492 = vunpack.c.0.s8 %v2491
      %v2493 = vlaneseq
      %v2494 = vshrl.u32 %v2493, 7
      %v2495 = vsub.s32 %v2492, %v2494
      %v2496 = vrot.slane %v2482, %v2495
      %v2497 = vcombine.low %v2489, %v2496
      %v2498 = vcombine.low %v2098, %v2100
      %v2499 = vcombine.low %v2107, %v2115
      %v2501 = vunpack.c.l.s4 1983009808
      %v2502 = vunpack.c.0.s8 %v2501
      %v2503 = vlaneseq
      %v2504 = vshrl.u32 %v2503, 7
      %v2505 = vsub.s32 %v2502, %v2504
      %v2506 = vrot.slane %v2498, %v2505
      %v2508 = vunpack.c.l.s4 1983009808
      %v2509 = vunpack.c.0.s8 %v2508
      %v2510 = vlaneseq
      %v2511 = vshrl.u32 %v2510, 7
      %v2512 = vsub.s32 %v2509, %v2511
      %v2513 = vrot.slane %v2499, %v2512
      %v2514 = vcombine.low %v2506, %v2513
      %v2515 = vcombine.low %v2123, %v2122
      %v2516 = vcombine.low %v2124, %v2132
      %v2518 = vunpack.c.l.s4 1983009808
      %v2519 = vunpack.c.0.s8 %v2518
      %v2520 = vlaneseq
      %v2521 = vshrl.u32 %v2520, 7
      %v2522 = vsub.s32 %v2519, %v2521
      %v2523 = vrot.slane %v2515, %v2522
      %v2525 = vunpack.c.l.s4 1983009808
      %v2526 = vunpack.c.0.s8 %v2525
      %v2527 = vlaneseq
      %v2528 = vshrl.u32 %v2527, 7
      %v2529 = vsub.s32 %v2526, %v2528
      %v2530 = vrot.slane %v2516, %v2529
      %v2531 = vcombine.low %v2523, %v2530
      %v2532 = vcombine.low %v2140, %v2139
      %v2533 = vcombine.low %v2141, %v2148
      %v2535 = vunpack.c.l.s4 1983009808
      %v2536 = vunpack.c.0.s8 %v2535
      %v2537 = vlaneseq
      %v2538 = vshrl.u32 %v2537, 7
      %v2539 = vsub.s32 %v2536, %v2538
      %v2540 = vrot.slane %v2532, %v2539
      %v2542 = vunpack.c.l.s4 1983009808
      %v2543 = vunpack.c.0.s8 %v2542
      %v2544 = vlaneseq
      %v2545 = vshrl.u32 %v2544, 7
      %v2546 = vsub.s32 %v2543, %v2545
      %v2547 = vrot.slane %v2533, %v2546
      %v2548 = vcombine.low %v2540, %v2547
      %v2549 = vcombine.low %v2156, %v2164
      %v2550 = vcombine.low %v2163, %v2165
      %v2552 = vunpack.c.l.s4 1983009808
      %v2553 = vunpack.c.0.s8 %v2552
      %v2554 = vlaneseq
      %v2555 = vshrl.u32 %v2554, 7
      %v2556 = vsub.s32 %v2553, %v2555
      %v2557 = vrot.slane %v2549, %v2556
      %v2559 = vunpack.c.l.s4 1983009808
      %v2560 = vunpack.c.0.s8 %v2559
      %v2561 = vlaneseq
      %v2562 = vshrl.u32 %v2561, 7
      %v2563 = vsub.s32 %v2560, %v2562
      %v2564 = vrot.slane %v2550, %v2563
      %v2565 = vcombine.low %v2557, %v2564
      %v2566 = vcombine.low %v2173, %v2181
      %v2567 = vcombine.low %v2180, %v2182
      %v2569 = vunpack.c.l.s4 1983009808
      %v2570 = vunpack.c.0.s8 %v2569
      %v2571 = vlaneseq
      %v2572 = vshrl.u32 %v2571, 7
      %v2573 = vsub.s32 %v2570, %v2572
      %v2574 = vrot.slane %v2566, %v2573
      %v2576 = vunpack.c.l.s4 1983009808
      %v2577 = vunpack.c.0.s8 %v2576
      %v2578 = vlaneseq
      %v2579 = vshrl.u32 %v2578, 7
      %v2580 = vsub.s32 %v2577, %v2579
      %v2581 = vrot.slane %v2567, %v2580
      %v2582 = vcombine.low %v2574, %v2581
      %v2583 = vcombine.low %v2189, %v2197
      %v2584 = vcombine.low %v2205, %v2204
      %v2586 = vunpack.c.l.s4 1983009808
      %v2587 = vunpack.c.0.s8 %v2586
      %v2588 = vlaneseq
      %v2589 = vshrl.u32 %v2588, 7
      %v2590 = vsub.s32 %v2587, %v2589
      %v2591 = vrot.slane %v2583, %v2590
      %v2593 = vunpack.c.l.s4 1983009808
      %v2594 = vunpack.c.0.s8 %v2593
      %v2595 = vlaneseq
      %v2596 = vshrl.u32 %v2595, 7
      %v2597 = vsub.s32 %v2594, %v2596
      %v2598 = vrot.slane %v2584, %v2597
      %v2599 = vcombine.low %v2591, %v2598
      %v2600 = vcombine.low %v2206, %v2214
      %v2601 = vcombine.low %v2222, %v2221
      %v2603 = vunpack.c.l.s4 1983009808
      %v2604 = vunpack.c.0.s8 %v2603
      %v2605 = vlaneseq
      %v2606 = vshrl.u32 %v2605, 7
      %v2607 = vsub.s32 %v2604, %v2606
      %v2608 = vrot.slane %v2600, %v2607
      %v2610 = vunpack.c.l.s4 1983009808
      %v2611 = vunpack.c.0.s8 %v2610
      %v2612 = vlaneseq
      %v2613 = vshrl.u32 %v2612, 7
      %v2614 = vsub.s32 %v2611, %v2613
      %v2615 = vrot.slane %v2601, %v2614
      %v2616 = vcombine.low %v2608, %v2615
      %v2617 = vcombine.low %v2223, %v2230
      %v2619 = vunpack.c.l.s4 1983009808
      %v2620 = vunpack.c.0.s8 %v2619
      %v2621 = vlaneseq
      %v2622 = vshrl.u32 %v2621, 7
      %v2623 = vsub.s32 %v2620, %v2622
      %v2624 = vrot.slane %v2617, %v2623
      %vm2625 = vcmask 293888
      %v2626 = vsel %vm2625, %v2259, 0
      %v2628 = vsel %vm2625, %v2276, 0
      %v2630 = vsel %vm2625, %v2293, 0
      %v2632 = vsel %vm2625, %v2310, 0
      %v2634 = vsel %vm2625, %v2327, 0
      %v2636 = vsel %vm2625, %v2344, 0
      %v2638 = vsel %vm2625, %v2361, 0
      %v2640 = vsel %vm2625, %v2378, 0
      %v2642 = vsel %vm2625, %v2395, 0
      %v2644 = vsel %vm2625, %v2412, 0
      %v2646 = vsel %vm2625, %v2429, 0
      %v2648 = vsel %vm2625, %v2446, 0
      %v2650 = vsel %vm2625, %v2463, 0
      %v2652 = vsel %vm2625, %v2480, 0
      %v2654 = vsel %vm2625, %v2497, 0
      %v2656 = vsel %vm2625, %v2514, 0
      %v2658 = vsel %vm2625, %v2531, 0
      %v2660 = vsel %vm2625, %v2548, 0
      %v2662 = vsel %vm2625, %v2565, 0
      %v2664 = vsel %vm2625, %v2582, 0
      %v2666 = vsel %vm2625, %v2599, 0
      %v2668 = vsel %vm2625, %v2616, 0
      %v2670 = vsel %vm2625, %v2624, 0
      %vm2672 = vcmask 1043456
      %v2674 = vsel %vm2672, %v2235, 0
      %2676 = vmatprep.subr.mxu0 0.0
      %2677 = vmatpush1.msra.mxu0 0.0
      %2678 = vmatprep.subr.mxu0 0.0
      %2679 = vmatpush1.msra.mxu0 0.0
      %2680 = vmatprep.subr.mxu0 0.0
      %2681 = vmatpush1.msra.mxu0 0.0
      %2682 = vmatprep.subr.mxu0 0.0
      %2683 = vmatpush1.msra.mxu0 0.0
      %2684 = vmatprep.subr.mxu0 0.0
      %2685 = vmatpush1.msra.mxu0 0.0
      %2686 = vmatprep.subr.mxu0 0.0
      %2687 = vmatpush1.msra.mxu0 0.0
      %2688 = vmatprep.subr.mxu0 0.0
      %2689 = vmatpush1.msra.mxu0 0.0
      %2690 = vmatprep.subr.mxu0 0.0
      %2691 = vmatpush1.msra.mxu0 0.0
      %2692 = vmatprep.subr.mxu0 0.0
      %2693 = vmatpush1.msra.mxu0 0.0
      %2694 = vmatprep.subr.mxu0 0.0
      %2695 = vmatpush1.msra.mxu0 0.0
      %2696 = vmatprep.subr.mxu0 0.0
      %2697 = vmatpush1.msra.mxu0 0.0
      %2698 = vmatprep.subr.mxu0 0.0
      %2699 = vmatpush1.msra.mxu0 %v2674
      %2700 = vmatprep.subr.mxu0 0.0
      %2701 = vmatpush1.msra.mxu0 %v2234
      %2702 = vmatprep.subr.mxu0 0.0
      %2703 = vmatpush1.msra.mxu0 %v2233
      %2704 = vmatprep.subr.mxu0 0.0
      %2705 = vmatpush1.msra.mxu0 %v2232
      %2706 = vmatprep.subr.mxu0 0.0
      %2707 = vmatpush1.msra.mxu0 %v2231
      %2708 = vmatprep.subr.mxu0 0.0
      %2709 = vmatpush2.msra.mxu0 0.0
      %2710 = vmatprep.subr.mxu0 0.0
      %2711 = vmatpush2.msra.mxu0 0.0
      %2712 = vmatprep.subr.mxu0 0.0
      %2713 = vmatpush2.msra.mxu0 0.0
      %2714 = vmatprep.subr.mxu0 0.0
      %2715 = vmatpush2.msra.mxu0 0.0
      %2716 = vmatprep.subr.mxu0 0.0
      %2717 = vmatpush2.msra.mxu0 0.0
      %2718 = vmatprep.subr.mxu0 0.0
      %2719 = vmatpush2.msra.mxu0 0.0
      %2720 = vmatprep.subr.mxu0 0.0
      %2721 = vmatpush2.msra.mxu0 0.0
      %2722 = vmatprep.subr.mxu0 0.0
      %2723 = vmatpush2.msra.mxu0 0.0
      %2724 = vmatprep.subr.mxu0 0.0
      %2725 = vmatpush2.msra.mxu0 0.0
      %2726 = vmatprep.subr.mxu0 0.0
      %2727 = vmatpush2.msra.mxu0 0.0
      %2728 = vmatprep.subr.mxu0 0.0
      %2729 = vmatpush2.msra.mxu0 0.0
      %2730 = vmatprep.subr.mxu0 0.0
      %2731 = vmatpush2.msra.mxu0 0.0
      %2732 = vmatprep.subr.mxu0 0.0
      %2733 = vmatpush2.msra.mxu0 0.0
      %2734 = vmatprep.subr.mxu0 0.0
      %2735 = vmatpush2.msra.mxu0 0.0
      %2736 = vmatprep.subr.mxu0 0.0
      %2737 = vmatpush2.msra.mxu0 0.0
      %2738 = vmatprep.subr.mxu0 0.0
      %2739 = vmatpush2.msra.mxu0 0.0
      %2740 = vmatprep.mubr.f32.mxu0 0.0
      %2741 = vmatmul.mubr.f32.gmra.mxu0 %v2626
      %v2742 = vpop.f32.mrf.mxu0
      %v2743 = vadd.f32 %v2241, %v2742
      %v2744 = vpop.f32.mrf.mxu0
      %2745 = vmatprep.mubr.f32.mxu0 0.0
      %2746 = vmatmul.mubr.f32.gmra.mxu0 %v2628
      %v2747 = vpop.f32.mrf.mxu0
      %v2748 = vadd.f32 %v2241, %v2747
      %v2749 = vpop.f32.mrf.mxu0
      %2750 = vmatprep.mubr.f32.mxu0 0.0
      %2751 = vmatmul.mubr.f32.gmra.mxu0 %v2630
      %v2752 = vpop.f32.mrf.mxu0
      %v2753 = vadd.f32 %v2241, %v2752
      %v2754 = vpop.f32.mrf.mxu0
      %2755 = vmatprep.mubr.f32.mxu0 0.0
      %2756 = vmatmul.mubr.f32.gmra.mxu0 %v2632
      %v2757 = vpop.f32.mrf.mxu0
      %v2758 = vadd.f32 %v2241, %v2757
      %v2759 = vpop.f32.mrf.mxu0
      %2760 = vmatprep.mubr.f32.mxu0 0.0
      %2761 = vmatmul.mubr.f32.gmra.mxu0 %v2634
      %v2762 = vpop.f32.mrf.mxu0
      %v2763 = vadd.f32 %v2241, %v2762
      %v2764 = vpop.f32.mrf.mxu0
      %2765 = vmatprep.mubr.f32.mxu0 0.0
      %2766 = vmatmul.mubr.f32.gmra.mxu0 %v2636
      %v2767 = vpop.f32.mrf.mxu0
      %v2768 = vadd.f32 %v2241, %v2767
      %v2769 = vpop.f32.mrf.mxu0
      %2770 = vmatprep.mubr.f32.mxu0 0.0
      %2771 = vmatmul.mubr.f32.gmra.mxu0 %v2638
      %v2772 = vpop.f32.mrf.mxu0
      %v2773 = vadd.f32 %v2241, %v2772
      %v2774 = vpop.f32.mrf.mxu0
      %2775 = vmatprep.mubr.f32.mxu0 0.0
      %2776 = vmatmul.mubr.f32.gmra.mxu0 %v2640
      %v2777 = vpop.f32.mrf.mxu0
      %v2778 = vadd.f32 %v2241, %v2777
      %v2779 = vpop.f32.mrf.mxu0
      %2780 = vmatprep.mubr.f32.mxu0 0.0
      %2781 = vmatmul.mubr.f32.gmra.mxu0 %v2642
      %v2782 = vpop.f32.mrf.mxu0
      %v2783 = vadd.f32 %v2241, %v2782
      %v2784 = vpop.f32.mrf.mxu0
      %2785 = vmatprep.mubr.f32.mxu0 0.0
      %2786 = vmatmul.mubr.f32.gmra.mxu0 %v2644
      %v2787 = vpop.f32.mrf.mxu0
      %v2788 = vadd.f32 %v2241, %v2787
      %v2789 = vpop.f32.mrf.mxu0
      %2790 = vmatprep.mubr.f32.mxu0 0.0
      %2791 = vmatmul.mubr.f32.gmra.mxu0 %v2646
      %v2792 = vpop.f32.mrf.mxu0
      %v2793 = vadd.f32 %v2241, %v2792
      %v2794 = vpop.f32.mrf.mxu0
      %2795 = vmatprep.mubr.f32.mxu0 0.0
      %2796 = vmatmul.mubr.f32.gmra.mxu0 %v2648
      %v2797 = vpop.f32.mrf.mxu0
      %v2798 = vadd.f32 %v2241, %v2797
      %v2799 = vpop.f32.mrf.mxu0
      %2800 = vmatprep.mubr.f32.mxu0 0.0
      %2801 = vmatmul.mubr.f32.gmra.mxu0 %v2650
      %v2802 = vpop.f32.mrf.mxu0
      %v2803 = vadd.f32 %v2241, %v2802
      %v2804 = vpop.f32.mrf.mxu0
      %2805 = vmatprep.mubr.f32.mxu0 0.0
      %2806 = vmatmul.mubr.f32.gmra.mxu0 %v2652
      %v2807 = vpop.f32.mrf.mxu0
      %v2808 = vadd.f32 %v2241, %v2807
      %v2809 = vpop.f32.mrf.mxu0
      %2810 = vmatprep.mubr.f32.mxu0 0.0
      %2811 = vmatmul.mubr.f32.gmra.mxu0 %v2654
      %v2812 = vpop.f32.mrf.mxu0
      %v2813 = vadd.f32 %v2241, %v2812
      %v2814 = vpop.f32.mrf.mxu0
      %2815 = vmatprep.mubr.f32.mxu0 0.0
      %2816 = vmatmul.mubr.f32.gmra.mxu0 %v2656
      %v2817 = vpop.f32.mrf.mxu0
      %v2818 = vadd.f32 %v2241, %v2817
      %v2819 = vpop.f32.mrf.mxu0
      %2820 = vmatprep.mubr.f32.mxu0 0.0
      %2821 = vmatmul.mubr.f32.gmra.mxu0 %v2658
      %v2822 = vpop.f32.mrf.mxu0
      %v2823 = vadd.f32 %v2241, %v2822
      %v2824 = vpop.f32.mrf.mxu0
      %2825 = vmatprep.mubr.f32.mxu0 0.0
      %2826 = vmatmul.mubr.f32.gmra.mxu0 %v2660
      %v2827 = vpop.f32.mrf.mxu0
      %v2828 = vadd.f32 %v2241, %v2827
      %v2829 = vpop.f32.mrf.mxu0
      %2830 = vmatprep.mubr.f32.mxu0 0.0
      %2831 = vmatmul.mubr.f32.gmra.mxu0 %v2662
      %v2832 = vpop.f32.mrf.mxu0
      %v2833 = vadd.f32 %v2241, %v2832
      %v2834 = vpop.f32.mrf.mxu0
      %2835 = vmatprep.mubr.f32.mxu0 0.0
      %2836 = vmatmul.mubr.f32.gmra.mxu0 %v2664
      %v2837 = vpop.f32.mrf.mxu0
      %v2838 = vadd.f32 %v2241, %v2837
      %v2839 = vpop.f32.mrf.mxu0
      %2840 = vmatprep.mubr.f32.mxu0 0.0
      %2841 = vmatmul.mubr.f32.gmra.mxu0 %v2666
      %v2842 = vpop.f32.mrf.mxu0
      %v2843 = vadd.f32 %v2241, %v2842
      %v2844 = vpop.f32.mrf.mxu0
      %2845 = vmatprep.mubr.f32.mxu0 0.0
      %2846 = vmatmul.mubr.f32.gmra.mxu0 %v2668
      %v2847 = vpop.f32.mrf.mxu0
      %v2848 = vadd.f32 %v2241, %v2847
      %v2849 = vpop.f32.mrf.mxu0
      %2850 = vmatprep.mubr.f32.mxu0 0.0
      %2851 = vmatmul.mubr.f32.gmra.mxu0 %v2670
      %v2852 = vpop.f32.mrf.mxu0
      %v2853 = vadd.f32 %v2241, %v2852
      %v2854 = vpop.f32.mrf.mxu0
      %2855 = vdwg.mxu0
      %v2856 = vmax.f32 %v2743, 0.0
      %v2857 = vmax.f32 %v2748, 0.0
      %v2858 = vmax.f32 %v2753, 0.0
      %v2859 = vmax.f32 %v2758, 0.0
      %v2860 = vmax.f32 %v2763, 0.0
      %v2861 = vmax.f32 %v2768, 0.0
      %v2862 = vmax.f32 %v2773, 0.0
      %v2863 = vmax.f32 %v2778, 0.0
      %v2864 = vmax.f32 %v2783, 0.0
      %v2865 = vmax.f32 %v2788, 0.0
      %v2866 = vmax.f32 %v2793, 0.0
      %v2867 = vmax.f32 %v2798, 0.0
      %v2868 = vmax.f32 %v2803, 0.0
      %v2869 = vmax.f32 %v2808, 0.0
      %v2870 = vmax.f32 %v2813, 0.0
      %v2871 = vmax.f32 %v2818, 0.0
      %v2872 = vmax.f32 %v2823, 0.0
      %v2873 = vmax.f32 %v2828, 0.0
      %v2874 = vmax.f32 %v2833, 0.0
      %v2875 = vmax.f32 %v2838, 0.0
      %v2876 = vmax.f32 %v2843, 0.0
      %v2877 = vmax.f32 %v2848, 0.0
      %v2878 = vmax.f32 %v2853, 0.0
      %v2902 = vcombine.high %v2856, %v2856
      %v2904 = vunpack.c.l.s4 1983009808
      %v2905 = vunpack.c.0.s8 %v2904
      %v2906 = vlaneseq
      %v2907 = vshrl.u32 %v2906, 7
      %v2908 = vsub.s32 %v2905, %v2907
      %v2909 = vrot.slane %v2856, %v2908
      %v2911 = vunpack.c.l.s4 1983009808
      %v2912 = vunpack.c.0.s8 %v2911
      %v2913 = vlaneseq
      %v2914 = vshrl.u32 %v2913, 7
      %v2915 = vsub.s32 %v2912, %v2914
      %v2916 = vrot.slane %v2902, %v2915
      %v2917 = vcombine.high %v2909, %v2909
      %v2918 = vcombine.high %v2916, %v2916
      %v2919 = vcombine.high %v2857, %v2857
      %v2921 = vunpack.c.l.s4 1983009808
      %v2922 = vunpack.c.0.s8 %v2921
      %v2923 = vlaneseq
      %v2924 = vshrl.u32 %v2923, 7
      %v2925 = vsub.s32 %v2922, %v2924
      %v2926 = vrot.slane %v2857, %v2925
      %v2928 = vunpack.c.l.s4 1983009808
      %v2929 = vunpack.c.0.s8 %v2928
      %v2930 = vlaneseq
      %v2931 = vshrl.u32 %v2930, 7
      %v2932 = vsub.s32 %v2929, %v2931
      %v2933 = vrot.slane %v2919, %v2932
      %v2934 = vcombine.high %v2926, %v2926
      %v2935 = vcombine.high %v2933, %v2933
      %v2936 = vcombine.high %v2858, %v2858
      %v2938 = vunpack.c.l.s4 1983009808
      %v2939 = vunpack.c.0.s8 %v2938
      %v2940 = vlaneseq
      %v2941 = vshrl.u32 %v2940, 7
      %v2942 = vsub.s32 %v2939, %v2941
      %v2943 = vrot.slane %v2858, %v2942
      %v2945 = vunpack.c.l.s4 1983009808
      %v2946 = vunpack.c.0.s8 %v2945
      %v2947 = vlaneseq
      %v2948 = vshrl.u32 %v2947, 7
      %v2949 = vsub.s32 %v2946, %v2948
      %v2950 = vrot.slane %v2936, %v2949
      %v2951 = vcombine.high %v2943, %v2943
      %v2952 = vcombine.high %v2950, %v2950
      %v2953 = vcombine.high %v2859, %v2859
      %v2955 = vunpack.c.l.s4 1983009808
      %v2956 = vunpack.c.0.s8 %v2955
      %v2957 = vlaneseq
      %v2958 = vshrl.u32 %v2957, 7
      %v2959 = vsub.s32 %v2956, %v2958
      %v2960 = vrot.slane %v2859, %v2959
      %v2962 = vunpack.c.l.s4 1983009808
      %v2963 = vunpack.c.0.s8 %v2962
      %v2964 = vlaneseq
      %v2965 = vshrl.u32 %v2964, 7
      %v2966 = vsub.s32 %v2963, %v2965
      %v2967 = vrot.slane %v2953, %v2966
      %v2968 = vcombine.high %v2960, %v2960
      %v2969 = vcombine.high %v2967, %v2967
      %v2970 = vcombine.high %v2860, %v2860
      %v2972 = vunpack.c.l.s4 1983009808
      %v2973 = vunpack.c.0.s8 %v2972
      %v2974 = vlaneseq
      %v2975 = vshrl.u32 %v2974, 7
      %v2976 = vsub.s32 %v2973, %v2975
      %v2977 = vrot.slane %v2860, %v2976
      %v2979 = vunpack.c.l.s4 1983009808
      %v2980 = vunpack.c.0.s8 %v2979
      %v2981 = vlaneseq
      %v2982 = vshrl.u32 %v2981, 7
      %v2983 = vsub.s32 %v2980, %v2982
      %v2984 = vrot.slane %v2970, %v2983
      %v2985 = vcombine.high %v2977, %v2977
      %v2986 = vcombine.high %v2984, %v2984
      %v2987 = vcombine.high %v2861, %v2861
      %v2989 = vunpack.c.l.s4 1983009808
      %v2990 = vunpack.c.0.s8 %v2989
      %v2991 = vlaneseq
      %v2992 = vshrl.u32 %v2991, 7
      %v2993 = vsub.s32 %v2990, %v2992
      %v2994 = vrot.slane %v2861, %v2993
      %v2996 = vunpack.c.l.s4 1983009808
      %v2997 = vunpack.c.0.s8 %v2996
      %v2998 = vlaneseq
      %v2999 = vshrl.u32 %v2998, 7
      %v3000 = vsub.s32 %v2997, %v2999
      %v3001 = vrot.slane %v2987, %v3000
      %v3002 = vcombine.high %v2994, %v2994
      %v3003 = vcombine.high %v3001, %v3001
      %v3004 = vcombine.high %v2862, %v2862
      %v3006 = vunpack.c.l.s4 1983009808
      %v3007 = vunpack.c.0.s8 %v3006
      %v3008 = vlaneseq
      %v3009 = vshrl.u32 %v3008, 7
      %v3010 = vsub.s32 %v3007, %v3009
      %v3011 = vrot.slane %v2862, %v3010
      %v3013 = vunpack.c.l.s4 1983009808
      %v3014 = vunpack.c.0.s8 %v3013
      %v3015 = vlaneseq
      %v3016 = vshrl.u32 %v3015, 7
      %v3017 = vsub.s32 %v3014, %v3016
      %v3018 = vrot.slane %v3004, %v3017
      %v3019 = vcombine.high %v3011, %v3011
      %v3020 = vcombine.high %v3018, %v3018
      %v3021 = vcombine.high %v2863, %v2863
      %v3023 = vunpack.c.l.s4 1983009808
      %v3024 = vunpack.c.0.s8 %v3023
      %v3025 = vlaneseq
      %v3026 = vshrl.u32 %v3025, 7
      %v3027 = vsub.s32 %v3024, %v3026
      %v3028 = vrot.slane %v2863, %v3027
      %v3030 = vunpack.c.l.s4 1983009808
      %v3031 = vunpack.c.0.s8 %v3030
      %v3032 = vlaneseq
      %v3033 = vshrl.u32 %v3032, 7
      %v3034 = vsub.s32 %v3031, %v3033
      %v3035 = vrot.slane %v3021, %v3034
      %v3036 = vcombine.high %v3028, %v3028
      %v3037 = vcombine.high %v3035, %v3035
      %v3038 = vcombine.high %v2864, %v2864
      %v3040 = vunpack.c.l.s4 1983009808
      %v3041 = vunpack.c.0.s8 %v3040
      %v3042 = vlaneseq
      %v3043 = vshrl.u32 %v3042, 7
      %v3044 = vsub.s32 %v3041, %v3043
      %v3045 = vrot.slane %v2864, %v3044
      %v3047 = vunpack.c.l.s4 1983009808
      %v3048 = vunpack.c.0.s8 %v3047
      %v3049 = vlaneseq
      %v3050 = vshrl.u32 %v3049, 7
      %v3051 = vsub.s32 %v3048, %v3050
      %v3052 = vrot.slane %v3038, %v3051
      %v3053 = vcombine.high %v3045, %v3045
      %v3054 = vcombine.high %v3052, %v3052
      %v3055 = vcombine.high %v2865, %v2865
      %v3057 = vunpack.c.l.s4 1983009808
      %v3058 = vunpack.c.0.s8 %v3057
      %v3059 = vlaneseq
      %v3060 = vshrl.u32 %v3059, 7
      %v3061 = vsub.s32 %v3058, %v3060
      %v3062 = vrot.slane %v2865, %v3061
      %v3064 = vunpack.c.l.s4 1983009808
      %v3065 = vunpack.c.0.s8 %v3064
      %v3066 = vlaneseq
      %v3067 = vshrl.u32 %v3066, 7
      %v3068 = vsub.s32 %v3065, %v3067
      %v3069 = vrot.slane %v3055, %v3068
      %v3070 = vcombine.high %v3062, %v3062
      %v3071 = vcombine.high %v3069, %v3069
      %v3072 = vcombine.high %v2866, %v2866
      %v3074 = vunpack.c.l.s4 1983009808
      %v3075 = vunpack.c.0.s8 %v3074
      %v3076 = vlaneseq
      %v3077 = vshrl.u32 %v3076, 7
      %v3078 = vsub.s32 %v3075, %v3077
      %v3079 = vrot.slane %v2866, %v3078
      %v3081 = vunpack.c.l.s4 1983009808
      %v3082 = vunpack.c.0.s8 %v3081
      %v3083 = vlaneseq
      %v3084 = vshrl.u32 %v3083, 7
      %v3085 = vsub.s32 %v3082, %v3084
      %v3086 = vrot.slane %v3072, %v3085
      %v3087 = vcombine.high %v3079, %v3079
      %v3088 = vcombine.high %v3086, %v3086
      %v3089 = vcombine.high %v2867, %v2867
      %v3091 = vunpack.c.l.s4 1983009808
      %v3092 = vunpack.c.0.s8 %v3091
      %v3093 = vlaneseq
      %v3094 = vshrl.u32 %v3093, 7
      %v3095 = vsub.s32 %v3092, %v3094
      %v3096 = vrot.slane %v2867, %v3095
      %v3098 = vunpack.c.l.s4 1983009808
      %v3099 = vunpack.c.0.s8 %v3098
      %v3100 = vlaneseq
      %v3101 = vshrl.u32 %v3100, 7
      %v3102 = vsub.s32 %v3099, %v3101
      %v3103 = vrot.slane %v3089, %v3102
      %v3104 = vcombine.high %v3096, %v3096
      %v3105 = vcombine.high %v3103, %v3103
      %v3106 = vcombine.high %v2868, %v2868
      %v3108 = vunpack.c.l.s4 1983009808
      %v3109 = vunpack.c.0.s8 %v3108
      %v3110 = vlaneseq
      %v3111 = vshrl.u32 %v3110, 7
      %v3112 = vsub.s32 %v3109, %v3111
      %v3113 = vrot.slane %v2868, %v3112
      %v3115 = vunpack.c.l.s4 1983009808
      %v3116 = vunpack.c.0.s8 %v3115
      %v3117 = vlaneseq
      %v3118 = vshrl.u32 %v3117, 7
      %v3119 = vsub.s32 %v3116, %v3118
      %v3120 = vrot.slane %v3106, %v3119
      %v3121 = vcombine.high %v3113, %v3113
      %v3122 = vcombine.high %v3120, %v3120
      %v3123 = vcombine.high %v2869, %v2869
      %v3125 = vunpack.c.l.s4 1983009808
      %v3126 = vunpack.c.0.s8 %v3125
      %v3127 = vlaneseq
      %v3128 = vshrl.u32 %v3127, 7
      %v3129 = vsub.s32 %v3126, %v3128
      %v3130 = vrot.slane %v2869, %v3129
      %v3132 = vunpack.c.l.s4 1983009808
      %v3133 = vunpack.c.0.s8 %v3132
      %v3134 = vlaneseq
      %v3135 = vshrl.u32 %v3134, 7
      %v3136 = vsub.s32 %v3133, %v3135
      %v3137 = vrot.slane %v3123, %v3136
      %v3138 = vcombine.high %v3130, %v3130
      %v3139 = vcombine.high %v3137, %v3137
      %v3140 = vcombine.high %v2870, %v2870
      %v3142 = vunpack.c.l.s4 1983009808
      %v3143 = vunpack.c.0.s8 %v3142
      %v3144 = vlaneseq
      %v3145 = vshrl.u32 %v3144, 7
      %v3146 = vsub.s32 %v3143, %v3145
      %v3147 = vrot.slane %v2870, %v3146
      %v3149 = vunpack.c.l.s4 1983009808
      %v3150 = vunpack.c.0.s8 %v3149
      %v3151 = vlaneseq
      %v3152 = vshrl.u32 %v3151, 7
      %v3153 = vsub.s32 %v3150, %v3152
      %v3154 = vrot.slane %v3140, %v3153
      %v3155 = vcombine.high %v3147, %v3147
      %v3156 = vcombine.high %v3154, %v3154
      %v3157 = vcombine.high %v2871, %v2871
      %v3159 = vunpack.c.l.s4 1983009808
      %v3160 = vunpack.c.0.s8 %v3159
      %v3161 = vlaneseq
      %v3162 = vshrl.u32 %v3161, 7
      %v3163 = vsub.s32 %v3160, %v3162
      %v3164 = vrot.slane %v2871, %v3163
      %v3166 = vunpack.c.l.s4 1983009808
      %v3167 = vunpack.c.0.s8 %v3166
      %v3168 = vlaneseq
      %v3169 = vshrl.u32 %v3168, 7
      %v3170 = vsub.s32 %v3167, %v3169
      %v3171 = vrot.slane %v3157, %v3170
      %v3172 = vcombine.high %v3164, %v3164
      %v3173 = vcombine.high %v3171, %v3171
      %v3174 = vcombine.high %v2872, %v2872
      %v3176 = vunpack.c.l.s4 1983009808
      %v3177 = vunpack.c.0.s8 %v3176
      %v3178 = vlaneseq
      %v3179 = vshrl.u32 %v3178, 7
      %v3180 = vsub.s32 %v3177, %v3179
      %v3181 = vrot.slane %v2872, %v3180
      %v3183 = vunpack.c.l.s4 1983009808
      %v3184 = vunpack.c.0.s8 %v3183
      %v3185 = vlaneseq
      %v3186 = vshrl.u32 %v3185, 7
      %v3187 = vsub.s32 %v3184, %v3186
      %v3188 = vrot.slane %v3174, %v3187
      %v3189 = vcombine.high %v3181, %v3181
      %v3190 = vcombine.high %v3188, %v3188
      %v3191 = vcombine.high %v2873, %v2873
      %v3193 = vunpack.c.l.s4 1983009808
      %v3194 = vunpack.c.0.s8 %v3193
      %v3195 = vlaneseq
      %v3196 = vshrl.u32 %v3195, 7
      %v3197 = vsub.s32 %v3194, %v3196
      %v3198 = vrot.slane %v2873, %v3197
      %v3200 = vunpack.c.l.s4 1983009808
      %v3201 = vunpack.c.0.s8 %v3200
      %v3202 = vlaneseq
      %v3203 = vshrl.u32 %v3202, 7
      %v3204 = vsub.s32 %v3201, %v3203
      %v3205 = vrot.slane %v3191, %v3204
      %v3206 = vcombine.high %v3198, %v3198
      %v3207 = vcombine.high %v3205, %v3205
      %v3208 = vcombine.high %v2874, %v2874
      %v3210 = vunpack.c.l.s4 1983009808
      %v3211 = vunpack.c.0.s8 %v3210
      %v3212 = vlaneseq
      %v3213 = vshrl.u32 %v3212, 7
      %v3214 = vsub.s32 %v3211, %v3213
      %v3215 = vrot.slane %v2874, %v3214
      %v3217 = vunpack.c.l.s4 1983009808
      %v3218 = vunpack.c.0.s8 %v3217
      %v3219 = vlaneseq
      %v3220 = vshrl.u32 %v3219, 7
      %v3221 = vsub.s32 %v3218, %v3220
      %v3222 = vrot.slane %v3208, %v3221
      %v3223 = vcombine.high %v3215, %v3215
      %v3224 = vcombine.high %v3222, %v3222
      %v3225 = vcombine.high %v2875, %v2875
      %v3227 = vunpack.c.l.s4 1983009808
      %v3228 = vunpack.c.0.s8 %v3227
      %v3229 = vlaneseq
      %v3230 = vshrl.u32 %v3229, 7
      %v3231 = vsub.s32 %v3228, %v3230
      %v3232 = vrot.slane %v2875, %v3231
      %v3234 = vunpack.c.l.s4 1983009808
      %v3235 = vunpack.c.0.s8 %v3234
      %v3236 = vlaneseq
      %v3237 = vshrl.u32 %v3236, 7
      %v3238 = vsub.s32 %v3235, %v3237
      %v3239 = vrot.slane %v3225, %v3238
      %v3240 = vcombine.high %v3232, %v3232
      %v3241 = vcombine.high %v3239, %v3239
      %v3242 = vcombine.high %v2876, %v2876
      %v3244 = vunpack.c.l.s4 1983009808
      %v3245 = vunpack.c.0.s8 %v3244
      %v3246 = vlaneseq
      %v3247 = vshrl.u32 %v3246, 7
      %v3248 = vsub.s32 %v3245, %v3247
      %v3249 = vrot.slane %v2876, %v3248
      %v3251 = vunpack.c.l.s4 1983009808
      %v3252 = vunpack.c.0.s8 %v3251
      %v3253 = vlaneseq
      %v3254 = vshrl.u32 %v3253, 7
      %v3255 = vsub.s32 %v3252, %v3254
      %v3256 = vrot.slane %v3242, %v3255
      %v3257 = vcombine.high %v3249, %v3249
      %v3258 = vcombine.high %v3256, %v3256
      %v3259 = vcombine.high %v2877, %v2877
      %v3261 = vunpack.c.l.s4 1983009808
      %v3262 = vunpack.c.0.s8 %v3261
      %v3263 = vlaneseq
      %v3264 = vshrl.u32 %v3263, 7
      %v3265 = vsub.s32 %v3262, %v3264
      %v3266 = vrot.slane %v2877, %v3265
      %v3268 = vunpack.c.l.s4 1983009808
      %v3269 = vunpack.c.0.s8 %v3268
      %v3270 = vlaneseq
      %v3271 = vshrl.u32 %v3270, 7
      %v3272 = vsub.s32 %v3269, %v3271
      %v3273 = vrot.slane %v3259, %v3272
      %v3274 = vcombine.high %v3266, %v3266
      %v3275 = vcombine.high %v3273, %v3273
      %v3277 = vunpack.c.l.s4 1983009808
      %v3278 = vunpack.c.0.s8 %v3277
      %v3279 = vlaneseq
      %v3280 = vshrl.u32 %v3279, 7
      %v3281 = vsub.s32 %v3278, %v3280
      %v3282 = vrot.slane %v2878, %v3281
      %v3283 = vcombine.high %v3282, %v3282
      %s3284 = ssub.s32 %s304, 1
      %v3285 = vstv %s3284
      %v3286 = vadd.s32 %v3285, 1
      %v3287 = vadd.s32 %v3285, 2
      %v3288 = vadd.s32 %v3285, 3
      %v3289 = vadd.s32 %v3285, 4
      %v3290 = vadd.s32 %v3285, 5
      %v3291 = vadd.s32 %v3285, 6
      %v3292 = vadd.s32 %v3285, 7
      %v3293 = vadd.s32 %v3285, 8
      %v3294 = vadd.s32 %v3285, 9
      %v3295 = vlaneseq
      %v3296 = vshrl.u32 %v3295, 7
      %v3297 = vadd.s32 %v3296, 8
      %v3298 = vadd.s32 %v3296, 16
      %v3299 = vadd.s32 %v3296, 4294967295
      %v3300 = vadd.s32 %v3297, 4294967295
      %v3301 = vadd.s32 %v3298, 4294967295
      %vm3302 = vcmp.ge.s32.totalorder %v3285, 0
      %vm3303 = vcmp.ge.s32.totalorder %v3286, 0
      %vm3304 = vcmp.ge.s32.totalorder %v3287, 0
      %vm3305 = vcmp.ge.s32.totalorder %v3288, 0
      %vm3306 = vcmp.ge.s32.totalorder %v3289, 0
      %vm3307 = vcmp.ge.s32.totalorder %v3290, 0
      %vm3308 = vcmp.ge.s32.totalorder %v3291, 0
      %vm3309 = vcmp.ge.s32.totalorder %v3292, 0
      %vm3310 = vcmp.ge.s32.totalorder %v3293, 0
      %vm3311 = vcmp.ge.s32.totalorder %v3294, 0
      %vm3312 = vcmp.lt.s32.totalorder %v3285, 16
      %vm3313 = vcmp.lt.s32.totalorder %v3286, 16
      %vm3314 = vcmp.lt.s32.totalorder %v3287, 16
      %vm3315 = vcmp.lt.s32.totalorder %v3288, 16
      %vm3316 = vcmp.lt.s32.totalorder %v3289, 16
      %vm3317 = vcmp.lt.s32.totalorder %v3290, 16
      %vm3318 = vcmp.lt.s32.totalorder %v3291, 16
      %vm3319 = vcmp.lt.s32.totalorder %v3292, 16
      %vm3320 = vcmp.lt.s32.totalorder %v3293, 16
      %vm3321 = vcmp.lt.s32.totalorder %v3294, 16
      %vm3322 = vmand %vm3302, %vm3312
      %vm3323 = vmand %vm3303, %vm3313
      %vm3324 = vmand %vm3304, %vm3314
      %vm3325 = vmand %vm3305, %vm3315
      %vm3326 = vmand %vm3306, %vm3316
      %vm3327 = vmand %vm3307, %vm3317
      %vm3328 = vmand %vm3308, %vm3318
      %vm3329 = vmand %vm3309, %vm3319
      %vm3330 = vmand %vm3310, %vm3320
      %vm3331 = vmand %vm3311, %vm3321
      %vm3332 = vcmp.ge.s32.totalorder %v3299, 0
      %vm3333 = vcmp.ge.s32.totalorder %v3300, 0
      %vm3334 = vcmp.ge.s32.totalorder %v3301, 0
      %vm3335 = vmand %vm3322, %vm3332
      %vm3336 = vmand %vm3322, %vm3333
      %vm3337 = vmand %vm3322, %vm3334
      %vm3338 = vmand %vm3323, %vm3332
      %vm3339 = vmand %vm3323, %vm3333
      %vm3340 = vmand %vm3323, %vm3334
      %vm3341 = vmand %vm3324, %vm3332
      %vm3342 = vmand %vm3324, %vm3333
      %vm3343 = vmand %vm3324, %vm3334
      %vm3344 = vmand %vm3325, %vm3332
      %vm3345 = vmand %vm3325, %vm3333
      %vm3346 = vmand %vm3325, %vm3334
      %vm3347 = vmand %vm3326, %vm3332
      %vm3348 = vmand %vm3326, %vm3333
      %vm3349 = vmand %vm3326, %vm3334
      %vm3350 = vmand %vm3327, %vm3332
      %vm3351 = vmand %vm3327, %vm3333
      %vm3352 = vmand %vm3327, %vm3334
      %vm3353 = vmand %vm3328, %vm3332
      %vm3354 = vmand %vm3328, %vm3333
      %vm3355 = vmand %vm3328, %vm3334
      %vm3356 = vmand %vm3329, %vm3332
      %vm3357 = vmand %vm3329, %vm3333
      %vm3358 = vmand %vm3329, %vm3334
      %vm3359 = vmand %vm3330, %vm3332
      %vm3360 = vmand %vm3330, %vm3333
      %vm3361 = vmand %vm3330, %vm3334
      %vm3362 = vmand %vm3331, %vm3332
      %vm3363 = vmand %vm3331, %vm3333
      %vm3364 = vmand %vm3331, %vm3334
      %vm3365 = vcmp.lt.s32.totalorder %v3299, 16
      %vm3366 = vcmp.lt.s32.totalorder %v3300, 16
      %vm3367 = vcmp.lt.s32.totalorder %v3301, 16
      %vm3368 = vmand %vm3335, %vm3365
      %vm3369 = vmand %vm3336, %vm3366
      %vm3370 = vmand %vm3337, %vm3367
      %vm3371 = vmand %vm3338, %vm3365
      %vm3372 = vmand %vm3339, %vm3366
      %vm3373 = vmand %vm3340, %vm3367
      %vm3374 = vmand %vm3341, %vm3365
      %vm3375 = vmand %vm3342, %vm3366
      %vm3376 = vmand %vm3343, %vm3367
      %vm3377 = vmand %vm3344, %vm3365
      %vm3378 = vmand %vm3345, %vm3366
      %vm3379 = vmand %vm3346, %vm3367
      %vm3380 = vmand %vm3347, %vm3365
      %vm3381 = vmand %vm3348, %vm3366
      %vm3382 = vmand %vm3349, %vm3367
      %vm3383 = vmand %vm3350, %vm3365
      %vm3384 = vmand %vm3351, %vm3366
      %vm3385 = vmand %vm3352, %vm3367
      %vm3386 = vmand %vm3353, %vm3365
      %vm3387 = vmand %vm3354, %vm3366
      %vm3388 = vmand %vm3355, %vm3367
      %vm3389 = vmand %vm3356, %vm3365
      %vm3390 = vmand %vm3357, %vm3366
      %vm3391 = vmand %vm3358, %vm3367
      %vm3392 = vmand %vm3359, %vm3365
      %vm3393 = vmand %vm3360, %vm3366
      %vm3394 = vmand %vm3361, %vm3367
      %vm3395 = vmand %vm3362, %vm3365
      %vm3396 = vmand %vm3363, %vm3366
      %vm3397 = vmand %vm3364, %vm3367
      %v3398 = vsel %vm3368, 1, 0
      %v3399 = vsel %vm3369, 1, 0
      %v3400 = vsel %vm3370, 1, 0
      %v3401 = vsel %vm3371, 1, 0
      %v3402 = vsel %vm3372, 1, 0
      %v3403 = vsel %vm3373, 1, 0
      %v3404 = vsel %vm3374, 1, 0
      %v3405 = vsel %vm3375, 1, 0
      %v3406 = vsel %vm3376, 1, 0
      %v3407 = vsel %vm3377, 1, 0
      %v3408 = vsel %vm3378, 1, 0
      %v3409 = vsel %vm3379, 1, 0
      %v3410 = vsel %vm3380, 1, 0
      %v3411 = vsel %vm3381, 1, 0
      %v3412 = vsel %vm3382, 1, 0
      %v3413 = vsel %vm3383, 1, 0
      %v3414 = vsel %vm3384, 1, 0
      %v3415 = vsel %vm3385, 1, 0
      %v3416 = vsel %vm3386, 1, 0
      %v3417 = vsel %vm3387, 1, 0
      %v3418 = vsel %vm3388, 1, 0
      %v3419 = vsel %vm3389, 1, 0
      %v3420 = vsel %vm3390, 1, 0
      %v3421 = vsel %vm3391, 1, 0
      %v3422 = vsel %vm3392, 1, 0
      %v3423 = vsel %vm3393, 1, 0
      %v3424 = vsel %vm3394, 1, 0
      %v3425 = vsel %vm3395, 1, 0
      %v3426 = vsel %vm3396, 1, 0
      %v3427 = vsel %vm3397, 1, 0
      %vm3428 = vcmp.eq.s32.totalorder %v3398, 1
      %vm3429 = vcmp.eq.s32.totalorder %v3399, 1
      %vm3430 = vcmp.eq.s32.totalorder %v3400, 1
      %vm3431 = vcmp.eq.s32.totalorder %v3401, 1
      %vm3432 = vcmp.eq.s32.totalorder %v3402, 1
      %vm3433 = vcmp.eq.s32.totalorder %v3403, 1
      %vm3434 = vcmp.eq.s32.totalorder %v3404, 1
      %vm3435 = vcmp.eq.s32.totalorder %v3405, 1
      %vm3436 = vcmp.eq.s32.totalorder %v3406, 1
      %vm3437 = vcmp.eq.s32.totalorder %v3407, 1
      %vm3438 = vcmp.eq.s32.totalorder %v3408, 1
      %vm3439 = vcmp.eq.s32.totalorder %v3409, 1
      %vm3440 = vcmp.eq.s32.totalorder %v3410, 1
      %vm3441 = vcmp.eq.s32.totalorder %v3411, 1
      %vm3442 = vcmp.eq.s32.totalorder %v3412, 1
      %vm3443 = vcmp.eq.s32.totalorder %v3413, 1
      %vm3444 = vcmp.eq.s32.totalorder %v3414, 1
      %vm3445 = vcmp.eq.s32.totalorder %v3415, 1
      %vm3446 = vcmp.eq.s32.totalorder %v3416, 1
      %vm3447 = vcmp.eq.s32.totalorder %v3417, 1
      %vm3448 = vcmp.eq.s32.totalorder %v3418, 1
      %vm3449 = vcmp.eq.s32.totalorder %v3419, 1
      %vm3450 = vcmp.eq.s32.totalorder %v3420, 1
      %vm3451 = vcmp.eq.s32.totalorder %v3421, 1
      %vm3452 = vcmp.eq.s32.totalorder %v3422, 1
      %vm3453 = vcmp.eq.s32.totalorder %v3423, 1
      %vm3454 = vcmp.eq.s32.totalorder %v3424, 1
      %vm3455 = vcmp.eq.s32.totalorder %v3425, 1
      %vm3456 = vcmp.eq.s32.totalorder %v3426, 1
      %vm3457 = vcmp.eq.s32.totalorder %v3427, 1
      %v3458 = vcombine.low %v2909, %v2917
      %v3459 = vcombine.low %v2916, %v2918
      %v3461 = vunpack.c.l.s4 1983009808
      %v3462 = vunpack.c.0.s8 %v3461
      %v3463 = vlaneseq
      %v3464 = vshrl.u32 %v3463, 7
      %v3465 = vsub.s32 %v3462, %v3464
      %v3466 = vrot.slane %v3458, %v3465
      %v3468 = vunpack.c.l.s4 1983009808
      %v3469 = vunpack.c.0.s8 %v3468
      %v3470 = vlaneseq
      %v3471 = vshrl.u32 %v3470, 7
      %v3472 = vsub.s32 %v3469, %v3471
      %v3473 = vrot.slane %v3459, %v3472
      %v3474 = vcombine.low %v3466, %v3473
      %v3475 = vcombine.low %v2926, %v2934
      %v3476 = vcombine.low %v2933, %v2935
      %v3478 = vunpack.c.l.s4 1983009808
      %v3479 = vunpack.c.0.s8 %v3478
      %v3480 = vlaneseq
      %v3481 = vshrl.u32 %v3480, 7
      %v3482 = vsub.s32 %v3479, %v3481
      %v3483 = vrot.slane %v3475, %v3482
      %v3485 = vunpack.c.l.s4 1983009808
      %v3486 = vunpack.c.0.s8 %v3485
      %v3487 = vlaneseq
      %v3488 = vshrl.u32 %v3487, 7
      %v3489 = vsub.s32 %v3486, %v3488
      %v3490 = vrot.slane %v3476, %v3489
      %v3491 = vcombine.low %v3483, %v3490
      %v3493 = vunpack.c.l.s4 1983009808
      %v3494 = vunpack.c.0.s8 %v3493
      %v3495 = vlaneseq
      %v3496 = vshrl.u32 %v3495, 7
      %v3497 = vsub.s32 %v3494, %v3496
      %v3498 = vrot.slane %v2943, %v3497
      %v3499 = vcombine.low %v2951, %v2950
      %v3500 = vcombine.low %v2952, %v2960
      %v3502 = vunpack.c.l.s4 1983009808
      %v3503 = vunpack.c.0.s8 %v3502
      %v3504 = vlaneseq
      %v3505 = vshrl.u32 %v3504, 7
      %v3506 = vsub.s32 %v3503, %v3505
      %v3507 = vrot.slane %v3499, %v3506
      %v3509 = vunpack.c.l.s4 1983009808
      %v3510 = vunpack.c.0.s8 %v3509
      %v3511 = vlaneseq
      %v3512 = vshrl.u32 %v3511, 7
      %v3513 = vsub.s32 %v3510, %v3512
      %v3514 = vrot.slane %v3500, %v3513
      %v3515 = vcombine.low %v3507, %v3514
      %v3516 = vcombine.low %v2968, %v2967
      %v3517 = vcombine.low %v2969, %v2977
      %v3519 = vunpack.c.l.s4 1983009808
      %v3520 = vunpack.c.0.s8 %v3519
      %v3521 = vlaneseq
      %v3522 = vshrl.u32 %v3521, 7
      %v3523 = vsub.s32 %v3520, %v3522
      %v3524 = vrot.slane %v3516, %v3523
      %v3526 = vunpack.c.l.s4 1983009808
      %v3527 = vunpack.c.0.s8 %v3526
      %v3528 = vlaneseq
      %v3529 = vshrl.u32 %v3528, 7
      %v3530 = vsub.s32 %v3527, %v3529
      %v3531 = vrot.slane %v3517, %v3530
      %v3532 = vcombine.low %v3524, %v3531
      %v3534 = vunpack.c.l.s4 1983009808
      %v3535 = vunpack.c.0.s8 %v3534
      %v3536 = vlaneseq
      %v3537 = vshrl.u32 %v3536, 7
      %v3538 = vsub.s32 %v3535, %v3537
      %v3539 = vrot.slane %v2985, %v3538
      %v3540 = vcombine.low %v2984, %v2986
      %v3541 = vcombine.low %v2994, %v3002
      %v3543 = vunpack.c.l.s4 1983009808
      %v3544 = vunpack.c.0.s8 %v3543
      %v3545 = vlaneseq
      %v3546 = vshrl.u32 %v3545, 7
      %v3547 = vsub.s32 %v3544, %v3546
      %v3548 = vrot.slane %v3540, %v3547
      %v3550 = vunpack.c.l.s4 1983009808
      %v3551 = vunpack.c.0.s8 %v3550
      %v3552 = vlaneseq
      %v3553 = vshrl.u32 %v3552, 7
      %v3554 = vsub.s32 %v3551, %v3553
      %v3555 = vrot.slane %v3541, %v3554
      %v3556 = vcombine.low %v3548, %v3555
      %v3557 = vcombine.low %v3001, %v3003
      %v3558 = vcombine.low %v3011, %v3019
      %v3560 = vunpack.c.l.s4 1983009808
      %v3561 = vunpack.c.0.s8 %v3560
      %v3562 = vlaneseq
      %v3563 = vshrl.u32 %v3562, 7
      %v3564 = vsub.s32 %v3561, %v3563
      %v3565 = vrot.slane %v3557, %v3564
      %v3567 = vunpack.c.l.s4 1983009808
      %v3568 = vunpack.c.0.s8 %v3567
      %v3569 = vlaneseq
      %v3570 = vshrl.u32 %v3569, 7
      %v3571 = vsub.s32 %v3568, %v3570
      %v3572 = vrot.slane %v3558, %v3571
      %v3573 = vcombine.low %v3565, %v3572
      %v3575 = vunpack.c.l.s4 1983009808
      %v3576 = vunpack.c.0.s8 %v3575
      %v3577 = vlaneseq
      %v3578 = vshrl.u32 %v3577, 7
      %v3579 = vsub.s32 %v3576, %v3578
      %v3580 = vrot.slane %v3018, %v3579
      %v3581 = vcombine.low %v3020, %v3028
      %v3582 = vcombine.low %v3036, %v3035
      %v3584 = vunpack.c.l.s4 1983009808
      %v3585 = vunpack.c.0.s8 %v3584
      %v3586 = vlaneseq
      %v3587 = vshrl.u32 %v3586, 7
      %v3588 = vsub.s32 %v3585, %v3587
      %v3589 = vrot.slane %v3581, %v3588
      %v3591 = vunpack.c.l.s4 1983009808
      %v3592 = vunpack.c.0.s8 %v3591
      %v3593 = vlaneseq
      %v3594 = vshrl.u32 %v3593, 7
      %v3595 = vsub.s32 %v3592, %v3594
      %v3596 = vrot.slane %v3582, %v3595
      %v3597 = vcombine.low %v3589, %v3596
      %v3598 = vcombine.low %v3037, %v3045
      %v3599 = vcombine.low %v3053, %v3052
      %v3601 = vunpack.c.l.s4 1983009808
      %v3602 = vunpack.c.0.s8 %v3601
      %v3603 = vlaneseq
      %v3604 = vshrl.u32 %v3603, 7
      %v3605 = vsub.s32 %v3602, %v3604
      %v3606 = vrot.slane %v3598, %v3605
      %v3608 = vunpack.c.l.s4 1983009808
      %v3609 = vunpack.c.0.s8 %v3608
      %v3610 = vlaneseq
      %v3611 = vshrl.u32 %v3610, 7
      %v3612 = vsub.s32 %v3609, %v3611
      %v3613 = vrot.slane %v3599, %v3612
      %v3614 = vcombine.low %v3606, %v3613
      %v3616 = vunpack.c.l.s4 1983009808
      %v3617 = vunpack.c.0.s8 %v3616
      %v3618 = vlaneseq
      %v3619 = vshrl.u32 %v3618, 7
      %v3620 = vsub.s32 %v3617, %v3619
      %v3621 = vrot.slane %v3054, %v3620
      %v3622 = vcombine.low %v3062, %v3070
      %v3623 = vcombine.low %v3069, %v3071
      %v3625 = vunpack.c.l.s4 1983009808
      %v3626 = vunpack.c.0.s8 %v3625
      %v3627 = vlaneseq
      %v3628 = vshrl.u32 %v3627, 7
      %v3629 = vsub.s32 %v3626, %v3628
      %v3630 = vrot.slane %v3622, %v3629
      %v3632 = vunpack.c.l.s4 1983009808
      %v3633 = vunpack.c.0.s8 %v3632
      %v3634 = vlaneseq
      %v3635 = vshrl.u32 %v3634, 7
      %v3636 = vsub.s32 %v3633, %v3635
      %v3637 = vrot.slane %v3623, %v3636
      %v3638 = vcombine.low %v3630, %v3637
      %v3639 = vcombine.low %v3079, %v3087
      %v3640 = vcombine.low %v3086, %v3088
      %v3642 = vunpack.c.l.s4 1983009808
      %v3643 = vunpack.c.0.s8 %v3642
      %v3644 = vlaneseq
      %v3645 = vshrl.u32 %v3644, 7
      %v3646 = vsub.s32 %v3643, %v3645
      %v3647 = vrot.slane %v3639, %v3646
      %v3649 = vunpack.c.l.s4 1983009808
      %v3650 = vunpack.c.0.s8 %v3649
      %v3651 = vlaneseq
      %v3652 = vshrl.u32 %v3651, 7
      %v3653 = vsub.s32 %v3650, %v3652
      %v3654 = vrot.slane %v3640, %v3653
      %v3655 = vcombine.low %v3647, %v3654
      %v3657 = vunpack.c.l.s4 1983009808
      %v3658 = vunpack.c.0.s8 %v3657
      %v3659 = vlaneseq
      %v3660 = vshrl.u32 %v3659, 7
      %v3661 = vsub.s32 %v3658, %v3660
      %v3662 = vrot.slane %v3096, %v3661
      %v3663 = vcombine.low %v3104, %v3103
      %v3664 = vcombine.low %v3105, %v3113
      %v3666 = vunpack.c.l.s4 1983009808
      %v3667 = vunpack.c.0.s8 %v3666
      %v3668 = vlaneseq
      %v3669 = vshrl.u32 %v3668, 7
      %v3670 = vsub.s32 %v3667, %v3669
      %v3671 = vrot.slane %v3663, %v3670
      %v3673 = vunpack.c.l.s4 1983009808
      %v3674 = vunpack.c.0.s8 %v3673
      %v3675 = vlaneseq
      %v3676 = vshrl.u32 %v3675, 7
      %v3677 = vsub.s32 %v3674, %v3676
      %v3678 = vrot.slane %v3664, %v3677
      %v3679 = vcombine.low %v3671, %v3678
      %v3680 = vcombine.low %v3121, %v3120
      %v3681 = vcombine.low %v3122, %v3130
      %v3683 = vunpack.c.l.s4 1983009808
      %v3684 = vunpack.c.0.s8 %v3683
      %v3685 = vlaneseq
      %v3686 = vshrl.u32 %v3685, 7
      %v3687 = vsub.s32 %v3684, %v3686
      %v3688 = vrot.slane %v3680, %v3687
      %v3690 = vunpack.c.l.s4 1983009808
      %v3691 = vunpack.c.0.s8 %v3690
      %v3692 = vlaneseq
      %v3693 = vshrl.u32 %v3692, 7
      %v3694 = vsub.s32 %v3691, %v3693
      %v3695 = vrot.slane %v3681, %v3694
      %v3696 = vcombine.low %v3688, %v3695
      %v3698 = vunpack.c.l.s4 1983009808
      %v3699 = vunpack.c.0.s8 %v3698
      %v3700 = vlaneseq
      %v3701 = vshrl.u32 %v3700, 7
      %v3702 = vsub.s32 %v3699, %v3701
      %v3703 = vrot.slane %v3138, %v3702
      %v3704 = vcombine.low %v3137, %v3139
      %v3705 = vcombine.low %v3147, %v3155
      %v3707 = vunpack.c.l.s4 1983009808
      %v3708 = vunpack.c.0.s8 %v3707
      %v3709 = vlaneseq
      %v3710 = vshrl.u32 %v3709, 7
      %v3711 = vsub.s32 %v3708, %v3710
      %v3712 = vrot.slane %v3704, %v3711
      %v3714 = vunpack.c.l.s4 1983009808
      %v3715 = vunpack.c.0.s8 %v3714
      %v3716 = vlaneseq
      %v3717 = vshrl.u32 %v3716, 7
      %v3718 = vsub.s32 %v3715, %v3717
      %v3719 = vrot.slane %v3705, %v3718
      %v3720 = vcombine.low %v3712, %v3719
      %v3721 = vcombine.low %v3154, %v3156
      %v3722 = vcombine.low %v3164, %v3172
      %v3724 = vunpack.c.l.s4 1983009808
      %v3725 = vunpack.c.0.s8 %v3724
      %v3726 = vlaneseq
      %v3727 = vshrl.u32 %v3726, 7
      %v3728 = vsub.s32 %v3725, %v3727
      %v3729 = vrot.slane %v3721, %v3728
      %v3731 = vunpack.c.l.s4 1983009808
      %v3732 = vunpack.c.0.s8 %v3731
      %v3733 = vlaneseq
      %v3734 = vshrl.u32 %v3733, 7
      %v3735 = vsub.s32 %v3732, %v3734
      %v3736 = vrot.slane %v3722, %v3735
      %v3737 = vcombine.low %v3729, %v3736
      %v3739 = vunpack.c.l.s4 1983009808
      %v3740 = vunpack.c.0.s8 %v3739
      %v3741 = vlaneseq
      %v3742 = vshrl.u32 %v3741, 7
      %v3743 = vsub.s32 %v3740, %v3742
      %v3744 = vrot.slane %v3171, %v3743
      %v3745 = vcombine.low %v3173, %v3181
      %v3746 = vcombine.low %v3189, %v3188
      %v3748 = vunpack.c.l.s4 1983009808
      %v3749 = vunpack.c.0.s8 %v3748
      %v3750 = vlaneseq
      %v3751 = vshrl.u32 %v3750, 7
      %v3752 = vsub.s32 %v3749, %v3751
      %v3753 = vrot.slane %v3745, %v3752
      %v3755 = vunpack.c.l.s4 1983009808
      %v3756 = vunpack.c.0.s8 %v3755
      %v3757 = vlaneseq
      %v3758 = vshrl.u32 %v3757, 7
      %v3759 = vsub.s32 %v3756, %v3758
      %v3760 = vrot.slane %v3746, %v3759
      %v3761 = vcombine.low %v3753, %v3760
      %v3762 = vcombine.low %v3190, %v3198
      %v3763 = vcombine.low %v3206, %v3205
      %v3765 = vunpack.c.l.s4 1983009808
      %v3766 = vunpack.c.0.s8 %v3765
      %v3767 = vlaneseq
      %v3768 = vshrl.u32 %v3767, 7
      %v3769 = vsub.s32 %v3766, %v3768
      %v3770 = vrot.slane %v3762, %v3769
      %v3772 = vunpack.c.l.s4 1983009808
      %v3773 = vunpack.c.0.s8 %v3772
      %v3774 = vlaneseq
      %v3775 = vshrl.u32 %v3774, 7
      %v3776 = vsub.s32 %v3773, %v3775
      %v3777 = vrot.slane %v3763, %v3776
      %v3778 = vcombine.low %v3770, %v3777
      %v3780 = vunpack.c.l.s4 1983009808
      %v3781 = vunpack.c.0.s8 %v3780
      %v3782 = vlaneseq
      %v3783 = vshrl.u32 %v3782, 7
      %v3784 = vsub.s32 %v3781, %v3783
      %v3785 = vrot.slane %v3207, %v3784
      %v3786 = vcombine.low %v3215, %v3223
      %v3787 = vcombine.low %v3222, %v3224
      %v3789 = vunpack.c.l.s4 1983009808
      %v3790 = vunpack.c.0.s8 %v3789
      %v3791 = vlaneseq
      %v3792 = vshrl.u32 %v3791, 7
      %v3793 = vsub.s32 %v3790, %v3792
      %v3794 = vrot.slane %v3786, %v3793
      %v3796 = vunpack.c.l.s4 1983009808
      %v3797 = vunpack.c.0.s8 %v3796
      %v3798 = vlaneseq
      %v3799 = vshrl.u32 %v3798, 7
      %v3800 = vsub.s32 %v3797, %v3799
      %v3801 = vrot.slane %v3787, %v3800
      %v3802 = vcombine.low %v3794, %v3801
      %v3803 = vcombine.low %v3232, %v3240
      %v3804 = vcombine.low %v3239, %v3241
      %v3806 = vunpack.c.l.s4 1983009808
      %v3807 = vunpack.c.0.s8 %v3806
      %v3808 = vlaneseq
      %v3809 = vshrl.u32 %v3808, 7
      %v3810 = vsub.s32 %v3807, %v3809
      %v3811 = vrot.slane %v3803, %v3810
      %v3813 = vunpack.c.l.s4 1983009808
      %v3814 = vunpack.c.0.s8 %v3813
      %v3815 = vlaneseq
      %v3816 = vshrl.u32 %v3815, 7
      %v3817 = vsub.s32 %v3814, %v3816
      %v3818 = vrot.slane %v3804, %v3817
      %v3819 = vcombine.low %v3811, %v3818
      %v3821 = vunpack.c.l.s4 1983009808
      %v3822 = vunpack.c.0.s8 %v3821
      %v3823 = vlaneseq
      %v3824 = vshrl.u32 %v3823, 7
      %v3825 = vsub.s32 %v3822, %v3824
      %v3826 = vrot.slane %v3249, %v3825
      %v3827 = vcombine.low %v3257, %v3256
      %v3828 = vcombine.low %v3258, %v3266
      %v3830 = vunpack.c.l.s4 1983009808
      %v3831 = vunpack.c.0.s8 %v3830
      %v3832 = vlaneseq
      %v3833 = vshrl.u32 %v3832, 7
      %v3834 = vsub.s32 %v3831, %v3833
      %v3835 = vrot.slane %v3827, %v3834
      %v3837 = vunpack.c.l.s4 1983009808
      %v3838 = vunpack.c.0.s8 %v3837
      %v3839 = vlaneseq
      %v3840 = vshrl.u32 %v3839, 7
      %v3841 = vsub.s32 %v3838, %v3840
      %v3842 = vrot.slane %v3828, %v3841
      %v3843 = vcombine.low %v3835, %v3842
      %v3844 = vcombine.low %v3274, %v3273
      %v3845 = vcombine.low %v3275, %v3282
      %v3847 = vunpack.c.l.s4 1983009808
      %v3848 = vunpack.c.0.s8 %v3847
      %v3849 = vlaneseq
      %v3850 = vshrl.u32 %v3849, 7
      %v3851 = vsub.s32 %v3848, %v3850
      %v3852 = vrot.slane %v3844, %v3851
      %v3854 = vunpack.c.l.s4 1983009808
      %v3855 = vunpack.c.0.s8 %v3854
      %v3856 = vlaneseq
      %v3857 = vshrl.u32 %v3856, 7
      %v3858 = vsub.s32 %v3855, %v3857
      %v3859 = vrot.slane %v3845, %v3858
      %v3860 = vcombine.low %v3852, %v3859
      %v3862 = vunpack.c.l.s4 1983009808
      %v3863 = vunpack.c.0.s8 %v3862
      %v3864 = vlaneseq
      %v3865 = vshrl.u32 %v3864, 7
      %v3866 = vsub.s32 %v3863, %v3865
      %v3867 = vrot.slane %v3283, %v3866
      %v3898 = vsel %vm3428, %v3474, 0.0
      %v3899 = vsel %vm3429, %v3491, 0.0
      %v3900 = vsel %vm3430, %v3498, 0.0
      %v3901 = vsel %vm3431, %v3515, 0.0
      %v3902 = vsel %vm3432, %v3532, 0.0
      %v3903 = vsel %vm3433, %v3539, 0.0
      %v3904 = vsel %vm3434, %v3556, 0.0
      %v3905 = vsel %vm3435, %v3573, 0.0
      %v3906 = vsel %vm3436, %v3580, 0.0
      %v3907 = vsel %vm3437, %v3597, 0.0
      %v3908 = vsel %vm3438, %v3614, 0.0
      %v3909 = vsel %vm3439, %v3621, 0.0
      %v3910 = vsel %vm3440, %v3638, 0.0
      %v3911 = vsel %vm3441, %v3655, 0.0
      %v3912 = vsel %vm3442, %v3662, 0.0
      %v3913 = vsel %vm3443, %v3679, 0.0
      %v3914 = vsel %vm3444, %v3696, 0.0
      %v3915 = vsel %vm3445, %v3703, 0.0
      %v3916 = vsel %vm3446, %v3720, 0.0
      %v3917 = vsel %vm3447, %v3737, 0.0
      %v3918 = vsel %vm3448, %v3744, 0.0
      %v3919 = vsel %vm3449, %v3761, 0.0
      %v3920 = vsel %vm3450, %v3778, 0.0
      %v3921 = vsel %vm3451, %v3785, 0.0
      %v3922 = vsel %vm3452, %v3802, 0.0
      %v3923 = vsel %vm3453, %v3819, 0.0
      %v3924 = vsel %vm3454, %v3826, 0.0
      %v3925 = vsel %vm3455, %v3843, 0.0
      %v3926 = vsel %vm3456, %v3860, 0.0
      %v3927 = vsel %vm3457, %v3867, 0.0
      %vm3952 = vcmask 1046528
      %v3953 = vrot.slane %v3898, 1
      %v3954 = vrot.slane %v3899, 1
      %v3955 = vsel %vm3952, %v3953, %v3954
      %v3956 = vrot.slane %v3900, 1
      %v3957 = vsel %vm3952, %v3954, %v3956
      %v3958 = vrot.slane %v3901, 1
      %v3959 = vrot.slane %v3902, 1
      %v3960 = vsel %vm3952, %v3958, %v3959
      %v3961 = vrot.slane %v3903, 1
      %v3962 = vsel %vm3952, %v3959, %v3961
      %v3963 = vrot.slane %v3904, 1
      %v3964 = vrot.slane %v3905, 1
      %v3965 = vsel %vm3952, %v3963, %v3964
      %v3966 = vrot.slane %v3906, 1
      %v3967 = vsel %vm3952, %v3964, %v3966
      %v3968 = vrot.slane %v3907, 1
      %v3969 = vrot.slane %v3908, 1
      %v3970 = vsel %vm3952, %v3968, %v3969
      %v3971 = vrot.slane %v3909, 1
      %v3972 = vsel %vm3952, %v3969, %v3971
      %v3973 = vrot.slane %v3910, 1
      %v3974 = vrot.slane %v3911, 1
      %v3975 = vsel %vm3952, %v3973, %v3974
      %v3976 = vrot.slane %v3912, 1
      %v3977 = vsel %vm3952, %v3974, %v3976
      %v3978 = vrot.slane %v3913, 1
      %v3979 = vrot.slane %v3914, 1
      %v3980 = vsel %vm3952, %v3978, %v3979
      %v3981 = vrot.slane %v3915, 1
      %v3982 = vsel %vm3952, %v3979, %v3981
      %v3983 = vrot.slane %v3916, 1
      %v3984 = vrot.slane %v3917, 1
      %v3985 = vsel %vm3952, %v3983, %v3984
      %v3986 = vrot.slane %v3918, 1
      %v3987 = vsel %vm3952, %v3984, %v3986
      %v3988 = vrot.slane %v3919, 1
      %v3989 = vrot.slane %v3920, 1
      %v3990 = vsel %vm3952, %v3988, %v3989
      %v3991 = vrot.slane %v3921, 1
      %v3992 = vsel %vm3952, %v3989, %v3991
      %3993 = vrot.lane.b32.xlu0 %v3955, 4
      %v3994 = vpop.permute.xlu0 %3993
      %3995 = vrot.lane.b32.xlu0 %v3957, 4
      %v3996 = vpop.permute.xlu0 %3995
      %3997 = vrot.lane.b32.xlu0 %v3960, 4
      %v3998 = vpop.permute.xlu0 %3997
      %3999 = vrot.lane.b32.xlu0 %v3962, 4
      %v4000 = vpop.permute.xlu0 %3999
      %4001 = vrot.lane.b32.xlu0 %v3965, 4
      %v4002 = vpop.permute.xlu0 %4001
      %4003 = vrot.lane.b32.xlu0 %v3967, 4
      %v4004 = vpop.permute.xlu0 %4003
      %4005 = vrot.lane.b32.xlu0 %v3970, 4
      %v4006 = vpop.permute.xlu0 %4005
      %4007 = vrot.lane.b32.xlu0 %v3972, 4
      %v4008 = vpop.permute.xlu0 %4007
      %4009 = vrot.lane.b32.xlu0 %v3975, 4
      %v4010 = vpop.permute.xlu0 %4009
      %4011 = vrot.lane.b32.xlu0 %v3977, 4
      %v4012 = vpop.permute.xlu0 %4011
      %4013 = vrot.lane.b32.xlu0 %v3980, 4
      %v4014 = vpop.permute.xlu0 %4013
      %4015 = vrot.lane.b32.xlu0 %v3982, 4
      %v4016 = vpop.permute.xlu0 %4015
      %4017 = vrot.lane.b32.xlu0 %v3985, 4
      %v4018 = vpop.permute.xlu0 %4017
      %4019 = vrot.lane.b32.xlu0 %v3987, 4
      %v4020 = vpop.permute.xlu0 %4019
      %4021 = vrot.lane.b32.xlu0 %v3990, 4
      %v4022 = vpop.permute.xlu0 %4021
      %4023 = vrot.lane.b32.xlu0 %v3992, 4
      %v4024 = vpop.permute.xlu0 %4023
      %vm4041 = vcmask 1045504
      %v4042 = vrot.slane %v3898, 2
      %v4043 = vrot.slane %v3899, 2
      %v4044 = vsel %vm4041, %v4042, %v4043
      %v4045 = vrot.slane %v3900, 2
      %v4046 = vsel %vm4041, %v4043, %v4045
      %v4047 = vrot.slane %v3901, 2
      %v4048 = vrot.slane %v3902, 2
      %v4049 = vsel %vm4041, %v4047, %v4048
      %v4050 = vrot.slane %v3903, 2
      %v4051 = vsel %vm4041, %v4048, %v4050
      %v4052 = vrot.slane %v3904, 2
      %v4053 = vrot.slane %v3905, 2
      %v4054 = vsel %vm4041, %v4052, %v4053
      %v4055 = vrot.slane %v3906, 2
      %v4056 = vsel %vm4041, %v4053, %v4055
      %v4057 = vrot.slane %v3907, 2
      %v4058 = vrot.slane %v3908, 2
      %v4059 = vsel %vm4041, %v4057, %v4058
      %v4060 = vrot.slane %v3909, 2
      %v4061 = vsel %vm4041, %v4058, %v4060
      %v4062 = vrot.slane %v3910, 2
      %v4063 = vrot.slane %v3911, 2
      %v4064 = vsel %vm4041, %v4062, %v4063
      %v4065 = vrot.slane %v3912, 2
      %v4066 = vsel %vm4041, %v4063, %v4065
      %v4067 = vrot.slane %v3913, 2
      %v4068 = vrot.slane %v3914, 2
      %v4069 = vsel %vm4041, %v4067, %v4068
      %v4070 = vrot.slane %v3915, 2
      %v4071 = vsel %vm4041, %v4068, %v4070
      %v4072 = vrot.slane %v3916, 2
      %v4073 = vrot.slane %v3917, 2
      %v4074 = vsel %vm4041, %v4072, %v4073
      %v4075 = vrot.slane %v3918, 2
      %v4076 = vsel %vm4041, %v4073, %v4075
      %v4077 = vrot.slane %v3919, 2
      %v4078 = vrot.slane %v3920, 2
      %v4079 = vsel %vm4041, %v4077, %v4078
      %v4080 = vrot.slane %v3921, 2
      %v4081 = vsel %vm4041, %v4078, %v4080
      %4082 = vrot.lane.b32.xlu0 %v4044, 8
      %v4083 = vpop.permute.xlu0 %4082
      %4084 = vrot.lane.b32.xlu0 %v4046, 8
      %v4085 = vpop.permute.xlu0 %4084
      %4086 = vrot.lane.b32.xlu0 %v4049, 8
      %v4087 = vpop.permute.xlu0 %4086
      %4088 = vrot.lane.b32.xlu0 %v4051, 8
      %v4089 = vpop.permute.xlu0 %4088
      %4090 = vrot.lane.b32.xlu0 %v4054, 8
      %v4091 = vpop.permute.xlu0 %4090
      %4092 = vrot.lane.b32.xlu0 %v4056, 8
      %v4093 = vpop.permute.xlu0 %4092
      %4094 = vrot.lane.b32.xlu0 %v4059, 8
      %v4095 = vpop.permute.xlu0 %4094
      %4096 = vrot.lane.b32.xlu0 %v4061, 8
      %v4097 = vpop.permute.xlu0 %4096
      %4098 = vrot.lane.b32.xlu0 %v4064, 8
      %v4099 = vpop.permute.xlu0 %4098
      %4100 = vrot.lane.b32.xlu0 %v4066, 8
      %v4101 = vpop.permute.xlu0 %4100
      %4102 = vrot.lane.b32.xlu0 %v4069, 8
      %v4103 = vpop.permute.xlu0 %4102
      %4104 = vrot.lane.b32.xlu0 %v4071, 8
      %v4105 = vpop.permute.xlu0 %4104
      %4106 = vrot.lane.b32.xlu0 %v4074, 8
      %v4107 = vpop.permute.xlu0 %4106
      %4108 = vrot.lane.b32.xlu0 %v4076, 8
      %v4109 = vpop.permute.xlu0 %4108
      %4110 = vrot.lane.b32.xlu0 %v4079, 8
      %v4111 = vpop.permute.xlu0 %4110
      %4112 = vrot.lane.b32.xlu0 %v4081, 8
      %v4113 = vpop.permute.xlu0 %4112
      %4132 = vrot.lane.b32.xlu0 %v3901, 12
      %v4133 = vpop.permute.xlu0 %4132
      %4134 = vrot.lane.b32.xlu0 %v3902, 12
      %v4135 = vpop.permute.xlu0 %4134
      %4136 = vrot.lane.b32.xlu0 %v3904, 12
      %v4137 = vpop.permute.xlu0 %4136
      %4138 = vrot.lane.b32.xlu0 %v3905, 12
      %v4139 = vpop.permute.xlu0 %4138
      %4140 = vrot.lane.b32.xlu0 %v3907, 12
      %v4141 = vpop.permute.xlu0 %4140
      %4142 = vrot.lane.b32.xlu0 %v3908, 12
      %v4143 = vpop.permute.xlu0 %4142
      %4144 = vrot.lane.b32.xlu0 %v3910, 12
      %v4145 = vpop.permute.xlu0 %4144
      %4146 = vrot.lane.b32.xlu0 %v3911, 12
      %v4147 = vpop.permute.xlu0 %4146
      %4148 = vrot.lane.b32.xlu0 %v3913, 12
      %v4149 = vpop.permute.xlu0 %4148
      %4150 = vrot.lane.b32.xlu0 %v3914, 12
      %v4151 = vpop.permute.xlu0 %4150
      %4152 = vrot.lane.b32.xlu0 %v3916, 12
      %v4153 = vpop.permute.xlu0 %4152
      %4154 = vrot.lane.b32.xlu0 %v3917, 12
      %v4155 = vpop.permute.xlu0 %4154
      %4156 = vrot.lane.b32.xlu0 %v3919, 12
      %v4157 = vpop.permute.xlu0 %4156
      %4158 = vrot.lane.b32.xlu0 %v3920, 12
      %v4159 = vpop.permute.xlu0 %4158
      %4160 = vrot.lane.b32.xlu0 %v3922, 12
      %v4161 = vpop.permute.xlu0 %4160
      %4162 = vrot.lane.b32.xlu0 %v3923, 12
      %v4163 = vpop.permute.xlu0 %4162
      %v4181 = vrot.slane %v3922, 1
      %v4182 = vrot.slane %v3923, 1
      %v4183 = vsel %vm3952, %v4181, %v4182
      %v4184 = vrot.slane %v3924, 1
      %v4185 = vsel %vm3952, %v4182, %v4184
      %4186 = vrot.lane.b32.xlu0 %v3960, 16
      %v4187 = vpop.permute.xlu0 %4186
      %4188 = vrot.lane.b32.xlu0 %v3962, 16
      %v4189 = vpop.permute.xlu0 %4188
      %4190 = vrot.lane.b32.xlu0 %v3965, 16
      %v4191 = vpop.permute.xlu0 %4190
      %4192 = vrot.lane.b32.xlu0 %v3967, 16
      %v4193 = vpop.permute.xlu0 %4192
      %4194 = vrot.lane.b32.xlu0 %v3970, 16
      %v4195 = vpop.permute.xlu0 %4194
      %4196 = vrot.lane.b32.xlu0 %v3972, 16
      %v4197 = vpop.permute.xlu0 %4196
      %4198 = vrot.lane.b32.xlu0 %v3975, 16
      %v4199 = vpop.permute.xlu0 %4198
      %4200 = vrot.lane.b32.xlu0 %v3977, 16
      %v4201 = vpop.permute.xlu0 %4200
      %4202 = vrot.lane.b32.xlu0 %v3980, 16
      %v4203 = vpop.permute.xlu0 %4202
      %4204 = vrot.lane.b32.xlu0 %v3982, 16
      %v4205 = vpop.permute.xlu0 %4204
      %4206 = vrot.lane.b32.xlu0 %v3985, 16
      %v4207 = vpop.permute.xlu0 %4206
      %4208 = vrot.lane.b32.xlu0 %v3987, 16
      %v4209 = vpop.permute.xlu0 %4208
      %4210 = vrot.lane.b32.xlu0 %v3990, 16
      %v4211 = vpop.permute.xlu0 %4210
      %4212 = vrot.lane.b32.xlu0 %v3992, 16
      %v4213 = vpop.permute.xlu0 %4212
      %4214 = vrot.lane.b32.xlu0 %v4183, 16
      %v4215 = vpop.permute.xlu0 %4214
      %4216 = vrot.lane.b32.xlu0 %v4185, 16
      %v4217 = vpop.permute.xlu0 %4216
      %v4234 = vrot.slane %v3922, 2
      %v4235 = vrot.slane %v3923, 2
      %v4236 = vsel %vm4041, %v4234, %v4235
      %v4237 = vrot.slane %v3924, 2
      %v4238 = vsel %vm4041, %v4235, %v4237
      %4239 = vrot.lane.b32.xlu0 %v4049, 20
      %v4240 = vpop.permute.xlu0 %4239
      %4241 = vrot.lane.b32.xlu0 %v4051, 20
      %v4242 = vpop.permute.xlu0 %4241
      %4243 = vrot.lane.b32.xlu0 %v4054, 20
      %v4244 = vpop.permute.xlu0 %4243
      %4245 = vrot.lane.b32.xlu0 %v4056, 20
      %v4246 = vpop.permute.xlu0 %4245
      %4247 = vrot.lane.b32.xlu0 %v4059, 20
      %v4248 = vpop.permute.xlu0 %4247
      %4249 = vrot.lane.b32.xlu0 %v4061, 20
      %v4250 = vpop.permute.xlu0 %4249
      %4251 = vrot.lane.b32.xlu0 %v4064, 20
      %v4252 = vpop.permute.xlu0 %4251
      %4253 = vrot.lane.b32.xlu0 %v4066, 20
      %v4254 = vpop.permute.xlu0 %4253
      %4255 = vrot.lane.b32.xlu0 %v4069, 20
      %v4256 = vpop.permute.xlu0 %4255
      %4257 = vrot.lane.b32.xlu0 %v4071, 20
      %v4258 = vpop.permute.xlu0 %4257
      %4259 = vrot.lane.b32.xlu0 %v4074, 20
      %v4260 = vpop.permute.xlu0 %4259
      %4261 = vrot.lane.b32.xlu0 %v4076, 20
      %v4262 = vpop.permute.xlu0 %4261
      %4263 = vrot.lane.b32.xlu0 %v4079, 20
      %v4264 = vpop.permute.xlu0 %4263
      %4265 = vrot.lane.b32.xlu0 %v4081, 20
      %v4266 = vpop.permute.xlu0 %4265
      %4267 = vrot.lane.b32.xlu0 %v4236, 20
      %v4268 = vpop.permute.xlu0 %4267
      %4269 = vrot.lane.b32.xlu0 %v4238, 20
      %v4270 = vpop.permute.xlu0 %4269
      %4289 = vrot.lane.b32.xlu0 %v3904, 24
      %v4290 = vpop.permute.xlu0 %4289
      %4291 = vrot.lane.b32.xlu0 %v3905, 24
      %v4292 = vpop.permute.xlu0 %4291
      %4293 = vrot.lane.b32.xlu0 %v3907, 24
      %v4294 = vpop.permute.xlu0 %4293
      %4295 = vrot.lane.b32.xlu0 %v3908, 24
      %v4296 = vpop.permute.xlu0 %4295
      %4297 = vrot.lane.b32.xlu0 %v3910, 24
      %v4298 = vpop.permute.xlu0 %4297
      %4299 = vrot.lane.b32.xlu0 %v3911, 24
      %v4300 = vpop.permute.xlu0 %4299
      %4301 = vrot.lane.b32.xlu0 %v3913, 24
      %v4302 = vpop.permute.xlu0 %4301
      %4303 = vrot.lane.b32.xlu0 %v3914, 24
      %v4304 = vpop.permute.xlu0 %4303
      %4305 = vrot.lane.b32.xlu0 %v3916, 24
      %v4306 = vpop.permute.xlu0 %4305
      %4307 = vrot.lane.b32.xlu0 %v3917, 24
      %v4308 = vpop.permute.xlu0 %4307
      %4309 = vrot.lane.b32.xlu0 %v3919, 24
      %v4310 = vpop.permute.xlu0 %4309
      %4311 = vrot.lane.b32.xlu0 %v3920, 24
      %v4312 = vpop.permute.xlu0 %4311
      %4313 = vrot.lane.b32.xlu0 %v3922, 24
      %v4314 = vpop.permute.xlu0 %4313
      %4315 = vrot.lane.b32.xlu0 %v3923, 24
      %v4316 = vpop.permute.xlu0 %4315
      %4317 = vrot.lane.b32.xlu0 %v3925, 24
      %v4318 = vpop.permute.xlu0 %4317
      %4319 = vrot.lane.b32.xlu0 %v3926, 24
      %v4320 = vpop.permute.xlu0 %4319
      %v4338 = vrot.slane %v3925, 1
      %v4339 = vrot.slane %v3926, 1
      %v4340 = vsel %vm3952, %v4338, %v4339
      %v4341 = vrot.slane %v3927, 1
      %v4342 = vsel %vm3952, %v4339, %v4341
      %4343 = vrot.lane.b32.xlu0 %v3965, 28
      %v4344 = vpop.permute.xlu0 %4343
      %4345 = vrot.lane.b32.xlu0 %v3967, 28
      %v4346 = vpop.permute.xlu0 %4345
      %4347 = vrot.lane.b32.xlu0 %v3970, 28
      %v4348 = vpop.permute.xlu0 %4347
      %4349 = vrot.lane.b32.xlu0 %v3972, 28
      %v4350 = vpop.permute.xlu0 %4349
      %4351 = vrot.lane.b32.xlu0 %v3975, 28
      %v4352 = vpop.permute.xlu0 %4351
      %4353 = vrot.lane.b32.xlu0 %v3977, 28
      %v4354 = vpop.permute.xlu0 %4353
      %4355 = vrot.lane.b32.xlu0 %v3980, 28
      %v4356 = vpop.permute.xlu0 %4355
      %4357 = vrot.lane.b32.xlu0 %v3982, 28
      %v4358 = vpop.permute.xlu0 %4357
      %4359 = vrot.lane.b32.xlu0 %v3985, 28
      %v4360 = vpop.permute.xlu0 %4359
      %4361 = vrot.lane.b32.xlu0 %v3987, 28
      %v4362 = vpop.permute.xlu0 %4361
      %4363 = vrot.lane.b32.xlu0 %v3990, 28
      %v4364 = vpop.permute.xlu0 %4363
      %4365 = vrot.lane.b32.xlu0 %v3992, 28
      %v4366 = vpop.permute.xlu0 %4365
      %4367 = vrot.lane.b32.xlu0 %v4183, 28
      %v4368 = vpop.permute.xlu0 %4367
      %4369 = vrot.lane.b32.xlu0 %v4185, 28
      %v4370 = vpop.permute.xlu0 %4369
      %4371 = vrot.lane.b32.xlu0 %v4340, 28
      %v4372 = vpop.permute.xlu0 %4371
      %4373 = vrot.lane.b32.xlu0 %v4342, 28
      %v4374 = vpop.permute.xlu0 %4373
      %v4391 = vrot.slane %v3925, 2
      %v4392 = vrot.slane %v3926, 2
      %v4393 = vsel %vm4041, %v4391, %v4392
      %v4394 = vrot.slane %v3927, 2
      %v4395 = vsel %vm4041, %v4392, %v4394
      %4396 = vrot.lane.b32.xlu0 %v4054, 32
      %v4397 = vpop.permute.xlu0 %4396
      %4398 = vrot.lane.b32.xlu0 %v4056, 32
      %v4399 = vpop.permute.xlu0 %4398
      %4400 = vrot.lane.b32.xlu0 %v4059, 32
      %v4401 = vpop.permute.xlu0 %4400
      %4402 = vrot.lane.b32.xlu0 %v4061, 32
      %v4403 = vpop.permute.xlu0 %4402
      %4404 = vrot.lane.b32.xlu0 %v4064, 32
      %v4405 = vpop.permute.xlu0 %4404
      %4406 = vrot.lane.b32.xlu0 %v4066, 32
      %v4407 = vpop.permute.xlu0 %4406
      %4408 = vrot.lane.b32.xlu0 %v4069, 32
      %v4409 = vpop.permute.xlu0 %4408
      %4410 = vrot.lane.b32.xlu0 %v4071, 32
      %v4411 = vpop.permute.xlu0 %4410
      %4412 = vrot.lane.b32.xlu0 %v4074, 32
      %v4413 = vpop.permute.xlu0 %4412
      %4414 = vrot.lane.b32.xlu0 %v4076, 32
      %v4415 = vpop.permute.xlu0 %4414
      %4416 = vrot.lane.b32.xlu0 %v4079, 32
      %v4417 = vpop.permute.xlu0 %4416
      %4418 = vrot.lane.b32.xlu0 %v4081, 32
      %v4419 = vpop.permute.xlu0 %4418
      %4420 = vrot.lane.b32.xlu0 %v4236, 32
      %v4421 = vpop.permute.xlu0 %4420
      %4422 = vrot.lane.b32.xlu0 %v4238, 32
      %v4423 = vpop.permute.xlu0 %4422
      %4424 = vrot.lane.b32.xlu0 %v4393, 32
      %v4425 = vpop.permute.xlu0 %4424
      %4426 = vrot.lane.b32.xlu0 %v4395, 32
      %v4427 = vpop.permute.xlu0 %4426
      %v4444 = vsel %vm1543, %v3898, %v3994
      %v4445 = vsel %vm1543, %v3899, %v3996
      %v4446 = vsel %vm1543, %v3901, %v3998
      %v4447 = vsel %vm1543, %v3902, %v4000
      %v4448 = vsel %vm1543, %v3904, %v4002
      %v4449 = vsel %vm1543, %v3905, %v4004
      %v4450 = vsel %vm1543, %v3907, %v4006
      %v4451 = vsel %vm1543, %v3908, %v4008
      %v4452 = vsel %vm1543, %v3910, %v4010
      %v4453 = vsel %vm1543, %v3911, %v4012
      %v4454 = vsel %vm1543, %v3913, %v4014
      %v4455 = vsel %vm1543, %v3914, %v4016
      %v4456 = vsel %vm1543, %v3916, %v4018
      %v4457 = vsel %vm1543, %v3917, %v4020
      %v4458 = vsel %vm1543, %v3919, %v4022
      %v4459 = vsel %vm1543, %v3920, %v4024
      %v4460 = vsel %vm1574, %v4444, %v4083
      %v4461 = vsel %vm1574, %v4445, %v4085
      %v4462 = vsel %vm1574, %v4446, %v4087
      %v4463 = vsel %vm1574, %v4447, %v4089
      %v4464 = vsel %vm1574, %v4448, %v4091
      %v4465 = vsel %vm1574, %v4449, %v4093
      %v4466 = vsel %vm1574, %v4450, %v4095
      %v4467 = vsel %vm1574, %v4451, %v4097
      %v4468 = vsel %vm1574, %v4452, %v4099
      %v4469 = vsel %vm1574, %v4453, %v4101
      %v4470 = vsel %vm1574, %v4454, %v4103
      %v4471 = vsel %vm1574, %v4455, %v4105
      %v4472 = vsel %vm1574, %v4456, %v4107
      %v4473 = vsel %vm1574, %v4457, %v4109
      %v4474 = vsel %vm1574, %v4458, %v4111
      %v4475 = vsel %vm1574, %v4459, %v4113
      %v4476 = vsel %vm1605, %v4460, %v4133
      %v4477 = vsel %vm1605, %v4461, %v4135
      %v4478 = vsel %vm1605, %v4462, %v4137
      %v4479 = vsel %vm1605, %v4463, %v4139
      %v4480 = vsel %vm1605, %v4464, %v4141
      %v4481 = vsel %vm1605, %v4465, %v4143
      %v4482 = vsel %vm1605, %v4466, %v4145
      %v4483 = vsel %vm1605, %v4467, %v4147
      %v4484 = vsel %vm1605, %v4468, %v4149
      %v4485 = vsel %vm1605, %v4469, %v4151
      %v4486 = vsel %vm1605, %v4470, %v4153
      %v4487 = vsel %vm1605, %v4471, %v4155
      %v4488 = vsel %vm1605, %v4472, %v4157
      %v4489 = vsel %vm1605, %v4473, %v4159
      %v4490 = vsel %vm1605, %v4474, %v4161
      %v4491 = vsel %vm1605, %v4475, %v4163
      %v4492 = vsel %vm1636, %v4476, %v4187
      %v4493 = vsel %vm1636, %v4477, %v4189
      %v4494 = vsel %vm1636, %v4478, %v4191
      %v4495 = vsel %vm1636, %v4479, %v4193
      %v4496 = vsel %vm1636, %v4480, %v4195
      %v4497 = vsel %vm1636, %v4481, %v4197
      %v4498 = vsel %vm1636, %v4482, %v4199
      %v4499 = vsel %vm1636, %v4483, %v4201
      %v4500 = vsel %vm1636, %v4484, %v4203
      %v4501 = vsel %vm1636, %v4485, %v4205
      %v4502 = vsel %vm1636, %v4486, %v4207
      %v4503 = vsel %vm1636, %v4487, %v4209
      %v4504 = vsel %vm1636, %v4488, %v4211
      %v4505 = vsel %vm1636, %v4489, %v4213
      %v4506 = vsel %vm1636, %v4490, %v4215
      %v4507 = vsel %vm1636, %v4491, %v4217
      %v4508 = vsel %vm1667, %v4492, %v4240
      %v4509 = vsel %vm1667, %v4493, %v4242
      %v4510 = vsel %vm1667, %v4494, %v4244
      %v4511 = vsel %vm1667, %v4495, %v4246
      %v4512 = vsel %vm1667, %v4496, %v4248
      %v4513 = vsel %vm1667, %v4497, %v4250
      %v4514 = vsel %vm1667, %v4498, %v4252
      %v4515 = vsel %vm1667, %v4499, %v4254
      %v4516 = vsel %vm1667, %v4500, %v4256
      %v4517 = vsel %vm1667, %v4501, %v4258
      %v4518 = vsel %vm1667, %v4502, %v4260
      %v4519 = vsel %vm1667, %v4503, %v4262
      %v4520 = vsel %vm1667, %v4504, %v4264
      %v4521 = vsel %vm1667, %v4505, %v4266
      %v4522 = vsel %vm1667, %v4506, %v4268
      %v4523 = vsel %vm1667, %v4507, %v4270
      %v4524 = vsel %vm1698, %v4508, %v4290
      %v4525 = vsel %vm1698, %v4509, %v4292
      %v4526 = vsel %vm1698, %v4510, %v4294
      %v4527 = vsel %vm1698, %v4511, %v4296
      %v4528 = vsel %vm1698, %v4512, %v4298
      %v4529 = vsel %vm1698, %v4513, %v4300
      %v4530 = vsel %vm1698, %v4514, %v4302
      %v4531 = vsel %vm1698, %v4515, %v4304
      %v4532 = vsel %vm1698, %v4516, %v4306
      %v4533 = vsel %vm1698, %v4517, %v4308
      %v4534 = vsel %vm1698, %v4518, %v4310
      %v4535 = vsel %vm1698, %v4519, %v4312
      %v4536 = vsel %vm1698, %v4520, %v4314
      %v4537 = vsel %vm1698, %v4521, %v4316
      %v4538 = vsel %vm1698, %v4522, %v4318
      %v4539 = vsel %vm1698, %v4523, %v4320
      %v4540 = vsel %vm1729, %v4524, %v4344
      %v4541 = vsel %vm1729, %v4525, %v4346
      %v4542 = vsel %vm1729, %v4526, %v4348
      %v4543 = vsel %vm1729, %v4527, %v4350
      %v4544 = vsel %vm1729, %v4528, %v4352
      %v4545 = vsel %vm1729, %v4529, %v4354
      %v4546 = vsel %vm1729, %v4530, %v4356
      %v4547 = vsel %vm1729, %v4531, %v4358
      %v4548 = vsel %vm1729, %v4532, %v4360
      %v4549 = vsel %vm1729, %v4533, %v4362
      %v4550 = vsel %vm1729, %v4534, %v4364
      %v4551 = vsel %vm1729, %v4535, %v4366
      %v4552 = vsel %vm1729, %v4536, %v4368
      %v4553 = vsel %vm1729, %v4537, %v4370
      %v4554 = vsel %vm1729, %v4538, %v4372
      %v4555 = vsel %vm1729, %v4539, %v4374
      %v4556 = vsel %vm1760, %v4540, %v4397
      %v4557 = vsel %vm1760, %v4541, %v4399
      %v4558 = vsel %vm1760, %v4542, %v4401
      %v4559 = vsel %vm1760, %v4543, %v4403
      %v4560 = vsel %vm1760, %v4544, %v4405
      %v4561 = vsel %vm1760, %v4545, %v4407
      %v4562 = vsel %vm1760, %v4546, %v4409
      %v4563 = vsel %vm1760, %v4547, %v4411
      %v4564 = vsel %vm1760, %v4548, %v4413
      %v4565 = vsel %vm1760, %v4549, %v4415
      %v4566 = vsel %vm1760, %v4550, %v4417
      %v4567 = vsel %vm1760, %v4551, %v4419
      %v4568 = vsel %vm1760, %v4552, %v4421
      %v4569 = vsel %vm1760, %v4553, %v4423
      %v4570 = vsel %vm1760, %v4554, %v4425
      %v4571 = vsel %vm1760, %v4555, %v4427
      %v4572 = vld [vmem:[%s3] sm:$0xff]
      %v4573 = vld [vmem:[%s3 + $0x8] sm:$0xff]
      %v4574 = vld [vmem:[%s3 + $0x10] sm:$0xff]
      %v4575 = vld [vmem:[%s3 + $0x18] sm:$0xff]
      %v4576 = vld [vmem:[%s3 + $0x20] sm:$0xf]
      %v4577 = vld [vmem:[%s4] sm:$0x1]
      %v4579 = vlaneseq
      %v4580 = vshrl.u32 %v4579, 7
      %v4581 = vsub.s32 0, %v4580
      %v4582 = vrot.slane %v4577, %v4581
      %v4585 = vsel %vm2625, %v4556, 0
      %v4588 = vsel %vm2625, %v4557, 0
      %v4591 = vsel %vm2625, %v4558, 0
      %v4594 = vsel %vm2625, %v4559, 0
      %v4597 = vsel %vm2625, %v4560, 0
      %v4600 = vsel %vm2625, %v4561, 0
      %v4603 = vsel %vm2625, %v4562, 0
      %v4606 = vsel %vm2625, %v4563, 0
      %v4609 = vsel %vm2625, %v4564, 0
      %v4612 = vsel %vm2625, %v4565, 0
      %v4615 = vsel %vm2625, %v4566, 0
      %v4618 = vsel %vm2625, %v4567, 0
      %v4621 = vsel %vm2625, %v4568, 0
      %v4624 = vsel %vm2625, %v4569, 0
      %v4627 = vsel %vm2625, %v4570, 0
      %v4630 = vsel %vm2625, %v4571, 0
      %v4633 = vsel %vm2672, %v4576, 0
      %4635 = vmatprep.subr.mxu0 0.0
      %4636 = vmatpush1.msra.mxu0 0.0
      %4637 = vmatprep.subr.mxu0 0.0
      %4638 = vmatpush1.msra.mxu0 0.0
      %4639 = vmatprep.subr.mxu0 0.0
      %4640 = vmatpush1.msra.mxu0 0.0
      %4641 = vmatprep.subr.mxu0 0.0
      %4642 = vmatpush1.msra.mxu0 0.0
      %4643 = vmatprep.subr.mxu0 0.0
      %4644 = vmatpush1.msra.mxu0 0.0
      %4645 = vmatprep.subr.mxu0 0.0
      %4646 = vmatpush1.msra.mxu0 0.0
      %4647 = vmatprep.subr.mxu0 0.0
      %4648 = vmatpush1.msra.mxu0 0.0
      %4649 = vmatprep.subr.mxu0 0.0
      %4650 = vmatpush1.msra.mxu0 0.0
      %4651 = vmatprep.subr.mxu0 0.0
      %4652 = vmatpush1.msra.mxu0 0.0
      %4653 = vmatprep.subr.mxu0 0.0
      %4654 = vmatpush1.msra.mxu0 0.0
      %4655 = vmatprep.subr.mxu0 0.0
      %4656 = vmatpush1.msra.mxu0 0.0
      %4657 = vmatprep.subr.mxu0 0.0
      %4658 = vmatpush1.msra.mxu0 %v4633
      %4659 = vmatprep.subr.mxu0 0.0
      %4660 = vmatpush1.msra.mxu0 %v4575
      %4661 = vmatprep.subr.mxu0 0.0
      %4662 = vmatpush1.msra.mxu0 %v4574
      %4663 = vmatprep.subr.mxu0 0.0
      %4664 = vmatpush1.msra.mxu0 %v4573
      %4665 = vmatprep.subr.mxu0 0.0
      %4666 = vmatpush1.msra.mxu0 %v4572
      %4667 = vmatprep.subr.mxu0 0.0
      %4668 = vmatpush2.msra.mxu0 0.0
      %4669 = vmatprep.subr.mxu0 0.0
      %4670 = vmatpush2.msra.mxu0 0.0
      %4671 = vmatprep.subr.mxu0 0.0
      %4672 = vmatpush2.msra.mxu0 0.0
      %4673 = vmatprep.subr.mxu0 0.0
      %4674 = vmatpush2.msra.mxu0 0.0
      %4675 = vmatprep.subr.mxu0 0.0
      %4676 = vmatpush2.msra.mxu0 0.0
      %4677 = vmatprep.subr.mxu0 0.0
      %4678 = vmatpush2.msra.mxu0 0.0
      %4679 = vmatprep.subr.mxu0 0.0
      %4680 = vmatpush2.msra.mxu0 0.0
      %4681 = vmatprep.subr.mxu0 0.0
      %4682 = vmatpush2.msra.mxu0 0.0
      %4683 = vmatprep.subr.mxu0 0.0
      %4684 = vmatpush2.msra.mxu0 0.0
      %4685 = vmatprep.subr.mxu0 0.0
      %4686 = vmatpush2.msra.mxu0 0.0
      %4687 = vmatprep.subr.mxu0 0.0
      %4688 = vmatpush2.msra.mxu0 0.0
      %4689 = vmatprep.subr.mxu0 0.0
      %4690 = vmatpush2.msra.mxu0 0.0
      %4691 = vmatprep.subr.mxu0 0.0
      %4692 = vmatpush2.msra.mxu0 0.0
      %4693 = vmatprep.subr.mxu0 0.0
      %4694 = vmatpush2.msra.mxu0 0.0
      %4695 = vmatprep.subr.mxu0 0.0
      %4696 = vmatpush2.msra.mxu0 0.0
      %4697 = vmatprep.subr.mxu0 0.0
      %4698 = vmatpush2.msra.mxu0 0.0
      %4699 = vmatprep.mubr.f32.mxu0 0.0
      %4700 = vmatmul.mubr.f32.gmra.mxu0 %v4585
      %v4701 = vpop.f32.mrf.mxu0
      %v4702 = vadd.f32 %v4582, %v4701
      %v4703 = vpop.f32.mrf.mxu0
      %4704 = vmatprep.mubr.f32.mxu0 0.0
      %4705 = vmatmul.mubr.f32.gmra.mxu0 %v4588
      %v4706 = vpop.f32.mrf.mxu0
      %v4707 = vadd.f32 %v4582, %v4706
      %v4708 = vpop.f32.mrf.mxu0
      %4709 = vmatprep.mubr.f32.mxu0 0.0
      %4710 = vmatmul.mubr.f32.gmra.mxu0 %v4591
      %v4711 = vpop.f32.mrf.mxu0
      %v4712 = vadd.f32 %v4582, %v4711
      %v4713 = vpop.f32.mrf.mxu0
      %4714 = vmatprep.mubr.f32.mxu0 0.0
      %4715 = vmatmul.mubr.f32.gmra.mxu0 %v4594
      %v4716 = vpop.f32.mrf.mxu0
      %v4717 = vadd.f32 %v4582, %v4716
      %v4718 = vpop.f32.mrf.mxu0
      %4719 = vmatprep.mubr.f32.mxu0 0.0
      %4720 = vmatmul.mubr.f32.gmra.mxu0 %v4597
      %v4721 = vpop.f32.mrf.mxu0
      %v4722 = vadd.f32 %v4582, %v4721
      %v4723 = vpop.f32.mrf.mxu0
      %4724 = vmatprep.mubr.f32.mxu0 0.0
      %4725 = vmatmul.mubr.f32.gmra.mxu0 %v4600
      %v4726 = vpop.f32.mrf.mxu0
      %v4727 = vadd.f32 %v4582, %v4726
      %v4728 = vpop.f32.mrf.mxu0
      %4729 = vmatprep.mubr.f32.mxu0 0.0
      %4730 = vmatmul.mubr.f32.gmra.mxu0 %v4603
      %v4731 = vpop.f32.mrf.mxu0
      %v4732 = vadd.f32 %v4582, %v4731
      %v4733 = vpop.f32.mrf.mxu0
      %4734 = vmatprep.mubr.f32.mxu0 0.0
      %4735 = vmatmul.mubr.f32.gmra.mxu0 %v4606
      %v4736 = vpop.f32.mrf.mxu0
      %v4737 = vadd.f32 %v4582, %v4736
      %v4738 = vpop.f32.mrf.mxu0
      %4739 = vmatprep.mubr.f32.mxu0 0.0
      %4740 = vmatmul.mubr.f32.gmra.mxu0 %v4609
      %v4741 = vpop.f32.mrf.mxu0
      %v4742 = vadd.f32 %v4582, %v4741
      %v4743 = vpop.f32.mrf.mxu0
      %4744 = vmatprep.mubr.f32.mxu0 0.0
      %4745 = vmatmul.mubr.f32.gmra.mxu0 %v4612
      %v4746 = vpop.f32.mrf.mxu0
      %v4747 = vadd.f32 %v4582, %v4746
      %v4748 = vpop.f32.mrf.mxu0
      %4749 = vmatprep.mubr.f32.mxu0 0.0
      %4750 = vmatmul.mubr.f32.gmra.mxu0 %v4615
      %v4751 = vpop.f32.mrf.mxu0
      %v4752 = vadd.f32 %v4582, %v4751
      %v4753 = vpop.f32.mrf.mxu0
      %4754 = vmatprep.mubr.f32.mxu0 0.0
      %4755 = vmatmul.mubr.f32.gmra.mxu0 %v4618
      %v4756 = vpop.f32.mrf.mxu0
      %v4757 = vadd.f32 %v4582, %v4756
      %v4758 = vpop.f32.mrf.mxu0
      %4759 = vmatprep.mubr.f32.mxu0 0.0
      %4760 = vmatmul.mubr.f32.gmra.mxu0 %v4621
      %v4761 = vpop.f32.mrf.mxu0
      %v4762 = vadd.f32 %v4582, %v4761
      %v4763 = vpop.f32.mrf.mxu0
      %4764 = vmatprep.mubr.f32.mxu0 0.0
      %4765 = vmatmul.mubr.f32.gmra.mxu0 %v4624
      %v4766 = vpop.f32.mrf.mxu0
      %v4767 = vadd.f32 %v4582, %v4766
      %v4768 = vpop.f32.mrf.mxu0
      %4769 = vmatprep.mubr.f32.mxu0 0.0
      %4770 = vmatmul.mubr.f32.gmra.mxu0 %v4627
      %v4771 = vpop.f32.mrf.mxu0
      %v4772 = vadd.f32 %v4582, %v4771
      %v4773 = vpop.f32.mrf.mxu0
      %4774 = vmatprep.mubr.f32.mxu0 0.0
      %4775 = vmatmul.mubr.f32.gmra.mxu0 %v4630
      %v4776 = vpop.f32.mrf.mxu0
      %v4777 = vadd.f32 %v4582, %v4776
      %v4778 = vpop.f32.mrf.mxu0
      %4779 = vdwg.mxu0
      %v4780 = vmax.f32 %v4702, 0.0
      %v4781 = vmax.f32 %v4707, 0.0
      %v4782 = vmax.f32 %v4712, 0.0
      %v4783 = vmax.f32 %v4717, 0.0
      %v4784 = vmax.f32 %v4722, 0.0
      %v4785 = vmax.f32 %v4727, 0.0
      %v4786 = vmax.f32 %v4732, 0.0
      %v4787 = vmax.f32 %v4737, 0.0
      %v4788 = vmax.f32 %v4742, 0.0
      %v4789 = vmax.f32 %v4747, 0.0
      %v4790 = vmax.f32 %v4752, 0.0
      %v4791 = vmax.f32 %v4757, 0.0
      %v4792 = vmax.f32 %v4762, 0.0
      %v4793 = vmax.f32 %v4767, 0.0
      %v4794 = vmax.f32 %v4772, 0.0
      %v4795 = vmax.f32 %v4777, 0.0
      %v4796 = vld [vmem:[%s5] sm:$0xf]
      %v4797 = vld [vmem:[%s6] sm:$0x1]
      %v4799 = vlaneseq
      %v4800 = vshrl.u32 %v4799, 7
      %v4801 = vsub.s32 0, %v4800
      %v4802 = vrot.slane %v4797, %v4801
      %v4805 = vsel %vm1543, %v4780, 0
      %v4808 = vsel %vm1543, %v4781, 0
      %v4811 = vsel %vm1543, %v4782, 0
      %v4814 = vsel %vm1543, %v4783, 0
      %v4817 = vsel %vm1543, %v4784, 0
      %v4820 = vsel %vm1543, %v4785, 0
      %v4823 = vsel %vm1543, %v4786, 0
      %v4826 = vsel %vm1543, %v4787, 0
      %v4829 = vsel %vm1543, %v4788, 0
      %v4832 = vsel %vm1543, %v4789, 0
      %v4835 = vsel %vm1543, %v4790, 0
      %v4838 = vsel %vm1543, %v4791, 0
      %v4841 = vsel %vm1543, %v4792, 0
      %v4844 = vsel %vm1543, %v4793, 0
      %v4847 = vsel %vm1543, %v4794, 0
      %v4850 = vsel %vm1543, %v4795, 0
      %v4853 = vsel %vm2672, %v4796, 0
      %4855 = vmatprep.subr.mxu0 0.0
      %4856 = vmatpush1.msra.mxu0 0.0
      %4857 = vmatprep.subr.mxu0 0.0
      %4858 = vmatpush1.msra.mxu0 0.0
      %4859 = vmatprep.subr.mxu0 0.0
      %4860 = vmatpush1.msra.mxu0 0.0
      %4861 = vmatprep.subr.mxu0 0.0
      %4862 = vmatpush1.msra.mxu0 0.0
      %4863 = vmatprep.subr.mxu0 0.0
      %4864 = vmatpush1.msra.mxu0 0.0
      %4865 = vmatprep.subr.mxu0 0.0
      %4866 = vmatpush1.msra.mxu0 0.0
      %4867 = vmatprep.subr.mxu0 0.0
      %4868 = vmatpush1.msra.mxu0 0.0
      %4869 = vmatprep.subr.mxu0 0.0
      %4870 = vmatpush1.msra.mxu0 0.0
      %4871 = vmatprep.subr.mxu0 0.0
      %4872 = vmatpush1.msra.mxu0 0.0
      %4873 = vmatprep.subr.mxu0 0.0
      %4874 = vmatpush1.msra.mxu0 0.0
      %4875 = vmatprep.subr.mxu0 0.0
      %4876 = vmatpush1.msra.mxu0 0.0
      %4877 = vmatprep.subr.mxu0 0.0
      %4878 = vmatpush1.msra.mxu0 0.0
      %4879 = vmatprep.subr.mxu0 0.0
      %4880 = vmatpush1.msra.mxu0 0.0
      %4881 = vmatprep.subr.mxu0 0.0
      %4882 = vmatpush1.msra.mxu0 0.0
      %4883 = vmatprep.subr.mxu0 0.0
      %4884 = vmatpush1.msra.mxu0 0.0
      %4885 = vmatprep.subr.mxu0 0.0
      %4886 = vmatpush1.msra.mxu0 %v4853
      %4887 = vmatprep.subr.mxu0 0.0
      %4888 = vmatpush2.msra.mxu0 0.0
      %4889 = vmatprep.subr.mxu0 0.0
      %4890 = vmatpush2.msra.mxu0 0.0
      %4891 = vmatprep.subr.mxu0 0.0
      %4892 = vmatpush2.msra.mxu0 0.0
      %4893 = vmatprep.subr.mxu0 0.0
      %4894 = vmatpush2.msra.mxu0 0.0
      %4895 = vmatprep.subr.mxu0 0.0
      %4896 = vmatpush2.msra.mxu0 0.0
      %4897 = vmatprep.subr.mxu0 0.0
      %4898 = vmatpush2.msra.mxu0 0.0
      %4899 = vmatprep.subr.mxu0 0.0
      %4900 = vmatpush2.msra.mxu0 0.0
      %4901 = vmatprep.subr.mxu0 0.0
      %4902 = vmatpush2.msra.mxu0 0.0
      %4903 = vmatprep.subr.mxu0 0.0
      %4904 = vmatpush2.msra.mxu0 0.0
      %4905 = vmatprep.subr.mxu0 0.0
      %4906 = vmatpush2.msra.mxu0 0.0
      %4907 = vmatprep.subr.mxu0 0.0
      %4908 = vmatpush2.msra.mxu0 0.0
      %4909 = vmatprep.subr.mxu0 0.0
      %4910 = vmatpush2.msra.mxu0 0.0
      %4911 = vmatprep.subr.mxu0 0.0
      %4912 = vmatpush2.msra.mxu0 0.0
      %4913 = vmatprep.subr.mxu0 0.0
      %4914 = vmatpush2.msra.mxu0 0.0
      %4915 = vmatprep.subr.mxu0 0.0
      %4916 = vmatpush2.msra.mxu0 0.0
      %4917 = vmatprep.subr.mxu0 0.0
      %4918 = vmatpush2.msra.mxu0 0.0
      %4919 = vmatprep.mubr.f32.mxu0 0.0
      %4920 = vmatmul.mubr.f32.gmra.mxu0 %v4805
      %v4921 = vpop.f32.mrf.mxu0
      %v4922 = vadd.f32 %v4802, %v4921
      %v4923 = vpop.f32.mrf.mxu0
      %4924 = vmatprep.mubr.f32.mxu0 0.0
      %4925 = vmatmul.mubr.f32.gmra.mxu0 %v4808
      %v4926 = vpop.f32.mrf.mxu0
      %v4927 = vadd.f32 %v4802, %v4926
      %v4928 = vpop.f32.mrf.mxu0
      %4929 = vmatprep.mubr.f32.mxu0 0.0
      %4930 = vmatmul.mubr.f32.gmra.mxu0 %v4811
      %v4931 = vpop.f32.mrf.mxu0
      %v4932 = vadd.f32 %v4802, %v4931
      %v4933 = vpop.f32.mrf.mxu0
      %4934 = vmatprep.mubr.f32.mxu0 0.0
      %4935 = vmatmul.mubr.f32.gmra.mxu0 %v4814
      %v4936 = vpop.f32.mrf.mxu0
      %v4937 = vadd.f32 %v4802, %v4936
      %v4938 = vpop.f32.mrf.mxu0
      %4939 = vmatprep.mubr.f32.mxu0 0.0
      %4940 = vmatmul.mubr.f32.gmra.mxu0 %v4817
      %v4941 = vpop.f32.mrf.mxu0
      %v4942 = vadd.f32 %v4802, %v4941
      %v4943 = vpop.f32.mrf.mxu0
      %4944 = vmatprep.mubr.f32.mxu0 0.0
      %4945 = vmatmul.mubr.f32.gmra.mxu0 %v4820
      %v4946 = vpop.f32.mrf.mxu0
      %v4947 = vadd.f32 %v4802, %v4946
      %v4948 = vpop.f32.mrf.mxu0
      %4949 = vmatprep.mubr.f32.mxu0 0.0
      %4950 = vmatmul.mubr.f32.gmra.mxu0 %v4823
      %v4951 = vpop.f32.mrf.mxu0
      %v4952 = vadd.f32 %v4802, %v4951
      %v4953 = vpop.f32.mrf.mxu0
      %4954 = vmatprep.mubr.f32.mxu0 0.0
      %4955 = vmatmul.mubr.f32.gmra.mxu0 %v4826
      %v4956 = vpop.f32.mrf.mxu0
      %v4957 = vadd.f32 %v4802, %v4956
      %v4958 = vpop.f32.mrf.mxu0
      %4959 = vmatprep.mubr.f32.mxu0 0.0
      %4960 = vmatmul.mubr.f32.gmra.mxu0 %v4829
      %v4961 = vpop.f32.mrf.mxu0
      %v4962 = vadd.f32 %v4802, %v4961
      %v4963 = vpop.f32.mrf.mxu0
      %4964 = vmatprep.mubr.f32.mxu0 0.0
      %4965 = vmatmul.mubr.f32.gmra.mxu0 %v4832
      %v4966 = vpop.f32.mrf.mxu0
      %v4967 = vadd.f32 %v4802, %v4966
      %v4968 = vpop.f32.mrf.mxu0
      %4969 = vmatprep.mubr.f32.mxu0 0.0
      %4970 = vmatmul.mubr.f32.gmra.mxu0 %v4835
      %v4971 = vpop.f32.mrf.mxu0
      %v4972 = vadd.f32 %v4802, %v4971
      %v4973 = vpop.f32.mrf.mxu0
      %4974 = vmatprep.mubr.f32.mxu0 0.0
      %4975 = vmatmul.mubr.f32.gmra.mxu0 %v4838
      %v4976 = vpop.f32.mrf.mxu0
      %v4977 = vadd.f32 %v4802, %v4976
      %v4978 = vpop.f32.mrf.mxu0
      %4979 = vmatprep.mubr.f32.mxu0 0.0
      %4980 = vmatmul.mubr.f32.gmra.mxu0 %v4841
      %v4981 = vpop.f32.mrf.mxu0
      %v4982 = vadd.f32 %v4802, %v4981
      %v4983 = vpop.f32.mrf.mxu0
      %4984 = vmatprep.mubr.f32.mxu0 0.0
      %4985 = vmatmul.mubr.f32.gmra.mxu0 %v4844
      %v4986 = vpop.f32.mrf.mxu0
      %v4987 = vadd.f32 %v4802, %v4986
      %v4988 = vpop.f32.mrf.mxu0
      %4989 = vmatprep.mubr.f32.mxu0 0.0
      %4990 = vmatmul.mubr.f32.gmra.mxu0 %v4847
      %v4991 = vpop.f32.mrf.mxu0
      %v4992 = vadd.f32 %v4802, %v4991
      %v4993 = vpop.f32.mrf.mxu0
      %4994 = vmatprep.mubr.f32.mxu0 0.0
      %4995 = vmatmul.mubr.f32.gmra.mxu0 %v4850
      %v4996 = vpop.f32.mrf.mxu0
      %v4997 = vadd.f32 %v4802, %v4996
      %v4998 = vpop.f32.mrf.mxu0
      %4999 = vdwg.mxu0
      %v5000 = vld [vmem:[%s492 + $0x2] sm:$0xff]
      %v5001 = vld [vmem:[%s492 + $0xa] sm:$0xff]
      %v5002 = vld [vmem:[%s492 + $0x1a] sm:$0xff]
      %v5003 = vld [vmem:[%s492 + $0x22] sm:$0xff]
      %v5004 = vld [vmem:[%s492 + $0x32] sm:$0xff]
      %v5005 = vld [vmem:[%s492 + $0x3a] sm:$0xff]
      %v5006 = vld [vmem:[%s492 + $0x4a] sm:$0xff]
      %v5007 = vld [vmem:[%s492 + $0x52] sm:$0xff]
      %v5008 = vld [vmem:[%s492 + $0x62] sm:$0xff]
      %v5009 = vld [vmem:[%s492 + $0x6a] sm:$0xff]
      %v5010 = vld [vmem:[%s492 + $0x7a] sm:$0xff]
      %v5011 = vld [vmem:[%s492 + $0x82] sm:$0xff]
      %v5012 = vld [vmem:[%s492 + $0x92] sm:$0xff]
      %v5013 = vld [vmem:[%s492 + $0x9a] sm:$0xff]
      %v5014 = vld [vmem:[%s492 + $0xaa] sm:$0xff]
      %v5015 = vld [vmem:[%s492 + $0xb2] sm:$0xff]
      %v5016 = vadd.f32 %v4922, %v5000
      %v5017 = vadd.f32 %v4927, %v5001
      %v5018 = vadd.f32 %v4932, %v5002
      %v5019 = vadd.f32 %v4937, %v5003
      %v5020 = vadd.f32 %v4942, %v5004
      %v5021 = vadd.f32 %v4947, %v5005
      %v5022 = vadd.f32 %v4952, %v5006
      %v5023 = vadd.f32 %v4957, %v5007
      %v5024 = vadd.f32 %v4962, %v5008
      %v5025 = vadd.f32 %v4967, %v5009
      %v5026 = vadd.f32 %v4972, %v5010
      %v5027 = vadd.f32 %v4977, %v5011
      %v5028 = vadd.f32 %v4982, %v5012
      %v5029 = vadd.f32 %v4987, %v5013
      %v5030 = vadd.f32 %v4992, %v5014
      %v5031 = vadd.f32 %v4997, %v5015
      %v5032 = vmax.f32 %v5016, 0.0
      %v5033 = vmax.f32 %v5017, 0.0
      %v5034 = vmax.f32 %v5018, 0.0
      %v5035 = vmax.f32 %v5019, 0.0
      %v5036 = vmax.f32 %v5020, 0.0
      %v5037 = vmax.f32 %v5021, 0.0
      %v5038 = vmax.f32 %v5022, 0.0
      %v5039 = vmax.f32 %v5023, 0.0
      %v5040 = vmax.f32 %v5024, 0.0
      %v5041 = vmax.f32 %v5025, 0.0
      %v5042 = vmax.f32 %v5026, 0.0
      %v5043 = vmax.f32 %v5027, 0.0
      %v5044 = vmax.f32 %v5028, 0.0
      %v5045 = vmax.f32 %v5029, 0.0
      %v5046 = vmax.f32 %v5030, 0.0
      %v5047 = vmax.f32 %v5031, 0.0
      %5048 = vst.msk [vmem:[%s302] sm:$0xff] %vm1543, %v5032
      %5049 = vst.msk [vmem:[%s302 + $0x8] sm:$0xff] %vm1543, %v5033
      %5050 = vst.msk [vmem:[%s302 + $0x10] sm:$0xff] %vm1543, %v5034
      %5051 = vst.msk [vmem:[%s302 + $0x18] sm:$0xff] %vm1543, %v5035
      %5052 = vst.msk [vmem:[%s302 + $0x20] sm:$0xff] %vm1543, %v5036
      %5053 = vst.msk [vmem:[%s302 + $0x28] sm:$0xff] %vm1543, %v5037
      %5054 = vst.msk [vmem:[%s302 + $0x30] sm:$0xff] %vm1543, %v5038
      %5055 = vst.msk [vmem:[%s302 + $0x38] sm:$0xff] %vm1543, %v5039
      %5056 = vst.msk [vmem:[%s302 + $0x40] sm:$0xff] %vm1543, %v5040
      %5057 = vst.msk [vmem:[%s302 + $0x48] sm:$0xff] %vm1543, %v5041
      %5058 = vst.msk [vmem:[%s302 + $0x50] sm:$0xff] %vm1543, %v5042
      %5059 = vst.msk [vmem:[%s302 + $0x58] sm:$0xff] %vm1543, %v5043
      %5060 = vst.msk [vmem:[%s302 + $0x60] sm:$0xff] %vm1543, %v5044
      %5061 = vst.msk [vmem:[%s302 + $0x68] sm:$0xff] %vm1543, %v5045
      %5062 = vst.msk [vmem:[%s302 + $0x70] sm:$0xff] %vm1543, %v5046
      %5063 = vst.msk [vmem:[%s302 + $0x78] sm:$0xff] %vm1543, %v5047
      %s5064 = smul.u32 8, %s23
      %p5065 = scmp.lt.s32.totalorder %s22, 1
      %s5066 = scalar_select %p5065, %s22, 1
      %p5067 = scmp.lt.s32.totalorder %s5064, 15
      %s5068 = scalar_select %p5067, %s5064, 15
      %s5069 = smul.addr %s5068, 2
      %s5070 = smul.addr %s5066, 32
      %s5071 = sadd.s32 %s5069, %s5070
      %s5072 = smul.addr %s5071, 8
      %s5073 = scalar_lea.vmem %s7, %s5072
      // Predicated region
      $region49: #{tpu_custom_call.1} parent=47 // pred_check
        %p5074 = pneg %p202
      $region50: #{tpu_custom_call.1} parent=47 // pred_check_branch
        %5076 = sbr.rel (%p5074) target = $region52
      $region51: #{tpu_custom_call.1} parent=47 // pred_region
        %s5077 = smul.u32 8, %s23
      $region52: #{tpu_custom_call.1} parent=47 // pred_fallthru
        _
    $region48: #{tpu_custom_call.1} parent=5 // pred_fallthru
      _
    %p5078 = scmp.le.s32.totalorder 2, %s13
    // Predicated region
    $region53: #{tpu_custom_call.1} parent=5 // pred_check
      %p5079 = pneg %p5078
    $region54: #{tpu_custom_call.1} parent=5 // pred_check_branch
      %5081 = sbr.rel (%p5079) target = $region56
    $region55: #{tpu_custom_call.1} parent=5 // pred_region
      %s5082 = ssub.s32 %s13, 2
      // Predicated region
      $region57: #{tpu_custom_call.1} parent=55 // pred_check
        %p5083 = pneg %p208
      $region58: #{tpu_custom_call.1} parent=55 // pred_check_branch
        %5085 = sbr.rel (%p5083) target = $region60
      $region59: #{tpu_custom_call.1} parent=55 // pred_region
        %s5086 = smul.u32 8, %s25
        %p5087 = scmp.lt.s32.totalorder %s24, 1
        %s5088 = scalar_select %p5087, %s24, 1
        %p5089 = scmp.lt.s32.totalorder %s5086, 15
        %s5090 = scalar_select %p5089, %s5086, 15
        %s5091 = smul.addr %s5090, 2
        %s5092 = smul.addr %s5088, 32
        %s5093 = sadd.s32 %s5091, %s5092
        %s5094 = smul.addr %s5093, 8
        %s5095 = scalar_lea.vmem %s7, %s5094
      $region60: #{tpu_custom_call.1} parent=55 // pred_fallthru
        _
    $region56: #{tpu_custom_call.1} parent=5 // pred_fallthru
      _
  $region6: #{tpu_custom_call.1} parent=0 // loop_footer
    %s17 = sadd.s32 1, %s13
  $region7: #{tpu_custom_call.1} parent=0 // loop_footer_branch
    %12 = sbr.rel target = $region3
  $region8: #{tpu_custom_call.1} parent=0 // loop_exit
    _

</llo_original>
